<compile_context>
chip_gen: v5e
topology: v5e:2x2
jax: 0.10.0
libtpu: 0.0.40
codegen_flags: <defaults>
</compile_context>

<pallas_src>
import functools
import math

import jax
import jax.numpy as jnp
from jax.experimental import pallas as pl
from jax.experimental.pallas import tpu as pltpu


# ----------------------------------------------------------------------------
# Model constants (small instance of the search space; mirrors build_model rows)
# ----------------------------------------------------------------------------
NC = 4                      # classes
NA = 2                      # anchors per detection layer
NO = NC + 5
STRIDES = (4, 8)            # downsampling of the two Detect inputs
BN_EPS = 1e-5               # PyTorch BatchNorm2d default

VMEM_LIMIT = 48 * 1024 * 1024   # explicit scoped-VMEM budget (v7x physical = 64 MiB)
TILE_M_CAP = 4096               # sweepable; f32 accumulator is only Cout*TM*4 bytes

# Tap offsets (di, dj): input-sample offset relative to the output position.
OFFS_3x3 = tuple((i - 1, j - 1) for i in range(3) for j in range(3))   # 3x3 'same'
OFFS_2x2 = ((-1, -1), (-1, 0), (0, -1), (0, 0))   # s2d form of a 3x3/stride-2 conv
OFFS_1x1 = ((0, 0),)


def _cdiv(a, b):
    return -(-a // b)


def _round_up(a, b):
    return _cdiv(a, b) * b


def _select_tile_m(m):
    """Lane tile: full extent when tiny, otherwise a 128-multiple aiming for >= 2
    tiles so the 'parallel' grid axis feeds both v7x TensorCores."""
    if m <= 128:
        return m
    return min(TILE_M_CAP, max(128, _round_up(_cdiv(m, 2), 128)))


# ----------------------------------------------------------------------------
# Pallas kernel: multi-branch shifted-tap conv + folded-BN bias + LeakyReLU
# ----------------------------------------------------------------------------
def _make_conv_kernel(branch_meta, needs_pos, act, tm, grid_m, h, w, cout):
    """refs = [x0, w0, x1, w1, ..., (pos), bias, out]."""

    def kernel(*refs):
        o_ref = refs[-1]
        bias_ref = refs[-2]
        if grid_m == 1:
            m0 = 0                                    # fully static windows
        else:
            m0 = pl.program_id(0) * tm
            if tm % 128 == 0:
                m0 = pl.multiple_of(m0, 128)
        if needs_pos:
            pos = refs[-3][...]                       # (1, tm) int32 = (ho << 16) | wo
            wo = jnp.bitwise_and(pos, 0xFFFF)
            ho = jnp.right_shift(pos, 16)

        acc = jnp.zeros((cout, tm), jnp.float32)
        for bi, meta in enumerate(branch_meta):
            x_ref = refs[2 * bi]
            w_ref = refs[2 * bi + 1]
            for t, ((di, dj), d) in enumerate(zip(meta["offs"], meta["ds"])):
                # contiguous lane window of the un-expanded flat activation
                win = x_ref[:, pl.ds(meta["pad_left"] + d + m0, tm)]   # (Cin, tm) bf16
                conds = []
                if di < 0:
                    conds.append(ho >= -di)
                if di > 0:
                    conds.append(ho < h - di)
                if dj < 0:
                    conds.append(wo >= -dj)
                if dj > 0:
                    conds.append(wo < w - dj)
                if conds:
                    valid = functools.reduce(jnp.logical_and, conds)
                    win = win * valid.astype(win.dtype)    # zero out-of-image samples
                acc = acc + jnp.dot(w_ref[t], win, preferred_element_type=jnp.float32)

        y = acc + bias_ref[...]                        # (Cout, 1) f32 broadcast
        if act == "leaky":
            y = jnp.where(y > 0, y, 0.1 * y)           # LeakyReLU(0.1) of CBL
        o_ref[...] = y.astype(o_ref.dtype)

    return kernel


def fused_conv(branches, bias, *, b, h, w, act="leaky", out_dtype=jnp.bfloat16):
    """y = act(sum_branch sum_tap W_tap @ shifted(x) + bias), lane-dense (Cout, M).

    branches: list of (x_flat (Cin, N) bf16, w_taps (T, Cout, Cin) bf16, offs).
    All branches share the output geometry (b, h, w); N = b*h*w = M.
    """
    n = b * h * w
    cout = bias.shape[0]
    tm = _select_tile_m(n)
    grid_m = _cdiv(n, tm)
    m_pad = grid_m * tm

    needs_pos = any(di != 0 or dj != 0
                    for (_, _, offs) in branches for (di, dj) in offs)

    operands, in_specs, branch_meta = [], [], []
    for x_flat, w_taps, offs in branches:
        cin = x_flat.shape[0]
        ds = [di * w + dj for (di, dj) in offs]
        pad_left = max(0, -min(ds))
        lane_len = _round_up(pad_left + max(max(ds), 0) + m_pad, 128)
        x_pad = jnp.pad(x_flat, ((0, 0), (pad_left, lane_len - pad_left - n)))
        operands += [x_pad, w_taps]
        in_specs += [pl.BlockSpec((cin, lane_len), lambda g: (0, 0)),
                     pl.BlockSpec(w_taps.shape, lambda g: (0, 0, 0))]
        branch_meta.append(dict(offs=tuple(offs), ds=ds, pad_left=pad_left))

    if needs_pos:
        m_idx = jnp.arange(m_pad, dtype=jnp.int32)
        pos = (((m_idx % (h * w)) // w) << 16) | (m_idx % w)     # pack (ho, wo)
        operands.append(pos.reshape(1, m_pad))
        in_specs.append(pl.BlockSpec((1, tm), lambda g: (0, g)))
    operands.append(bias)
    in_specs.append(pl.BlockSpec((cout, 1), lambda g: (0, 0)))

    kernel = _make_conv_kernel(branch_meta, needs_pos, act, tm, grid_m, h, w, cout)
    return pl.pallas_call(
        kernel,
        out_shape=jax.ShapeDtypeStruct((cout, n), out_dtype),
        grid=(grid_m,),
        in_specs=in_specs,
        out_specs=pl.BlockSpec((cout, tm), lambda g: (0, g)),
        compiler_params=pltpu.CompilerParams(
            dimension_semantics=("parallel",),
            vmem_limit_bytes=VMEM_LIMIT),
    )(*operands)


# ----------------------------------------------------------------------------
# XLA glue (cheap 1x rearrangements only; no patch matrices)
# ----------------------------------------------------------------------------
def space_to_depth2(x4):
    """(C, B, H, W) -> (4C, B, H//2, W//2); channel order (rh, rw, c) matches the
    stride-2 weight packing."""
    c, b, h, w = x4.shape
    x6 = x4.reshape(c, b, h // 2, 2, w // 2, 2)
    x6 = jnp.transpose(x6, (3, 5, 0, 1, 2, 4))
    return x6.reshape(4 * c, b, h // 2, w // 2)


def upsample2x(x4):
    # TODO(synk): realize inside the consumer kernel via index-mapped reads.
    return jnp.repeat(jnp.repeat(x4, 2, axis=2), 2, axis=3)


def conv_s2(x4, p):
    """CBL 3x3/stride-2/pad-1 == 2x2 stride-1 conv over the space-to-depth input."""
    c, b, h, w = x4.shape
    z = space_to_depth2(x4)
    ho, wo = h // 2, w // 2
    y = fused_conv([(z.reshape(4 * c, b * ho * wo), p["w"], OFFS_2x2)], p["bias"],
                   b=b, h=ho, w=wo, act="leaky")
    return y.reshape(-1, b, ho, wo)


def conv_s1(x4, p, offs):
    """CBL stride-1 conv (1x1 or 3x3 'same')."""
    c, b, h, w = x4.shape
    y = fused_conv([(x4.reshape(c, b * h * w), p["w"], offs)], p["bias"],
                   b=b, h=h, w=w, act="leaky")
    return y.reshape(-1, b, h, w)


# ----------------------------------------------------------------------------
# Detect head: both scales in ONE pallas_call
# ----------------------------------------------------------------------------
def _detect_kernel(x0_ref, w0_ref, b0_ref, x1_ref, w1_ref, b1_ref, o0_ref, o1_ref):
    o0_ref[...] = (jnp.dot(w0_ref[...], x0_ref[...],
                           preferred_element_type=jnp.float32)
                   + b0_ref[...]).astype(o0_ref.dtype)
    o1_ref[...] = (jnp.dot(w1_ref[...], x1_ref[...],
                           preferred_element_type=jnp.float32)
                   + b1_ref[...]).astype(o1_ref.dtype)


def detect_forward(x6, x7, p0, p1):
    """Training-mode Detect: per scale -> (B, na, ny, nx, no)."""
    c6, b, ny0, nx0 = x6.shape
    c7, _, ny1, nx1 = x7.shape
    f0 = x6.reshape(c6, b * ny0 * nx0)
    f1 = x7.reshape(c7, b * ny1 * nx1)

    def full(shape):
        return pl.BlockSpec(shape, lambda i: tuple(0 for _ in shape))

    y0, y1 = pl.pallas_call(
        _detect_kernel,
        out_shape=(jax.ShapeDtypeStruct((NA * NO, f0.shape[1]), jnp.float32),
                   jax.ShapeDtypeStruct((NA * NO, f1.shape[1]), jnp.float32)),
        grid=(1,),
        in_specs=[full(f0.shape), full(p0["w"].shape), full(p0["bias"].shape),
                  full(f1.shape), full(p1["w"].shape), full(p1["bias"].shape)],
        out_specs=(full((NA * NO, f0.shape[1])), full((NA * NO, f1.shape[1]))),
        compiler_params=pltpu.CompilerParams(
            dimension_semantics=("arbitrary",),
            vmem_limit_bytes=VMEM_LIMIT),
    )(f0, p0["w"], p0["bias"], f1, p1["w"], p1["bias"])

    outs = []
    for y, (ny, nx) in ((y0, (ny0, nx0)), (y1, (ny1, nx1))):
        y = y.reshape(NA, NO, b, ny, nx)
        outs.append(jnp.transpose(y, (2, 0, 3, 4, 1)))   # tiny final-output reorder
    return outs


# ----------------------------------------------------------------------------
# Parameter init: he_fout conv weights, BN folded, tap-packed bf16, (Cout,1) f32 bias
# ----------------------------------------------------------------------------
def _he_fout(key, cout, cin, k):
    std = math.sqrt(2.0 / (k * k * cout))
    return jax.random.normal(key, (cout, cin, k, k), jnp.float32) * std


def _pack_taps_full(w_full):
    """(Cout, Cin, k, k) -> (k*k, Cout, Cin); tap order matches OFFS_3x3 / OFFS_1x1."""
    cout, cin, k, _ = w_full.shape
    return jnp.transpose(w_full, (2, 3, 0, 1)).reshape(k * k, cout, cin)


def _pack_taps_s2d(w_full):
    """(Cout, Cin, 3, 3) -> (4, Cout, 4*Cin): the stride-2 3x3 conv as a 2x2 stride-1
    conv over the space-to-depth (rh, rw, c) channel order.  Tap order == OFFS_2x2."""
    cout, cin = w_full.shape[0], w_full.shape[1]
    kmap = {0: (1, 0), 1: (0, 1), 2: (1, 1)}   # k -> (phase r, tap index a = off+1)
    w2 = jnp.zeros((2, 2, cout, 4, cin), jnp.float32)
    for kh in range(3):
        rh, a = kmap[kh]
        for kw in range(3):
            rw, aw = kmap[kw]
            w2 = w2.at[a, aw, :, rh * 2 + rw, :].set(w_full[:, :, kh, kw])
    return w2.reshape(4, cout, 4 * cin)


def init_params(key):
    """BN (gamma=1, beta=0, mean=0, var=1, eps=1e-5) folded at init.
    NOTE: for real checkpoints fold running stats/gamma/beta and map the PyTorch
    (Cout, Cin, kh, kw) weight order to tap t = kh*k + kw."""
    bn_scale = 1.0 / math.sqrt(1.0 + BN_EPS)
    keys = jax.random.split(key, 8)
    params = {}

    def cbl_s2(k, cin, cout):
        w = _he_fout(k, cout, cin, 3) * bn_scale
        return dict(w=_pack_taps_s2d(w).astype(jnp.bfloat16),
                    bias=jnp.zeros((cout, 1), jnp.float32))

    def cbl_s1(k, cin, cout, ksize):
        w = _he_fout(k, cout, cin, ksize) * bn_scale
        return dict(w=_pack_taps_full(w).astype(jnp.bfloat16),
                    bias=jnp.zeros((cout, 1), jnp.float32))

    params["l0"] = cbl_s2(keys[0], 3, 8)        # backbone /2
    params["l1"] = cbl_s2(keys[1], 8, 16)       # backbone /4  (bridge)
    params["l2"] = cbl_s2(keys[2], 16, 32)      # backbone /8  (bridge)
    params["l3"] = cbl_s1(keys[3], 32, 16, 1)   # neck 1x1 reduce
    # layer 6: 3x3 over concat([upsample(l3), l1]); K split at init so the kernel
    # accumulates both branches directly (no jnp.concatenate on the forward path).
    w6 = _he_fout(keys[4], 16, 32, 3) * bn_scale
    params["l6a"] = _pack_taps_full(w6[:, :16]).astype(jnp.bfloat16)
    params["l6b"] = _pack_taps_full(w6[:, 16:]).astype(jnp.bfloat16)
    params["l6_bias"] = jnp.zeros((16, 1), jnp.float32)
    params["l7"] = cbl_s1(keys[5], 16, 32, 3)   # neck out P4 (/8)

    def detect_head(k, cin, stride):
        cout = NA * NO
        w = jax.random.normal(k, (cout, cin), jnp.float32) * math.sqrt(2.0 / cout)
        bias = jnp.zeros((NA, NO), jnp.float32)
        bias = bias.at[:, 4].add(math.log(8.0 / (640.0 / stride) ** 2))
        bias = bias.at[:, 5:].add(math.log(0.6 / (NC - 0.99)))   # _initialize_biases
        return dict(w=w.astype(jnp.bfloat16), bias=bias.reshape(cout, 1))

    params["det0"] = detect_head(keys[6], 16, STRIDES[0])
    params["det1"] = detect_head(keys[7], 32, STRIDES[1])
    return params


# ----------------------------------------------------------------------------
# Forward pass (mirrors SearchSpaceWrap._forward_once over the layer list)
# ----------------------------------------------------------------------------
def forward_once(params, x_nchw):
    x = jnp.transpose(x_nchw, (1, 0, 2, 3)).astype(jnp.bfloat16)   # (C, B, H, W) bf16
    x0 = conv_s2(x, params["l0"])                                  # ( 8, B, H/2, W/2)
    x1 = conv_s2(x0, params["l1"])                                 # (16, B, H/4, W/4)
    x2 = conv_s2(x1, params["l2"])                                 # (32, B, H/8, W/8)
    x3 = conv_s1(x2, params["l3"], OFFS_1x1)                       # (16, B, H/8, W/8)
    # layers 4/5/6: upsample + concat + 3x3 CBL; concat never materializes.
    up = upsample2x(x3)                                            # (16, B, H/4, W/4)
    _, b, h4, w4 = up.shape
    x6 = fused_conv(
        [(up.reshape(16, b * h4 * w4), params["l6a"], OFFS_3x3),
         (x1.reshape(16, b * h4 * w4), params["l6b"], OFFS_3x3)],
        params["l6_bias"], b=b, h=h4, w=w4, act="leaky").reshape(16, b, h4, w4)
    x7 = conv_s1(x3, params["l7"], OFFS_3x3)                       # (32, B, H/8, W/8)
    return detect_forward(x6, x7, params["det0"], params["det1"])


if __name__ == "__main__":
    key = jax.random.PRNGKey(0)
    params = init_params(key)

    x = jax.random.normal(jax.random.PRNGKey(0), (2, 3, 16, 16), jnp.float32)  # NCHW
    outs = jax.jit(functools.partial(forward_once, params))(x)
    outs = [jax.block_until_ready(o) for o in outs]

    assert outs[0].shape == (2, NA, 4, 4, NO), outs[0].shape   # stride-4 scale
    assert outs[1].shape == (2, NA, 2, 2, NO), outs[1].shape   # stride-8 scale
    assert all(bool(jnp.all(jnp.isfinite(o))) for o in outs)
    print("KERNEL_OK")
</pallas_src>

<mosaic_0001>
module attributes {stable_mosaic.version = 11 : i64} {
  func.func @kernel(%arg0: i32, %arg1: memref<12x256xbf16, #tpu.memory_space<vmem>>, %arg2: memref<4x8x12xbf16, #tpu.memory_space<vmem>>, %arg3: memref<1x128xi32, #tpu.memory_space<vmem>>, %arg4: memref<8x1xf32, #tpu.memory_space<vmem>>, %arg5: memref<8x128xbf16, #tpu.memory_space<vmem>>) attributes {dimension_semantics = [#tpu.dimension_semantics<parallel>], iteration_bounds = array<i64: 1>, scalar_prefetch = 0 : i64, scratch_operands = 0 : i64, tpu.core_type = #tpu.core_type<tc>, window_params = [{pipeline_mode = #tpu.pipeline_mode<synchronous>, transform_indices = @transform_0, window_bounds = array<i64: 12, 256>}, {pipeline_mode = #tpu.pipeline_mode<synchronous>, transform_indices = @transform_1, window_bounds = array<i64: 4, 8, 12>}, {transform_indices = @transform_2, window_bounds = array<i64: 1, 128>}, {pipeline_mode = #tpu.pipeline_mode<synchronous>, transform_indices = @transform_3, window_bounds = array<i64: 8, 1>}, {transform_indices = @transform_4, window_bounds = array<i64: 8, 128>}]} {
    %c0 = arith.constant 0 : index
    %c0_0 = arith.constant 0 : index
    %0 = vector.load %arg3[%c0, %c0_0] : memref<1x128xi32, #tpu.memory_space<vmem>>, vector<1x128xi32>
    %c65535_i32 = arith.constant 65535 : i32
    %1 = vector.broadcast %c65535_i32 : i32 to vector<1x128xi32>
    %2 = arith.andi %0, %1 : vector<1x128xi32>
    %c16_i32 = arith.constant 16 : i32
    %3 = vector.broadcast %c16_i32 : i32 to vector<1x128xi32>
    %4 = arith.shrsi %0, %3 : vector<1x128xi32>
    %cst = arith.constant 0.000000e+00 : f32
    %5 = vector.broadcast %cst : f32 to vector<8x128xf32>
    %c0_1 = arith.constant 0 : index
    %c0_2 = arith.constant 0 : index
    %6 = vector.load %arg1[%c0_1, %c0_2] : memref<12x256xbf16, #tpu.memory_space<vmem>>, vector<12x128xbf16>
    %c1_i32 = arith.constant 1 : i32
    %7 = vector.broadcast %c1_i32 : i32 to vector<1x128xi32>
    %8 = arith.cmpi sge, %4, %7 : vector<1x128xi32>
    %c1_i32_3 = arith.constant 1 : i32
    %9 = vector.broadcast %c1_i32_3 : i32 to vector<1x128xi32>
    %10 = arith.cmpi sge, %2, %9 : vector<1x128xi32>
    %11 = arith.andi %8, %10 : vector<1x128xi1>
    %12 = arith.extui %11 : vector<1x128xi1> to vector<1x128xi32>
    %13 = arith.sitofp %12 : vector<1x128xi32> to vector<1x128xf32>
    %14 = arith.truncf %13 : vector<1x128xf32> to vector<1x128xbf16>
    %15 = vector.broadcast %14 : vector<1x128xbf16> to vector<12x128xbf16>
    %16 = arith.mulf %6, %15 : vector<12x128xbf16>
    %c0_4 = arith.constant 0 : index
    %c0_5 = arith.constant 0 : index
    %c0_6 = arith.constant 0 : index
    %17 = vector.load %arg2[%c0_4, %c0_5, %c0_6] : memref<4x8x12xbf16, #tpu.memory_space<vmem>>, vector<1x8x12xbf16>
    %18 = vector.shape_cast %17 : vector<1x8x12xbf16> to vector<8x12xbf16>
    %cst_7 = arith.constant dense<0.000000e+00> : vector<8x128xf32>
    %19 = tpu.matmul %18, %16, %cst_7 {dimension_numbers = #tpu.dot_dimension_numbers<[1], [0], [0], [1], [0, 0, 1, 1], [], []>} : vector<8x12xbf16>, vector<12x128xbf16>, vector<8x128xf32> -> vector<8x128xf32>
    %20 = arith.addf %5, %19 : vector<8x128xf32>
    %c0_8 = arith.constant 0 : index
    %c1 = arith.constant 1 : index
    %21 = vector.load %arg1[%c0_8, %c1] : memref<12x256xbf16, #tpu.memory_space<vmem>>, vector<12x128xbf16>
    %c1_i32_9 = arith.constant 1 : i32
    %22 = vector.broadcast %c1_i32_9 : i32 to vector<1x128xi32>
    %23 = arith.cmpi sge, %4, %22 : vector<1x128xi32>
    %24 = arith.extui %23 : vector<1x128xi1> to vector<1x128xi32>
    %25 = arith.sitofp %24 : vector<1x128xi32> to vector<1x128xf32>
    %26 = arith.truncf %25 : vector<1x128xf32> to vector<1x128xbf16>
    %27 = vector.broadcast %26 : vector<1x128xbf16> to vector<12x128xbf16>
    %28 = arith.mulf %21, %27 : vector<12x128xbf16>
    %c1_10 = arith.constant 1 : index
    %c0_11 = arith.constant 0 : index
    %c0_12 = arith.constant 0 : index
    %29 = vector.load %arg2[%c1_10, %c0_11, %c0_12] : memref<4x8x12xbf16, #tpu.memory_space<vmem>>, vector<1x8x12xbf16>
    %30 = vector.shape_cast %29 : vector<1x8x12xbf16> to vector<8x12xbf16>
    %cst_13 = arith.constant dense<0.000000e+00> : vector<8x128xf32>
    %31 = tpu.matmul %30, %28, %cst_13 {dimension_numbers = #tpu.dot_dimension_numbers<[1], [0], [0], [1], [0, 0, 1, 1], [], []>} : vector<8x12xbf16>, vector<12x128xbf16>, vector<8x128xf32> -> vector<8x128xf32>
    %32 = arith.addf %20, %31 : vector<8x128xf32>
    %c0_14 = arith.constant 0 : index
    %c8 = arith.constant 8 : index
    %33 = vector.load %arg1[%c0_14, %c8] : memref<12x256xbf16, #tpu.memory_space<vmem>>, vector<12x128xbf16>
    %c1_i32_15 = arith.constant 1 : i32
    %34 = vector.broadcast %c1_i32_15 : i32 to vector<1x128xi32>
    %35 = arith.cmpi sge, %2, %34 : vector<1x128xi32>
    %36 = arith.extui %35 : vector<1x128xi1> to vector<1x128xi32>
    %37 = arith.sitofp %36 : vector<1x128xi32> to vector<1x128xf32>
    %38 = arith.truncf %37 : vector<1x128xf32> to vector<1x128xbf16>
    %39 = vector.broadcast %38 : vector<1x128xbf16> to vector<12x128xbf16>
    %40 = arith.mulf %33, %39 : vector<12x128xbf16>
    %c2 = arith.constant 2 : index
    %c0_16 = arith.constant 0 : index
    %c0_17 = arith.constant 0 : index
    %41 = vector.load %arg2[%c2, %c0_16, %c0_17] : memref<4x8x12xbf16, #tpu.memory_space<vmem>>, vector<1x8x12xbf16>
    %42 = vector.shape_cast %41 : vector<1x8x12xbf16> to vector<8x12xbf16>
    %cst_18 = arith.constant dense<0.000000e+00> : vector<8x128xf32>
    %43 = tpu.matmul %42, %40, %cst_18 {dimension_numbers = #tpu.dot_dimension_numbers<[1], [0], [0], [1], [0, 0, 1, 1], [], []>} : vector<8x12xbf16>, vector<12x128xbf16>, vector<8x128xf32> -> vector<8x128xf32>
    %44 = arith.addf %32, %43 : vector<8x128xf32>
    %c0_19 = arith.constant 0 : index
    %c9 = arith.constant 9 : index
    %45 = vector.load %arg1[%c0_19, %c9] : memref<12x256xbf16, #tpu.memory_space<vmem>>, vector<12x128xbf16>
    %c3 = arith.constant 3 : index
    %c0_20 = arith.constant 0 : index
    %c0_21 = arith.constant 0 : index
    %46 = vector.load %arg2[%c3, %c0_20, %c0_21] : memref<4x8x12xbf16, #tpu.memory_space<vmem>>, vector<1x8x12xbf16>
    %47 = vector.shape_cast %46 : vector<1x8x12xbf16> to vector<8x12xbf16>
    %cst_22 = arith.constant dense<0.000000e+00> : vector<8x128xf32>
    %48 = tpu.matmul %47, %45, %cst_22 {dimension_numbers = #tpu.dot_dimension_numbers<[1], [0], [0], [1], [0, 0, 1, 1], [], []>} : vector<8x12xbf16>, vector<12x128xbf16>, vector<8x128xf32> -> vector<8x128xf32>
    %49 = arith.addf %44, %48 : vector<8x128xf32>
    %c0_23 = arith.constant 0 : index
    %c0_24 = arith.constant 0 : index
    %50 = vector.load %arg4[%c0_23, %c0_24] : memref<8x1xf32, #tpu.memory_space<vmem>>, vector<8x1xf32>
    %51 = vector.broadcast %50 : vector<8x1xf32> to vector<8x128xf32>
    %52 = arith.addf %49, %51 : vector<8x128xf32>
    %cst_25 = arith.constant 0.000000e+00 : f32
    %53 = vector.broadcast %cst_25 : f32 to vector<8x128xf32>
    %54 = arith.cmpf ogt, %52, %53 : vector<8x128xf32>
    %cst_26 = arith.constant 1.000000e-01 : f32
    %55 = vector.broadcast %cst_26 : f32 to vector<8x128xf32>
    %56 = arith.mulf %55, %52 : vector<8x128xf32>
    %57 = arith.select %54, %52, %56 : vector<8x128xi1>, vector<8x128xf32>
    %58 = arith.truncf %57 : vector<8x128xf32> to vector<8x128xbf16>
    %c0_27 = arith.constant 0 : index
    %c0_28 = arith.constant 0 : index
    %59 = vector.load %arg5[%c0_27, %c0_28] : memref<8x128xbf16, #tpu.memory_space<vmem>>, vector<8x128xbf16>
    tpu.vector_store %arg5[%c0_27, %c0_28], %58 {strides = array<i32>} : memref<8x128xbf16, #tpu.memory_space<vmem>>, vector<8x128xbf16>,
    return
  }
  func.func @transform_0(%arg0: i32) -> (i32, i32) {
    %c0_i32 = arith.constant 0 : i32
    %c0_i32_0 = arith.constant 0 : i32
    %c0_i32_1 = arith.constant 0 : i32
    return %c0_i32, %c0_i32_0 : i32, i32
  }
  func.func @transform_1(%arg0: i32) -> (i32, i32, i32) {
    %c0_i32 = arith.constant 0 : i32
    %c0_i32_0 = arith.constant 0 : i32
    %c0_i32_1 = arith.constant 0 : i32
    %c0_i32_2 = arith.constant 0 : i32
    return %c0_i32, %c0_i32_0, %c0_i32_1 : i32, i32, i32
  }
  func.func @transform_2(%arg0: i32) -> (i32, i32) {
    %c0_i32 = arith.constant 0 : i32
    %c0_i32_0 = arith.constant 0 : i32
    return %c0_i32, %arg0 : i32, i32
  }
  func.func @transform_3(%arg0: i32) -> (i32, i32) {
    %c0_i32 = arith.constant 0 : i32
    %c0_i32_0 = arith.constant 0 : i32
    %c0_i32_1 = arith.constant 0 : i32
    return %c0_i32, %c0_i32_0 : i32, i32
  }
  func.func @transform_4(%arg0: i32) -> (i32, i32) {
    %c0_i32 = arith.constant 0 : i32
    %c0_i32_0 = arith.constant 0 : i32
    return %c0_i32, %arg0 : i32, i32
  }
}

module attributes {stable_mosaic.version = 11 : i64} {
  func.func @kernel(%arg0: i32, %arg1: memref<32x128xbf16, #tpu.memory_space<vmem>>, %arg2: memref<4x16x32xbf16, #tpu.memory_space<vmem>>, %arg3: memref<1x32xi32, #tpu.memory_space<vmem>>, %arg4: memref<16x1xf32, #tpu.memory_space<vmem>>, %arg5: memref<16x32xbf16, #tpu.memory_space<vmem>>) attributes {dimension_semantics = [#tpu.dimension_semantics<parallel>], iteration_bounds = array<i64: 1>, scalar_prefetch = 0 : i64, scratch_operands = 0 : i64, tpu.core_type = #tpu.core_type<tc>, window_params = [{pipeline_mode = #tpu.pipeline_mode<synchronous>, transform_indices = @transform_0, window_bounds = array<i64: 32, 128>}, {pipeline_mode = #tpu.pipeline_mode<synchronous>, transform_indices = @transform_1, window_bounds = array<i64: 4, 16, 32>}, {transform_indices = @transform_2, window_bounds = array<i64: 1, 32>}, {pipeline_mode = #tpu.pipeline_mode<synchronous>, transform_indices = @transform_3, window_bounds = array<i64: 16, 1>}, {transform_indices = @transform_4, window_bounds = array<i64: 16, 32>}]} {
    %c0 = arith.constant 0 : index
    %c0_0 = arith.constant 0 : index
    %0 = vector.load %arg3[%c0, %c0_0] : memref<1x32xi32, #tpu.memory_space<vmem>>, vector<1x32xi32>
    %c65535_i32 = arith.constant 65535 : i32
    %1 = vector.broadcast %c65535_i32 : i32 to vector<1x32xi32>
    %2 = arith.andi %0, %1 : vector<1x32xi32>
    %c16_i32 = arith.constant 16 : i32
    %3 = vector.broadcast %c16_i32 : i32 to vector<1x32xi32>
    %4 = arith.shrsi %0, %3 : vector<1x32xi32>
    %cst = arith.constant 0.000000e+00 : f32
    %5 = vector.broadcast %cst : f32 to vector<16x32xf32>
    %c0_1 = arith.constant 0 : index
    %c0_2 = arith.constant 0 : index
    %6 = vector.load %arg1[%c0_1, %c0_2] : memref<32x128xbf16, #tpu.memory_space<vmem>>, vector<32x32xbf16>
    %c1_i32 = arith.constant 1 : i32
    %7 = vector.broadcast %c1_i32 : i32 to vector<1x32xi32>
    %8 = arith.cmpi sge, %4, %7 : vector<1x32xi32>
    %c1_i32_3 = arith.constant 1 : i32
    %9 = vector.broadcast %c1_i32_3 : i32 to vector<1x32xi32>
    %10 = arith.cmpi sge, %2, %9 : vector<1x32xi32>
    %11 = arith.andi %8, %10 : vector<1x32xi1>
    %12 = arith.extui %11 : vector<1x32xi1> to vector<1x32xi32>
    %13 = arith.sitofp %12 : vector<1x32xi32> to vector<1x32xf32>
    %14 = arith.truncf %13 : vector<1x32xf32> to vector<1x32xbf16>
    %15 = vector.broadcast %14 : vector<1x32xbf16> to vector<32x32xbf16>
    %16 = arith.mulf %6, %15 : vector<32x32xbf16>
    %c0_4 = arith.constant 0 : index
    %c0_5 = arith.constant 0 : index
    %c0_6 = arith.constant 0 : index
    %17 = vector.load %arg2[%c0_4, %c0_5, %c0_6] : memref<4x16x32xbf16, #tpu.memory_space<vmem>>, vector<1x16x32xbf16>
    %18 = vector.shape_cast %17 : vector<1x16x32xbf16> to vector<16x32xbf16>
    %cst_7 = arith.constant dense<0.000000e+00> : vector<16x32xf32>
    %19 = tpu.matmul %18, %16, %cst_7 {dimension_numbers = #tpu.dot_dimension_numbers<[1], [0], [0], [1], [0, 0, 1, 1], [], []>} : vector<16x32xbf16>, vector<32x32xbf16>, vector<16x32xf32> -> vector<16x32xf32>
    %20 = arith.addf %5, %19 : vector<16x32xf32>
    %c0_8 = arith.constant 0 : index
    %c1 = arith.constant 1 : index
    %21 = vector.load %arg1[%c0_8, %c1] : memref<32x128xbf16, #tpu.memory_space<vmem>>, vector<32x32xbf16>
    %c1_i32_9 = arith.constant 1 : i32
    %22 = vector.broadcast %c1_i32_9 : i32 to vector<1x32xi32>
    %23 = arith.cmpi sge, %4, %22 : vector<1x32xi32>
    %24 = arith.extui %23 : vector<1x32xi1> to vector<1x32xi32>
    %25 = arith.sitofp %24 : vector<1x32xi32> to vector<1x32xf32>
    %26 = arith.truncf %25 : vector<1x32xf32> to vector<1x32xbf16>
    %27 = vector.broadcast %26 : vector<1x32xbf16> to vector<32x32xbf16>
    %28 = arith.mulf %21, %27 : vector<32x32xbf16>
    %c1_10 = arith.constant 1 : index
    %c0_11 = arith.constant 0 : index
    %c0_12 = arith.constant 0 : index
    %29 = vector.load %arg2[%c1_10, %c0_11, %c0_12] : memref<4x16x32xbf16, #tpu.memory_space<vmem>>, vector<1x16x32xbf16>
    %30 = vector.shape_cast %29 : vector<1x16x32xbf16> to vector<16x32xbf16>
    %cst_13 = arith.constant dense<0.000000e+00> : vector<16x32xf32>
    %31 = tpu.matmul %30, %28, %cst_13 {dimension_numbers = #tpu.dot_dimension_numbers<[1], [0], [0], [1], [0, 0, 1, 1], [], []>} : vector<16x32xbf16>, vector<32x32xbf16>, vector<16x32xf32> -> vector<16x32xf32>
    %32 = arith.addf %20, %31 : vector<16x32xf32>
    %c0_14 = arith.constant 0 : index
    %c4 = arith.constant 4 : index
    %33 = vector.load %arg1[%c0_14, %c4] : memref<32x128xbf16, #tpu.memory_space<vmem>>, vector<32x32xbf16>
    %c1_i32_15 = arith.constant 1 : i32
    %34 = vector.broadcast %c1_i32_15 : i32 to vector<1x32xi32>
    %35 = arith.cmpi sge, %2, %34 : vector<1x32xi32>
    %36 = arith.extui %35 : vector<1x32xi1> to vector<1x32xi32>
    %37 = arith.sitofp %36 : vector<1x32xi32> to vector<1x32xf32>
    %38 = arith.truncf %37 : vector<1x32xf32> to vector<1x32xbf16>
    %39 = vector.broadcast %38 : vector<1x32xbf16> to vector<32x32xbf16>
    %40 = arith.mulf %33, %39 : vector<32x32xbf16>
    %c2 = arith.constant 2 : index
    %c0_16 = arith.constant 0 : index
    %c0_17 = arith.constant 0 : index
    %41 = vector.load %arg2[%c2, %c0_16, %c0_17] : memref<4x16x32xbf16, #tpu.memory_space<vmem>>, vector<1x16x32xbf16>
    %42 = vector.shape_cast %41 : vector<1x16x32xbf16> to vector<16x32xbf16>
    %cst_18 = arith.constant dense<0.000000e+00> : vector<16x32xf32>
    %43 = tpu.matmul %42, %40, %cst_18 {dimension_numbers = #tpu.dot_dimension_numbers<[1], [0], [0], [1], [0, 0, 1, 1], [], []>} : vector<16x32xbf16>, vector<32x32xbf16>, vector<16x32xf32> -> vector<16x32xf32>
    %44 = arith.addf %32, %43 : vector<16x32xf32>
    %c0_19 = arith.constant 0 : index
    %c5 = arith.constant 5 : index
    %45 = vector.load %arg1[%c0_19, %c5] : memref<32x128xbf16, #tpu.memory_space<vmem>>, vector<32x32xbf16>
    %c3 = arith.constant 3 : index
    %c0_20 = arith.constant 0 : index
    %c0_21 = arith.constant 0 : index
    %46 = vector.load %arg2[%c3, %c0_20, %c0_21] : memref<4x16x32xbf16, #tpu.memory_space<vmem>>, vector<1x16x32xbf16>
    %47 = vector.shape_cast %46 : vector<1x16x32xbf16> to vector<16x32xbf16>
    %cst_22 = arith.constant dense<0.000000e+00> : vector<16x32xf32>
    %48 = tpu.matmul %47, %45, %cst_22 {dimension_numbers = #tpu.dot_dimension_numbers<[1], [0], [0], [1], [0, 0, 1, 1], [], []>} : vector<16x32xbf16>, vector<32x32xbf16>, vector<16x32xf32> -> vector<16x32xf32>
    %49 = arith.addf %44, %48 : vector<16x32xf32>
    %c0_23 = arith.constant 0 : index
    %c0_24 = arith.constant 0 : index
    %50 = vector.load %arg4[%c0_23, %c0_24] : memref<16x1xf32, #tpu.memory_space<vmem>>, vector<16x1xf32>
    %51 = vector.broadcast %50 : vector<16x1xf32> to vector<16x32xf32>
    %52 = arith.addf %49, %51 : vector<16x32xf32>
    %cst_25 = arith.constant 0.000000e+00 : f32
    %53 = vector.broadcast %cst_25 : f32 to vector<16x32xf32>
    %54 = arith.cmpf ogt, %52, %53 : vector<16x32xf32>
    %cst_26 = arith.constant 1.000000e-01 : f32
    %55 = vector.broadcast %cst_26 : f32 to vector<16x32xf32>
    %56 = arith.mulf %55, %52 : vector<16x32xf32>
    %57 = arith.select %54, %52, %56 : vector<16x32xi1>, vector<16x32xf32>
    %58 = arith.truncf %57 : vector<16x32xf32> to vector<16x32xbf16>
    %c0_27 = arith.constant 0 : index
    %c0_28 = arith.constant 0 : index
    %59 = vector.load %arg5[%c0_27, %c0_28] : memref<16x32xbf16, #tpu.memory_space<vmem>>, vector<16x32xbf16>
    tpu.vector_store %arg5[%c0_27, %c0_28], %58 {strides = array<i32>} : memref<16x32xbf16, #tpu.memory_space<vmem>>, vector<16x32xbf16>,
    return
  }
  func.func @transform_0(%arg0: i32) -> (i32, i32) {
    %c0_i32 = arith.constant 0 : i32
    %c0_i32_0 = arith.constant 0 : i32
    %c0_i32_1 = arith.constant 0 : i32
    return %c0_i32, %c0_i32_0 : i32, i32
  }
  func.func @transform_1(%arg0: i32) -> (i32, i32, i32) {
    %c0_i32 = arith.constant 0 : i32
    %c0_i32_0 = arith.constant 0 : i32
    %c0_i32_1 = arith.constant 0 : i32
    %c0_i32_2 = arith.constant 0 : i32
    return %c0_i32, %c0_i32_0, %c0_i32_1 : i32, i32, i32
  }
  func.func @transform_2(%arg0: i32) -> (i32, i32) {
    %c0_i32 = arith.constant 0 : i32
    %c0_i32_0 = arith.constant 0 : i32
    return %c0_i32, %arg0 : i32, i32
  }
  func.func @transform_3(%arg0: i32) -> (i32, i32) {
    %c0_i32 = arith.constant 0 : i32
    %c0_i32_0 = arith.constant 0 : i32
    %c0_i32_1 = arith.constant 0 : i32
    return %c0_i32, %c0_i32_0 : i32, i32
  }
  func.func @transform_4(%arg0: i32) -> (i32, i32) {
    %c0_i32 = arith.constant 0 : i32
    %c0_i32_0 = arith.constant 0 : i32
    return %c0_i32, %arg0 : i32, i32
  }
}

module attributes {stable_mosaic.version = 11 : i64} {
  func.func @kernel(%arg0: i32, %arg1: memref<32x128xbf16, #tpu.memory_space<vmem>>, %arg2: memref<1x16x32xbf16, #tpu.memory_space<vmem>>, %arg3: memref<16x1xf32, #tpu.memory_space<vmem>>, %arg4: memref<16x8xbf16, #tpu.memory_space<vmem>>) attributes {dimension_semantics = [#tpu.dimension_semantics<parallel>], iteration_bounds = array<i64: 1>, scalar_prefetch = 0 : i64, scratch_operands = 0 : i64, tpu.core_type = #tpu.core_type<tc>, window_params = [{pipeline_mode = #tpu.pipeline_mode<synchronous>, transform_indices = @transform_0, window_bounds = array<i64: 32, 128>}, {pipeline_mode = #tpu.pipeline_mode<synchronous>, transform_indices = @transform_1, window_bounds = array<i64: 1, 16, 32>}, {pipeline_mode = #tpu.pipeline_mode<synchronous>, transform_indices = @transform_2, window_bounds = array<i64: 16, 1>}, {transform_indices = @transform_3, window_bounds = array<i64: 16, 8>}]} {
    %cst = arith.constant 0.000000e+00 : f32
    %0 = vector.broadcast %cst : f32 to vector<16x8xf32>
    %c0 = arith.constant 0 : index
    %c0_0 = arith.constant 0 : index
    %1 = vector.load %arg1[%c0, %c0_0] : memref<32x128xbf16, #tpu.memory_space<vmem>>, vector<32x8xbf16>
    %c0_1 = arith.constant 0 : index
    %c0_2 = arith.constant 0 : index
    %c0_3 = arith.constant 0 : index
    %2 = vector.load %arg2[%c0_1, %c0_2, %c0_3] : memref<1x16x32xbf16, #tpu.memory_space<vmem>>, vector<1x16x32xbf16>
    %3 = vector.shape_cast %2 : vector<1x16x32xbf16> to vector<16x32xbf16>
    %cst_4 = arith.constant dense<0.000000e+00> : vector<16x8xf32>
    %4 = tpu.matmul %3, %1, %cst_4 {dimension_numbers = #tpu.dot_dimension_numbers<[1], [0], [0], [1], [0, 0, 1, 1], [], []>} : vector<16x32xbf16>, vector<32x8xbf16>, vector<16x8xf32> -> vector<16x8xf32>
    %5 = arith.addf %0, %4 : vector<16x8xf32>
    %c0_5 = arith.constant 0 : index
    %c0_6 = arith.constant 0 : index
    %6 = vector.load %arg3[%c0_5, %c0_6] : memref<16x1xf32, #tpu.memory_space<vmem>>, vector<16x1xf32>
    %7 = vector.broadcast %6 : vector<16x1xf32> to vector<16x8xf32>
    %8 = arith.addf %5, %7 : vector<16x8xf32>
    %cst_7 = arith.constant 0.000000e+00 : f32
    %9 = vector.broadcast %cst_7 : f32 to vector<16x8xf32>
    %10 = arith.cmpf ogt, %8, %9 : vector<16x8xf32>
    %cst_8 = arith.constant 1.000000e-01 : f32
    %11 = vector.broadcast %cst_8 : f32 to vector<16x8xf32>
    %12 = arith.mulf %11, %8 : vector<16x8xf32>
    %13 = arith.select %10, %8, %12 : vector<16x8xi1>, vector<16x8xf32>
    %14 = arith.truncf %13 : vector<16x8xf32> to vector<16x8xbf16>
    %c0_9 = arith.constant 0 : index
    %c0_10 = arith.constant 0 : index
    %15 = vector.load %arg4[%c0_9, %c0_10] : memref<16x8xbf16, #tpu.memory_space<vmem>>, vector<16x8xbf16>
    tpu.vector_store %arg4[%c0_9, %c0_10], %14 {strides = array<i32>} : memref<16x8xbf16, #tpu.memory_space<vmem>>, vector<16x8xbf16>,
    return
  }
  func.func @transform_0(%arg0: i32) -> (i32, i32) {
    %c0_i32 = arith.constant 0 : i32
    %c0_i32_0 = arith.constant 0 : i32
    %c0_i32_1 = arith.constant 0 : i32
    return %c0_i32, %c0_i32_0 : i32, i32
  }
  func.func @transform_1(%arg0: i32) -> (i32, i32, i32) {
    %c0_i32 = arith.constant 0 : i32
    %c0_i32_0 = arith.constant 0 : i32
    %c0_i32_1 = arith.constant 0 : i32
    %c0_i32_2 = arith.constant 0 : i32
    return %c0_i32, %c0_i32_0, %c0_i32_1 : i32, i32, i32
  }
  func.func @transform_2(%arg0: i32) -> (i32, i32) {
    %c0_i32 = arith.constant 0 : i32
    %c0_i32_0 = arith.constant 0 : i32
    %c0_i32_1 = arith.constant 0 : i32
    return %c0_i32, %c0_i32_0 : i32, i32
  }
  func.func @transform_3(%arg0: i32) -> (i32, i32) {
    %c0_i32 = arith.constant 0 : i32
    %c0_i32_0 = arith.constant 0 : i32
    return %c0_i32, %arg0 : i32, i32
  }
}

module attributes {stable_mosaic.version = 11 : i64} {
  func.func @kernel(%arg0: i32, %arg1: memref<64x128xbf16, #tpu.memory_space<vmem>>, %arg2: memref<4x32x64xbf16, #tpu.memory_space<vmem>>, %arg3: memref<1x8xi32, #tpu.memory_space<vmem>>, %arg4: memref<32x1xf32, #tpu.memory_space<vmem>>, %arg5: memref<32x8xbf16, #tpu.memory_space<vmem>>) attributes {dimension_semantics = [#tpu.dimension_semantics<parallel>], iteration_bounds = array<i64: 1>, scalar_prefetch = 0 : i64, scratch_operands = 0 : i64, tpu.core_type = #tpu.core_type<tc>, window_params = [{pipeline_mode = #tpu.pipeline_mode<synchronous>, transform_indices = @transform_0, window_bounds = array<i64: 64, 128>}, {pipeline_mode = #tpu.pipeline_mode<synchronous>, transform_indices = @transform_1, window_bounds = array<i64: 4, 32, 64>}, {transform_indices = @transform_2, window_bounds = array<i64: 1, 8>}, {pipeline_mode = #tpu.pipeline_mode<synchronous>, transform_indices = @transform_3, window_bounds = array<i64: 32, 1>}, {transform_indices = @transform_4, window_bounds = array<i64: 32, 8>}]} {
    %c0 = arith.constant 0 : index
    %c0_0 = arith.constant 0 : index
    %0 = vector.load %arg3[%c0, %c0_0] : memref<1x8xi32, #tpu.memory_space<vmem>>, vector<1x8xi32>
    %c65535_i32 = arith.constant 65535 : i32
    %1 = vector.broadcast %c65535_i32 : i32 to vector<1x8xi32>
    %2 = arith.andi %0, %1 : vector<1x8xi32>
    %c16_i32 = arith.constant 16 : i32
    %3 = vector.broadcast %c16_i32 : i32 to vector<1x8xi32>
    %4 = arith.shrsi %0, %3 : vector<1x8xi32>
    %cst = arith.constant 0.000000e+00 : f32
    %5 = vector.broadcast %cst : f32 to vector<32x8xf32>
    %c0_1 = arith.constant 0 : index
    %c0_2 = arith.constant 0 : index
    %6 = vector.load %arg1[%c0_1, %c0_2] : memref<64x128xbf16, #tpu.memory_space<vmem>>, vector<64x8xbf16>
    %c1_i32 = arith.constant 1 : i32
    %7 = vector.broadcast %c1_i32 : i32 to vector<1x8xi32>
    %8 = arith.cmpi sge, %4, %7 : vector<1x8xi32>
    %c1_i32_3 = arith.constant 1 : i32
    %9 = vector.broadcast %c1_i32_3 : i32 to vector<1x8xi32>
    %10 = arith.cmpi sge, %2, %9 : vector<1x8xi32>
    %11 = arith.andi %8, %10 : vector<1x8xi1>
    %12 = arith.extui %11 : vector<1x8xi1> to vector<1x8xi32>
    %13 = arith.sitofp %12 : vector<1x8xi32> to vector<1x8xf32>
    %14 = arith.truncf %13 : vector<1x8xf32> to vector<1x8xbf16>
    %15 = vector.broadcast %14 : vector<1x8xbf16> to vector<64x8xbf16>
    %16 = arith.mulf %6, %15 : vector<64x8xbf16>
    %c0_4 = arith.constant 0 : index
    %c0_5 = arith.constant 0 : index
    %c0_6 = arith.constant 0 : index
    %17 = vector.load %arg2[%c0_4, %c0_5, %c0_6] : memref<4x32x64xbf16, #tpu.memory_space<vmem>>, vector<1x32x64xbf16>
    %18 = vector.shape_cast %17 : vector<1x32x64xbf16> to vector<32x64xbf16>
    %cst_7 = arith.constant dense<0.000000e+00> : vector<32x8xf32>
    %19 = tpu.matmul %18, %16, %cst_7 {dimension_numbers = #tpu.dot_dimension_numbers<[1], [0], [0], [1], [0, 0, 1, 1], [], []>} : vector<32x64xbf16>, vector<64x8xbf16>, vector<32x8xf32> -> vector<32x8xf32>
    %20 = arith.addf %5, %19 : vector<32x8xf32>
    %c0_8 = arith.constant 0 : index
    %c1 = arith.constant 1 : index
    %21 = vector.load %arg1[%c0_8, %c1] : memref<64x128xbf16, #tpu.memory_space<vmem>>, vector<64x8xbf16>
    %c1_i32_9 = arith.constant 1 : i32
    %22 = vector.broadcast %c1_i32_9 : i32 to vector<1x8xi32>
    %23 = arith.cmpi sge, %4, %22 : vector<1x8xi32>
    %24 = arith.extui %23 : vector<1x8xi1> to vector<1x8xi32>
    %25 = arith.sitofp %24 : vector<1x8xi32> to vector<1x8xf32>
    %26 = arith.truncf %25 : vector<1x8xf32> to vector<1x8xbf16>
    %27 = vector.broadcast %26 : vector<1x8xbf16> to vector<64x8xbf16>
    %28 = arith.mulf %21, %27 : vector<64x8xbf16>
    %c1_10 = arith.constant 1 : index
    %c0_11 = arith.constant 0 : index
    %c0_12 = arith.constant 0 : index
    %29 = vector.load %arg2[%c1_10, %c0_11, %c0_12] : memref<4x32x64xbf16, #tpu.memory_space<vmem>>, vector<1x32x64xbf16>
    %30 = vector.shape_cast %29 : vector<1x32x64xbf16> to vector<32x64xbf16>
    %cst_13 = arith.constant dense<0.000000e+00> : vector<32x8xf32>
    %31 = tpu.matmul %30, %28, %cst_13 {dimension_numbers = #tpu.dot_dimension_numbers<[1], [0], [0], [1], [0, 0, 1, 1], [], []>} : vector<32x64xbf16>, vector<64x8xbf16>, vector<32x8xf32> -> vector<32x8xf32>
    %32 = arith.addf %20, %31 : vector<32x8xf32>
    %c0_14 = arith.constant 0 : index
    %c2 = arith.constant 2 : index
    %33 = vector.load %arg1[%c0_14, %c2] : memref<64x128xbf16, #tpu.memory_space<vmem>>, vector<64x8xbf16>
    %c1_i32_15 = arith.constant 1 : i32
    %34 = vector.broadcast %c1_i32_15 : i32 to vector<1x8xi32>
    %35 = arith.cmpi sge, %2, %34 : vector<1x8xi32>
    %36 = arith.extui %35 : vector<1x8xi1> to vector<1x8xi32>
    %37 = arith.sitofp %36 : vector<1x8xi32> to vector<1x8xf32>
    %38 = arith.truncf %37 : vector<1x8xf32> to vector<1x8xbf16>
    %39 = vector.broadcast %38 : vector<1x8xbf16> to vector<64x8xbf16>
    %40 = arith.mulf %33, %39 : vector<64x8xbf16>
    %c2_16 = arith.constant 2 : index
    %c0_17 = arith.constant 0 : index
    %c0_18 = arith.constant 0 : index
    %41 = vector.load %arg2[%c2_16, %c0_17, %c0_18] : memref<4x32x64xbf16, #tpu.memory_space<vmem>>, vector<1x32x64xbf16>
    %42 = vector.shape_cast %41 : vector<1x32x64xbf16> to vector<32x64xbf16>
    %cst_19 = arith.constant dense<0.000000e+00> : vector<32x8xf32>
    %43 = tpu.matmul %42, %40, %cst_19 {dimension_numbers = #tpu.dot_dimension_numbers<[1], [0], [0], [1], [0, 0, 1, 1], [], []>} : vector<32x64xbf16>, vector<64x8xbf16>, vector<32x8xf32> -> vector<32x8xf32>
    %44 = arith.addf %32, %43 : vector<32x8xf32>
    %c0_20 = arith.constant 0 : index
    %c3 = arith.constant 3 : index
    %45 = vector.load %arg1[%c0_20, %c3] : memref<64x128xbf16, #tpu.memory_space<vmem>>, vector<64x8xbf16>
    %c3_21 = arith.constant 3 : index
    %c0_22 = arith.constant 0 : index
    %c0_23 = arith.constant 0 : index
    %46 = vector.load %arg2[%c3_21, %c0_22, %c0_23] : memref<4x32x64xbf16, #tpu.memory_space<vmem>>, vector<1x32x64xbf16>
    %47 = vector.shape_cast %46 : vector<1x32x64xbf16> to vector<32x64xbf16>
    %cst_24 = arith.constant dense<0.000000e+00> : vector<32x8xf32>
    %48 = tpu.matmul %47, %45, %cst_24 {dimension_numbers = #tpu.dot_dimension_numbers<[1], [0], [0], [1], [0, 0, 1, 1], [], []>} : vector<32x64xbf16>, vector<64x8xbf16>, vector<32x8xf32> -> vector<32x8xf32>
    %49 = arith.addf %44, %48 : vector<32x8xf32>
    %c0_25 = arith.constant 0 : index
    %c0_26 = arith.constant 0 : index
    %50 = vector.load %arg4[%c0_25, %c0_26] : memref<32x1xf32, #tpu.memory_space<vmem>>, vector<32x1xf32>
    %51 = vector.broadcast %50 : vector<32x1xf32> to vector<32x8xf32>
    %52 = arith.addf %49, %51 : vector<32x8xf32>
    %cst_27 = arith.constant 0.000000e+00 : f32
    %53 = vector.broadcast %cst_27 : f32 to vector<32x8xf32>
    %54 = arith.cmpf ogt, %52, %53 : vector<32x8xf32>
    %cst_28 = arith.constant 1.000000e-01 : f32
    %55 = vector.broadcast %cst_28 : f32 to vector<32x8xf32>
    %56 = arith.mulf %55, %52 : vector<32x8xf32>
    %57 = arith.select %54, %52, %56 : vector<32x8xi1>, vector<32x8xf32>
    %58 = arith.truncf %57 : vector<32x8xf32> to vector<32x8xbf16>
    %c0_29 = arith.constant 0 : index
    %c0_30 = arith.constant 0 : index
    %59 = vector.load %arg5[%c0_29, %c0_30] : memref<32x8xbf16, #tpu.memory_space<vmem>>, vector<32x8xbf16>
    tpu.vector_store %arg5[%c0_29, %c0_30], %58 {strides = array<i32>} : memref<32x8xbf16, #tpu.memory_space<vmem>>, vector<32x8xbf16>,
    return
  }
  func.func @transform_0(%arg0: i32) -> (i32, i32) {
    %c0_i32 = arith.constant 0 : i32
    %c0_i32_0 = arith.constant 0 : i32
    %c0_i32_1 = arith.constant 0 : i32
    return %c0_i32, %c0_i32_0 : i32, i32
  }
  func.func @transform_1(%arg0: i32) -> (i32, i32, i32) {
    %c0_i32 = arith.constant 0 : i32
    %c0_i32_0 = arith.constant 0 : i32
    %c0_i32_1 = arith.constant 0 : i32
    %c0_i32_2 = arith.constant 0 : i32
    return %c0_i32, %c0_i32_0, %c0_i32_1 : i32, i32, i32
  }
  func.func @transform_2(%arg0: i32) -> (i32, i32) {
    %c0_i32 = arith.constant 0 : i32
    %c0_i32_0 = arith.constant 0 : i32
    return %c0_i32, %arg0 : i32, i32
  }
  func.func @transform_3(%arg0: i32) -> (i32, i32) {
    %c0_i32 = arith.constant 0 : i32
    %c0_i32_0 = arith.constant 0 : i32
    %c0_i32_1 = arith.constant 0 : i32
    return %c0_i32, %c0_i32_0 : i32, i32
  }
  func.func @transform_4(%arg0: i32) -> (i32, i32) {
    %c0_i32 = arith.constant 0 : i32
    %c0_i32_0 = arith.constant 0 : i32
    return %c0_i32, %arg0 : i32, i32
  }
}

module attributes {stable_mosaic.version = 11 : i64} {
  func.func @kernel(%arg0: i32, %arg1: memref<16x128xbf16, #tpu.memory_space<vmem>>, %arg2: memref<9x16x16xbf16, #tpu.memory_space<vmem>>, %arg3: memref<16x128xbf16, #tpu.memory_space<vmem>>, %arg4: memref<9x16x16xbf16, #tpu.memory_space<vmem>>, %arg5: memref<1x32xi32, #tpu.memory_space<vmem>>, %arg6: memref<16x1xf32, #tpu.memory_space<vmem>>, %arg7: memref<16x32xbf16, #tpu.memory_space<vmem>>) attributes {dimension_semantics = [#tpu.dimension_semantics<parallel>], iteration_bounds = array<i64: 1>, scalar_prefetch = 0 : i64, scratch_operands = 0 : i64, tpu.core_type = #tpu.core_type<tc>, window_params = [{pipeline_mode = #tpu.pipeline_mode<synchronous>, transform_indices = @transform_0, window_bounds = array<i64: 16, 128>}, {pipeline_mode = #tpu.pipeline_mode<synchronous>, transform_indices = @transform_1, window_bounds = array<i64: 9, 16, 16>}, {pipeline_mode = #tpu.pipeline_mode<synchronous>, transform_indices = @transform_2, window_bounds = array<i64: 16, 128>}, {pipeline_mode = #tpu.pipeline_mode<synchronous>, transform_indices = @transform_3, window_bounds = array<i64: 9, 16, 16>}, {transform_indices = @transform_4, window_bounds = array<i64: 1, 32>}, {pipeline_mode = #tpu.pipeline_mode<synchronous>, transform_indices = @transform_5, window_bounds = array<i64: 16, 1>}, {transform_indices = @transform_6, window_bounds = array<i64: 16, 32>}]} {
    %c0 = arith.constant 0 : index
    %c0_0 = arith.constant 0 : index
    %0 = vector.load %arg5[%c0, %c0_0] : memref<1x32xi32, #tpu.memory_space<vmem>>, vector<1x32xi32>
    %c65535_i32 = arith.constant 65535 : i32
    %1 = vector.broadcast %c65535_i32 : i32 to vector<1x32xi32>
    %2 = arith.andi %0, %1 : vector<1x32xi32>
    %c16_i32 = arith.constant 16 : i32
    %3 = vector.broadcast %c16_i32 : i32 to vector<1x32xi32>
    %4 = arith.shrsi %0, %3 : vector<1x32xi32>
    %cst = arith.constant 0.000000e+00 : f32
    %5 = vector.broadcast %cst : f32 to vector<16x32xf32>
    %c0_1 = arith.constant 0 : index
    %c0_2 = arith.constant 0 : index
    %6 = vector.load %arg1[%c0_1, %c0_2] : memref<16x128xbf16, #tpu.memory_space<vmem>>, vector<16x32xbf16>
    %c1_i32 = arith.constant 1 : i32
    %7 = vector.broadcast %c1_i32 : i32 to vector<1x32xi32>
    %8 = arith.cmpi sge, %4, %7 : vector<1x32xi32>
    %c1_i32_3 = arith.constant 1 : i32
    %9 = vector.broadcast %c1_i32_3 : i32 to vector<1x32xi32>
    %10 = arith.cmpi sge, %2, %9 : vector<1x32xi32>
    %11 = arith.andi %8, %10 : vector<1x32xi1>
    %12 = arith.extui %11 : vector<1x32xi1> to vector<1x32xi32>
    %13 = arith.sitofp %12 : vector<1x32xi32> to vector<1x32xf32>
    %14 = arith.truncf %13 : vector<1x32xf32> to vector<1x32xbf16>
    %15 = vector.broadcast %14 : vector<1x32xbf16> to vector<16x32xbf16>
    %16 = arith.mulf %6, %15 : vector<16x32xbf16>
    %c0_4 = arith.constant 0 : index
    %c0_5 = arith.constant 0 : index
    %c0_6 = arith.constant 0 : index
    %17 = vector.load %arg2[%c0_4, %c0_5, %c0_6] : memref<9x16x16xbf16, #tpu.memory_space<vmem>>, vector<1x16x16xbf16>
    %18 = vector.shape_cast %17 : vector<1x16x16xbf16> to vector<16x16xbf16>
    %cst_7 = arith.constant dense<0.000000e+00> : vector<16x32xf32>
    %19 = tpu.matmul %18, %16, %cst_7 {dimension_numbers = #tpu.dot_dimension_numbers<[1], [0], [0], [1], [0, 0, 1, 1], [], []>} : vector<16x16xbf16>, vector<16x32xbf16>, vector<16x32xf32> -> vector<16x32xf32>
    %20 = arith.addf %5, %19 : vector<16x32xf32>
    %c0_8 = arith.constant 0 : index
    %c1 = arith.constant 1 : index
    %21 = vector.load %arg1[%c0_8, %c1] : memref<16x128xbf16, #tpu.memory_space<vmem>>, vector<16x32xbf16>
    %c1_i32_9 = arith.constant 1 : i32
    %22 = vector.broadcast %c1_i32_9 : i32 to vector<1x32xi32>
    %23 = arith.cmpi sge, %4, %22 : vector<1x32xi32>
    %24 = arith.extui %23 : vector<1x32xi1> to vector<1x32xi32>
    %25 = arith.sitofp %24 : vector<1x32xi32> to vector<1x32xf32>
    %26 = arith.truncf %25 : vector<1x32xf32> to vector<1x32xbf16>
    %27 = vector.broadcast %26 : vector<1x32xbf16> to vector<16x32xbf16>
    %28 = arith.mulf %21, %27 : vector<16x32xbf16>
    %c1_10 = arith.constant 1 : index
    %c0_11 = arith.constant 0 : index
    %c0_12 = arith.constant 0 : index
    %29 = vector.load %arg2[%c1_10, %c0_11, %c0_12] : memref<9x16x16xbf16, #tpu.memory_space<vmem>>, vector<1x16x16xbf16>
    %30 = vector.shape_cast %29 : vector<1x16x16xbf16> to vector<16x16xbf16>
    %cst_13 = arith.constant dense<0.000000e+00> : vector<16x32xf32>
    %31 = tpu.matmul %30, %28, %cst_13 {dimension_numbers = #tpu.dot_dimension_numbers<[1], [0], [0], [1], [0, 0, 1, 1], [], []>} : vector<16x16xbf16>, vector<16x32xbf16>, vector<16x32xf32> -> vector<16x32xf32>
    %32 = arith.addf %20, %31 : vector<16x32xf32>
    %c0_14 = arith.constant 0 : index
    %c2 = arith.constant 2 : index
    %33 = vector.load %arg1[%c0_14, %c2] : memref<16x128xbf16, #tpu.memory_space<vmem>>, vector<16x32xbf16>
    %c1_i32_15 = arith.constant 1 : i32
    %34 = vector.broadcast %c1_i32_15 : i32 to vector<1x32xi32>
    %35 = arith.cmpi sge, %4, %34 : vector<1x32xi32>
    %c3_i32 = arith.constant 3 : i32
    %36 = vector.broadcast %c3_i32 : i32 to vector<1x32xi32>
    %37 = arith.cmpi slt, %2, %36 : vector<1x32xi32>
    %38 = arith.andi %35, %37 : vector<1x32xi1>
    %39 = arith.extui %38 : vector<1x32xi1> to vector<1x32xi32>
    %40 = arith.sitofp %39 : vector<1x32xi32> to vector<1x32xf32>
    %41 = arith.truncf %40 : vector<1x32xf32> to vector<1x32xbf16>
    %42 = vector.broadcast %41 : vector<1x32xbf16> to vector<16x32xbf16>
    %43 = arith.mulf %33, %42 : vector<16x32xbf16>
    %c2_16 = arith.constant 2 : index
    %c0_17 = arith.constant 0 : index
    %c0_18 = arith.constant 0 : index
    %44 = vector.load %arg2[%c2_16, %c0_17, %c0_18] : memref<9x16x16xbf16, #tpu.memory_space<vmem>>, vector<1x16x16xbf16>
    %45 = vector.shape_cast %44 : vector<1x16x16xbf16> to vector<16x16xbf16>
    %cst_19 = arith.constant dense<0.000000e+00> : vector<16x32xf32>
    %46 = tpu.matmul %45, %43, %cst_19 {dimension_numbers = #tpu.dot_dimension_numbers<[1], [0], [0], [1], [0, 0, 1, 1], [], []>} : vector<16x16xbf16>, vector<16x32xbf16>, vector<16x32xf32> -> vector<16x32xf32>
    %47 = arith.addf %32, %46 : vector<16x32xf32>
    %c0_20 = arith.constant 0 : index
    %c4 = arith.constant 4 : index
    %48 = vector.load %arg1[%c0_20, %c4] : memref<16x128xbf16, #tpu.memory_space<vmem>>, vector<16x32xbf16>
    %c1_i32_21 = arith.constant 1 : i32
    %49 = vector.broadcast %c1_i32_21 : i32 to vector<1x32xi32>
    %50 = arith.cmpi sge, %2, %49 : vector<1x32xi32>
    %51 = arith.extui %50 : vector<1x32xi1> to vector<1x32xi32>
    %52 = arith.sitofp %51 : vector<1x32xi32> to vector<1x32xf32>
    %53 = arith.truncf %52 : vector<1x32xf32> to vector<1x32xbf16>
    %54 = vector.broadcast %53 : vector<1x32xbf16> to vector<16x32xbf16>
    %55 = arith.mulf %48, %54 : vector<16x32xbf16>
    %c3 = arith.constant 3 : index
    %c0_22 = arith.constant 0 : index
    %c0_23 = arith.constant 0 : index
    %56 = vector.load %arg2[%c3, %c0_22, %c0_23] : memref<9x16x16xbf16, #tpu.memory_space<vmem>>, vector<1x16x16xbf16>
    %57 = vector.shape_cast %56 : vector<1x16x16xbf16> to vector<16x16xbf16>
    %cst_24 = arith.constant dense<0.000000e+00> : vector<16x32xf32>
    %58 = tpu.matmul %57, %55, %cst_24 {dimension_numbers = #tpu.dot_dimension_numbers<[1], [0], [0], [1], [0, 0, 1, 1], [], []>} : vector<16x16xbf16>, vector<16x32xbf16>, vector<16x32xf32> -> vector<16x32xf32>
    %59 = arith.addf %47, %58 : vector<16x32xf32>
    %c0_25 = arith.constant 0 : index
    %c5 = arith.constant 5 : index
    %60 = vector.load %arg1[%c0_25, %c5] : memref<16x128xbf16, #tpu.memory_space<vmem>>, vector<16x32xbf16>
    %c4_26 = arith.constant 4 : index
    %c0_27 = arith.constant 0 : index
    %c0_28 = arith.constant 0 : index
    %61 = vector.load %arg2[%c4_26, %c0_27, %c0_28] : memref<9x16x16xbf16, #tpu.memory_space<vmem>>, vector<1x16x16xbf16>
    %62 = vector.shape_cast %61 : vector<1x16x16xbf16> to vector<16x16xbf16>
    %cst_29 = arith.constant dense<0.000000e+00> : vector<16x32xf32>
    %63 = tpu.matmul %62, %60, %cst_29 {dimension_numbers = #tpu.dot_dimension_numbers<[1], [0], [0], [1], [0, 0, 1, 1], [], []>} : vector<16x16xbf16>, vector<16x32xbf16>, vector<16x32xf32> -> vector<16x32xf32>
    %64 = arith.addf %59, %63 : vector<16x32xf32>
    %c0_30 = arith.constant 0 : index
    %c6 = arith.constant 6 : index
    %65 = vector.load %arg1[%c0_30, %c6] : memref<16x128xbf16, #tpu.memory_space<vmem>>, vector<16x32xbf16>
    %c3_i32_31 = arith.constant 3 : i32
    %66 = vector.broadcast %c3_i32_31 : i32 to vector<1x32xi32>
    %67 = arith.cmpi slt, %2, %66 : vector<1x32xi32>
    %68 = arith.extui %67 : vector<1x32xi1> to vector<1x32xi32>
    %69 = arith.sitofp %68 : vector<1x32xi32> to vector<1x32xf32>
    %70 = arith.truncf %69 : vector<1x32xf32> to vector<1x32xbf16>
    %71 = vector.broadcast %70 : vector<1x32xbf16> to vector<16x32xbf16>
    %72 = arith.mulf %65, %71 : vector<16x32xbf16>
    %c5_32 = arith.constant 5 : index
    %c0_33 = arith.constant 0 : index
    %c0_34 = arith.constant 0 : index
    %73 = vector.load %arg2[%c5_32, %c0_33, %c0_34] : memref<9x16x16xbf16, #tpu.memory_space<vmem>>, vector<1x16x16xbf16>
    %74 = vector.shape_cast %73 : vector<1x16x16xbf16> to vector<16x16xbf16>
    %cst_35 = arith.constant dense<0.000000e+00> : vector<16x32xf32>
    %75 = tpu.matmul %74, %72, %cst_35 {dimension_numbers = #tpu.dot_dimension_numbers<[1], [0], [0], [1], [0, 0, 1, 1], [], []>} : vector<16x16xbf16>, vector<16x32xbf16>, vector<16x32xf32> -> vector<16x32xf32>
    %76 = arith.addf %64, %75 : vector<16x32xf32>
    %c0_36 = arith.constant 0 : index
    %c8 = arith.constant 8 : index
    %77 = vector.load %arg1[%c0_36, %c8] : memref<16x128xbf16, #tpu.memory_space<vmem>>, vector<16x32xbf16>
    %c3_i32_37 = arith.constant 3 : i32
    %78 = vector.broadcast %c3_i32_37 : i32 to vector<1x32xi32>
    %79 = arith.cmpi slt, %4, %78 : vector<1x32xi32>
    %c1_i32_38 = arith.constant 1 : i32
    %80 = vector.broadcast %c1_i32_38 : i32 to vector<1x32xi32>
    %81 = arith.cmpi sge, %2, %80 : vector<1x32xi32>
    %82 = arith.andi %79, %81 : vector<1x32xi1>
    %83 = arith.extui %82 : vector<1x32xi1> to vector<1x32xi32>
    %84 = arith.sitofp %83 : vector<1x32xi32> to vector<1x32xf32>
    %85 = arith.truncf %84 : vector<1x32xf32> to vector<1x32xbf16>
    %86 = vector.broadcast %85 : vector<1x32xbf16> to vector<16x32xbf16>
    %87 = arith.mulf %77, %86 : vector<16x32xbf16>
    %c6_39 = arith.constant 6 : index
    %c0_40 = arith.constant 0 : index
    %c0_41 = arith.constant 0 : index
    %88 = vector.load %arg2[%c6_39, %c0_40, %c0_41] : memref<9x16x16xbf16, #tpu.memory_space<vmem>>, vector<1x16x16xbf16>
    %89 = vector.shape_cast %88 : vector<1x16x16xbf16> to vector<16x16xbf16>
    %cst_42 = arith.constant dense<0.000000e+00> : vector<16x32xf32>
    %90 = tpu.matmul %89, %87, %cst_42 {dimension_numbers = #tpu.dot_dimension_numbers<[1], [0], [0], [1], [0, 0, 1, 1], [], []>} : vector<16x16xbf16>, vector<16x32xbf16>, vector<16x32xf32> -> vector<16x32xf32>
    %91 = arith.addf %76, %90 : vector<16x32xf32>
    %c0_43 = arith.constant 0 : index
    %c9 = arith.constant 9 : index
    %92 = vector.load %arg1[%c0_43, %c9] : memref<16x128xbf16, #tpu.memory_space<vmem>>, vector<16x32xbf16>
    %c3_i32_44 = arith.constant 3 : i32
    %93 = vector.broadcast %c3_i32_44 : i32 to vector<1x32xi32>
    %94 = arith.cmpi slt, %4, %93 : vector<1x32xi32>
    %95 = arith.extui %94 : vector<1x32xi1> to vector<1x32xi32>
    %96 = arith.sitofp %95 : vector<1x32xi32> to vector<1x32xf32>
    %97 = arith.truncf %96 : vector<1x32xf32> to vector<1x32xbf16>
    %98 = vector.broadcast %97 : vector<1x32xbf16> to vector<16x32xbf16>
    %99 = arith.mulf %92, %98 : vector<16x32xbf16>
    %c7 = arith.constant 7 : index
    %c0_45 = arith.constant 0 : index
    %c0_46 = arith.constant 0 : index
    %100 = vector.load %arg2[%c7, %c0_45, %c0_46] : memref<9x16x16xbf16, #tpu.memory_space<vmem>>, vector<1x16x16xbf16>
    %101 = vector.shape_cast %100 : vector<1x16x16xbf16> to vector<16x16xbf16>
    %cst_47 = arith.constant dense<0.000000e+00> : vector<16x32xf32>
    %102 = tpu.matmul %101, %99, %cst_47 {dimension_numbers = #tpu.dot_dimension_numbers<[1], [0], [0], [1], [0, 0, 1, 1], [], []>} : vector<16x16xbf16>, vector<16x32xbf16>, vector<16x32xf32> -> vector<16x32xf32>
    %103 = arith.addf %91, %102 : vector<16x32xf32>
    %c0_48 = arith.constant 0 : index
    %c10 = arith.constant 10 : index
    %104 = vector.load %arg1[%c0_48, %c10] : memref<16x128xbf16, #tpu.memory_space<vmem>>, vector<16x32xbf16>
    %c3_i32_49 = arith.constant 3 : i32
    %105 = vector.broadcast %c3_i32_49 : i32 to vector<1x32xi32>
    %106 = arith.cmpi slt, %4, %105 : vector<1x32xi32>
    %c3_i32_50 = arith.constant 3 : i32
    %107 = vector.broadcast %c3_i32_50 : i32 to vector<1x32xi32>
    %108 = arith.cmpi slt, %2, %107 : vector<1x32xi32>
    %109 = arith.andi %106, %108 : vector<1x32xi1>
    %110 = arith.extui %109 : vector<1x32xi1> to vector<1x32xi32>
    %111 = arith.sitofp %110 : vector<1x32xi32> to vector<1x32xf32>
    %112 = arith.truncf %111 : vector<1x32xf32> to vector<1x32xbf16>
    %113 = vector.broadcast %112 : vector<1x32xbf16> to vector<16x32xbf16>
    %114 = arith.mulf %104, %113 : vector<16x32xbf16>
    %c8_51 = arith.constant 8 : index
    %c0_52 = arith.constant 0 : index
    %c0_53 = arith.constant 0 : index
    %115 = vector.load %arg2[%c8_51, %c0_52, %c0_53] : memref<9x16x16xbf16, #tpu.memory_space<vmem>>, vector<1x16x16xbf16>
    %116 = vector.shape_cast %115 : vector<1x16x16xbf16> to vector<16x16xbf16>
    %cst_54 = arith.constant dense<0.000000e+00> : vector<16x32xf32>
    %117 = tpu.matmul %116, %114, %cst_54 {dimension_numbers = #tpu.dot_dimension_numbers<[1], [0], [0], [1], [0, 0, 1, 1], [], []>} : vector<16x16xbf16>, vector<16x32xbf16>, vector<16x32xf32> -> vector<16x32xf32>
    %118 = arith.addf %103, %117 : vector<16x32xf32>
    %c0_55 = arith.constant 0 : index
    %c0_56 = arith.constant 0 : index
    %119 = vector.load %arg3[%c0_55, %c0_56] : memref<16x128xbf16, #tpu.memory_space<vmem>>, vector<16x32xbf16>
    %c1_i32_57 = arith.constant 1 : i32
    %120 = vector.broadcast %c1_i32_57 : i32 to vector<1x32xi32>
    %121 = arith.cmpi sge, %4, %120 : vector<1x32xi32>
    %c1_i32_58 = arith.constant 1 : i32
    %122 = vector.broadcast %c1_i32_58 : i32 to vector<1x32xi32>
    %123 = arith.cmpi sge, %2, %122 : vector<1x32xi32>
    %124 = arith.andi %121, %123 : vector<1x32xi1>
    %125 = arith.extui %124 : vector<1x32xi1> to vector<1x32xi32>
    %126 = arith.sitofp %125 : vector<1x32xi32> to vector<1x32xf32>
    %127 = arith.truncf %126 : vector<1x32xf32> to vector<1x32xbf16>
    %128 = vector.broadcast %127 : vector<1x32xbf16> to vector<16x32xbf16>
    %129 = arith.mulf %119, %128 : vector<16x32xbf16>
    %c0_59 = arith.constant 0 : index
    %c0_60 = arith.constant 0 : index
    %c0_61 = arith.constant 0 : index
    %130 = vector.load %arg4[%c0_59, %c0_60, %c0_61] : memref<9x16x16xbf16, #tpu.memory_space<vmem>>, vector<1x16x16xbf16>
    %131 = vector.shape_cast %130 : vector<1x16x16xbf16> to vector<16x16xbf16>
    %cst_62 = arith.constant dense<0.000000e+00> : vector<16x32xf32>
    %132 = tpu.matmul %131, %129, %cst_62 {dimension_numbers = #tpu.dot_dimension_numbers<[1], [0], [0], [1], [0, 0, 1, 1], [], []>} : vector<16x16xbf16>, vector<16x32xbf16>, vector<16x32xf32> -> vector<16x32xf32>
    %133 = arith.addf %118, %132 : vector<16x32xf32>
    %c0_63 = arith.constant 0 : index
    %c1_64 = arith.constant 1 : index
    %134 = vector.load %arg3[%c0_63, %c1_64] : memref<16x128xbf16, #tpu.memory_space<vmem>>, vector<16x32xbf16>
    %c1_i32_65 = arith.constant 1 : i32
    %135 = vector.broadcast %c1_i32_65 : i32 to vector<1x32xi32>
    %136 = arith.cmpi sge, %4, %135 : vector<1x32xi32>
    %137 = arith.extui %136 : vector<1x32xi1> to vector<1x32xi32>
    %138 = arith.sitofp %137 : vector<1x32xi32> to vector<1x32xf32>
    %139 = arith.truncf %138 : vector<1x32xf32> to vector<1x32xbf16>
    %140 = vector.broadcast %139 : vector<1x32xbf16> to vector<16x32xbf16>
    %141 = arith.mulf %134, %140 : vector<16x32xbf16>
    %c1_66 = arith.constant 1 : index
    %c0_67 = arith.constant 0 : index
    %c0_68 = arith.constant 0 : index
    %142 = vector.load %arg4[%c1_66, %c0_67, %c0_68] : memref<9x16x16xbf16, #tpu.memory_space<vmem>>, vector<1x16x16xbf16>
    %143 = vector.shape_cast %142 : vector<1x16x16xbf16> to vector<16x16xbf16>
    %cst_69 = arith.constant dense<0.000000e+00> : vector<16x32xf32>
    %144 = tpu.matmul %143, %141, %cst_69 {dimension_numbers = #tpu.dot_dimension_numbers<[1], [0], [0], [1], [0, 0, 1, 1], [], []>} : vector<16x16xbf16>, vector<16x32xbf16>, vector<16x32xf32> -> vector<16x32xf32>
    %145 = arith.addf %133, %144 : vector<16x32xf32>
    %c0_70 = arith.constant 0 : index
    %c2_71 = arith.constant 2 : index
    %146 = vector.load %arg3[%c0_70, %c2_71] : memref<16x128xbf16, #tpu.memory_space<vmem>>, vector<16x32xbf16>
    %c1_i32_72 = arith.constant 1 : i32
    %147 = vector.broadcast %c1_i32_72 : i32 to vector<1x32xi32>
    %148 = arith.cmpi sge, %4, %147 : vector<1x32xi32>
    %c3_i32_73 = arith.constant 3 : i32
    %149 = vector.broadcast %c3_i32_73 : i32 to vector<1x32xi32>
    %150 = arith.cmpi slt, %2, %149 : vector<1x32xi32>
    %151 = arith.andi %148, %150 : vector<1x32xi1>
    %152 = arith.extui %151 : vector<1x32xi1> to vector<1x32xi32>
    %153 = arith.sitofp %152 : vector<1x32xi32> to vector<1x32xf32>
    %154 = arith.truncf %153 : vector<1x32xf32> to vector<1x32xbf16>
    %155 = vector.broadcast %154 : vector<1x32xbf16> to vector<16x32xbf16>
    %156 = arith.mulf %146, %155 : vector<16x32xbf16>
    %c2_74 = arith.constant 2 : index
    %c0_75 = arith.constant 0 : index
    %c0_76 = arith.constant 0 : index
    %157 = vector.load %arg4[%c2_74, %c0_75, %c0_76] : memref<9x16x16xbf16, #tpu.memory_space<vmem>>, vector<1x16x16xbf16>
    %158 = vector.shape_cast %157 : vector<1x16x16xbf16> to vector<16x16xbf16>
    %cst_77 = arith.constant dense<0.000000e+00> : vector<16x32xf32>
    %159 = tpu.matmul %158, %156, %cst_77 {dimension_numbers = #tpu.dot_dimension_numbers<[1], [0], [0], [1], [0, 0, 1, 1], [], []>} : vector<16x16xbf16>, vector<16x32xbf16>, vector<16x32xf32> -> vector<16x32xf32>
    %160 = arith.addf %145, %159 : vector<16x32xf32>
    %c0_78 = arith.constant 0 : index
    %c4_79 = arith.constant 4 : index
    %161 = vector.load %arg3[%c0_78, %c4_79] : memref<16x128xbf16, #tpu.memory_space<vmem>>, vector<16x32xbf16>
    %c1_i32_80 = arith.constant 1 : i32
    %162 = vector.broadcast %c1_i32_80 : i32 to vector<1x32xi32>
    %163 = arith.cmpi sge, %2, %162 : vector<1x32xi32>
    %164 = arith.extui %163 : vector<1x32xi1> to vector<1x32xi32>
    %165 = arith.sitofp %164 : vector<1x32xi32> to vector<1x32xf32>
    %166 = arith.truncf %165 : vector<1x32xf32> to vector<1x32xbf16>
    %167 = vector.broadcast %166 : vector<1x32xbf16> to vector<16x32xbf16>
    %168 = arith.mulf %161, %167 : vector<16x32xbf16>
    %c3_81 = arith.constant 3 : index
    %c0_82 = arith.constant 0 : index
    %c0_83 = arith.constant 0 : index
    %169 = vector.load %arg4[%c3_81, %c0_82, %c0_83] : memref<9x16x16xbf16, #tpu.memory_space<vmem>>, vector<1x16x16xbf16>
    %170 = vector.shape_cast %169 : vector<1x16x16xbf16> to vector<16x16xbf16>
    %cst_84 = arith.constant dense<0.000000e+00> : vector<16x32xf32>
    %171 = tpu.matmul %170, %168, %cst_84 {dimension_numbers = #tpu.dot_dimension_numbers<[1], [0], [0], [1], [0, 0, 1, 1], [], []>} : vector<16x16xbf16>, vector<16x32xbf16>, vector<16x32xf32> -> vector<16x32xf32>
    %172 = arith.addf %160, %171 : vector<16x32xf32>
    %c0_85 = arith.constant 0 : index
    %c5_86 = arith.constant 5 : index
    %173 = vector.load %arg3[%c0_85, %c5_86] : memref<16x128xbf16, #tpu.memory_space<vmem>>, vector<16x32xbf16>
    %c4_87 = arith.constant 4 : index
    %c0_88 = arith.constant 0 : index
    %c0_89 = arith.constant 0 : index
    %174 = vector.load %arg4[%c4_87, %c0_88, %c0_89] : memref<9x16x16xbf16, #tpu.memory_space<vmem>>, vector<1x16x16xbf16>
    %175 = vector.shape_cast %174 : vector<1x16x16xbf16> to vector<16x16xbf16>
    %cst_90 = arith.constant dense<0.000000e+00> : vector<16x32xf32>
    %176 = tpu.matmul %175, %173, %cst_90 {dimension_numbers = #tpu.dot_dimension_numbers<[1], [0], [0], [1], [0, 0, 1, 1], [], []>} : vector<16x16xbf16>, vector<16x32xbf16>, vector<16x32xf32> -> vector<16x32xf32>
    %177 = arith.addf %172, %176 : vector<16x32xf32>
    %c0_91 = arith.constant 0 : index
    %c6_92 = arith.constant 6 : index
    %178 = vector.load %arg3[%c0_91, %c6_92] : memref<16x128xbf16, #tpu.memory_space<vmem>>, vector<16x32xbf16>
    %c3_i32_93 = arith.constant 3 : i32
    %179 = vector.broadcast %c3_i32_93 : i32 to vector<1x32xi32>
    %180 = arith.cmpi slt, %2, %179 : vector<1x32xi32>
    %181 = arith.extui %180 : vector<1x32xi1> to vector<1x32xi32>
    %182 = arith.sitofp %181 : vector<1x32xi32> to vector<1x32xf32>
    %183 = arith.truncf %182 : vector<1x32xf32> to vector<1x32xbf16>
    %184 = vector.broadcast %183 : vector<1x32xbf16> to vector<16x32xbf16>
    %185 = arith.mulf %178, %184 : vector<16x32xbf16>
    %c5_94 = arith.constant 5 : index
    %c0_95 = arith.constant 0 : index
    %c0_96 = arith.constant 0 : index
    %186 = vector.load %arg4[%c5_94, %c0_95, %c0_96] : memref<9x16x16xbf16, #tpu.memory_space<vmem>>, vector<1x16x16xbf16>
    %187 = vector.shape_cast %186 : vector<1x16x16xbf16> to vector<16x16xbf16>
    %cst_97 = arith.constant dense<0.000000e+00> : vector<16x32xf32>
    %188 = tpu.matmul %187, %185, %cst_97 {dimension_numbers = #tpu.dot_dimension_numbers<[1], [0], [0], [1], [0, 0, 1, 1], [], []>} : vector<16x16xbf16>, vector<16x32xbf16>, vector<16x32xf32> -> vector<16x32xf32>
    %189 = arith.addf %177, %188 : vector<16x32xf32>
    %c0_98 = arith.constant 0 : index
    %c8_99 = arith.constant 8 : index
    %190 = vector.load %arg3[%c0_98, %c8_99] : memref<16x128xbf16, #tpu.memory_space<vmem>>, vector<16x32xbf16>
    %c3_i32_100 = arith.constant 3 : i32
    %191 = vector.broadcast %c3_i32_100 : i32 to vector<1x32xi32>
    %192 = arith.cmpi slt, %4, %191 : vector<1x32xi32>
    %c1_i32_101 = arith.constant 1 : i32
    %193 = vector.broadcast %c1_i32_101 : i32 to vector<1x32xi32>
    %194 = arith.cmpi sge, %2, %193 : vector<1x32xi32>
    %195 = arith.andi %192, %194 : vector<1x32xi1>
    %196 = arith.extui %195 : vector<1x32xi1> to vector<1x32xi32>
    %197 = arith.sitofp %196 : vector<1x32xi32> to vector<1x32xf32>
    %198 = arith.truncf %197 : vector<1x32xf32> to vector<1x32xbf16>
    %199 = vector.broadcast %198 : vector<1x32xbf16> to vector<16x32xbf16>
    %200 = arith.mulf %190, %199 : vector<16x32xbf16>
    %c6_102 = arith.constant 6 : index
    %c0_103 = arith.constant 0 : index
    %c0_104 = arith.constant 0 : index
    %201 = vector.load %arg4[%c6_102, %c0_103, %c0_104] : memref<9x16x16xbf16, #tpu.memory_space<vmem>>, vector<1x16x16xbf16>
    %202 = vector.shape_cast %201 : vector<1x16x16xbf16> to vector<16x16xbf16>
    %cst_105 = arith.constant dense<0.000000e+00> : vector<16x32xf32>
    %203 = tpu.matmul %202, %200, %cst_105 {dimension_numbers = #tpu.dot_dimension_numbers<[1], [0], [0], [1], [0, 0, 1, 1], [], []>} : vector<16x16xbf16>, vector<16x32xbf16>, vector<16x32xf32> -> vector<16x32xf32>
    %204 = arith.addf %189, %203 : vector<16x32xf32>
    %c0_106 = arith.constant 0 : index
    %c9_107 = arith.constant 9 : index
    %205 = vector.load %arg3[%c0_106, %c9_107] : memref<16x128xbf16, #tpu.memory_space<vmem>>, vector<16x32xbf16>
    %c3_i32_108 = arith.constant 3 : i32
    %206 = vector.broadcast %c3_i32_108 : i32 to vector<1x32xi32>
    %207 = arith.cmpi slt, %4, %206 : vector<1x32xi32>
    %208 = arith.extui %207 : vector<1x32xi1> to vector<1x32xi32>
    %209 = arith.sitofp %208 : vector<1x32xi32> to vector<1x32xf32>
    %210 = arith.truncf %209 : vector<1x32xf32> to vector<1x32xbf16>
    %211 = vector.broadcast %210 : vector<1x32xbf16> to vector<16x32xbf16>
    %212 = arith.mulf %205, %211 : vector<16x32xbf16>
    %c7_109 = arith.constant 7 : index
    %c0_110 = arith.constant 0 : index
    %c0_111 = arith.constant 0 : index
    %213 = vector.load %arg4[%c7_109, %c0_110, %c0_111] : memref<9x16x16xbf16, #tpu.memory_space<vmem>>, vector<1x16x16xbf16>
    %214 = vector.shape_cast %213 : vector<1x16x16xbf16> to vector<16x16xbf16>
    %cst_112 = arith.constant dense<0.000000e+00> : vector<16x32xf32>
    %215 = tpu.matmul %214, %212, %cst_112 {dimension_numbers = #tpu.dot_dimension_numbers<[1], [0], [0], [1], [0, 0, 1, 1], [], []>} : vector<16x16xbf16>, vector<16x32xbf16>, vector<16x32xf32> -> vector<16x32xf32>
    %216 = arith.addf %204, %215 : vector<16x32xf32>
    %c0_113 = arith.constant 0 : index
    %c10_114 = arith.constant 10 : index
    %217 = vector.load %arg3[%c0_113, %c10_114] : memref<16x128xbf16, #tpu.memory_space<vmem>>, vector<16x32xbf16>
    %c3_i32_115 = arith.constant 3 : i32
    %218 = vector.broadcast %c3_i32_115 : i32 to vector<1x32xi32>
    %219 = arith.cmpi slt, %4, %218 : vector<1x32xi32>
    %c3_i32_116 = arith.constant 3 : i32
    %220 = vector.broadcast %c3_i32_116 : i32 to vector<1x32xi32>
    %221 = arith.cmpi slt, %2, %220 : vector<1x32xi32>
    %222 = arith.andi %219, %221 : vector<1x32xi1>
    %223 = arith.extui %222 : vector<1x32xi1> to vector<1x32xi32>
    %224 = arith.sitofp %223 : vector<1x32xi32> to vector<1x32xf32>
    %225 = arith.truncf %224 : vector<1x32xf32> to vector<1x32xbf16>
    %226 = vector.broadcast %225 : vector<1x32xbf16> to vector<16x32xbf16>
    %227 = arith.mulf %217, %226 : vector<16x32xbf16>
    %c8_117 = arith.constant 8 : index
    %c0_118 = arith.constant 0 : index
    %c0_119 = arith.constant 0 : index
    %228 = vector.load %arg4[%c8_117, %c0_118, %c0_119] : memref<9x16x16xbf16, #tpu.memory_space<vmem>>, vector<1x16x16xbf16>
    %229 = vector.shape_cast %228 : vector<1x16x16xbf16> to vector<16x16xbf16>
    %cst_120 = arith.constant dense<0.000000e+00> : vector<16x32xf32>
    %230 = tpu.matmul %229, %227, %cst_120 {dimension_numbers = #tpu.dot_dimension_numbers<[1], [0], [0], [1], [0, 0, 1, 1], [], []>} : vector<16x16xbf16>, vector<16x32xbf16>, vector<16x32xf32> -> vector<16x32xf32>
    %231 = arith.addf %216, %230 : vector<16x32xf32>
    %c0_121 = arith.constant 0 : index
    %c0_122 = arith.constant 0 : index
    %232 = vector.load %arg6[%c0_121, %c0_122] : memref<16x1xf32, #tpu.memory_space<vmem>>, vector<16x1xf32>
    %233 = vector.broadcast %232 : vector<16x1xf32> to vector<16x32xf32>
    %234 = arith.addf %231, %233 : vector<16x32xf32>
    %cst_123 = arith.constant 0.000000e+00 : f32
    %235 = vector.broadcast %cst_123 : f32 to vector<16x32xf32>
    %236 = arith.cmpf ogt, %234, %235 : vector<16x32xf32>
    %cst_124 = arith.constant 1.000000e-01 : f32
    %237 = vector.broadcast %cst_124 : f32 to vector<16x32xf32>
    %238 = arith.mulf %237, %234 : vector<16x32xf32>
    %239 = arith.select %236, %234, %238 : vector<16x32xi1>, vector<16x32xf32>
    %240 = arith.truncf %239 : vector<16x32xf32> to vector<16x32xbf16>
    %c0_125 = arith.constant 0 : index
    %c0_126 = arith.constant 0 : index
    %241 = vector.load %arg7[%c0_125, %c0_126] : memref<16x32xbf16, #tpu.memory_space<vmem>>, vector<16x32xbf16>
    tpu.vector_store %arg7[%c0_125, %c0_126], %240 {strides = array<i32>} : memref<16x32xbf16, #tpu.memory_space<vmem>>, vector<16x32xbf16>,
    return
  }
  func.func @transform_0(%arg0: i32) -> (i32, i32) {
    %c0_i32 = arith.constant 0 : i32
    %c0_i32_0 = arith.constant 0 : i32
    %c0_i32_1 = arith.constant 0 : i32
    return %c0_i32, %c0_i32_0 : i32, i32
  }
  func.func @transform_1(%arg0: i32) -> (i32, i32, i32) {
    %c0_i32 = arith.constant 0 : i32
    %c0_i32_0 = arith.constant 0 : i32
    %c0_i32_1 = arith.constant 0 : i32
    %c0_i32_2 = arith.constant 0 : i32
    return %c0_i32, %c0_i32_0, %c0_i32_1 : i32, i32, i32
  }
  func.func @transform_2(%arg0: i32) -> (i32, i32) {
    %c0_i32 = arith.constant 0 : i32
    %c0_i32_0 = arith.constant 0 : i32
    %c0_i32_1 = arith.constant 0 : i32
    return %c0_i32, %c0_i32_0 : i32, i32
  }
  func.func @transform_3(%arg0: i32) -> (i32, i32, i32) {
    %c0_i32 = arith.constant 0 : i32
    %c0_i32_0 = arith.constant 0 : i32
    %c0_i32_1 = arith.constant 0 : i32
    %c0_i32_2 = arith.constant 0 : i32
    return %c0_i32, %c0_i32_0, %c0_i32_1 : i32, i32, i32
  }
  func.func @transform_4(%arg0: i32) -> (i32, i32) {
    %c0_i32 = arith.constant 0 : i32
    %c0_i32_0 = arith.constant 0 : i32
    return %c0_i32, %arg0 : i32, i32
  }
  func.func @transform_5(%arg0: i32) -> (i32, i32) {
    %c0_i32 = arith.constant 0 : i32
    %c0_i32_0 = arith.constant 0 : i32
    %c0_i32_1 = arith.constant 0 : i32
    return %c0_i32, %c0_i32_0 : i32, i32
  }
  func.func @transform_6(%arg0: i32) -> (i32, i32) {
    %c0_i32 = arith.constant 0 : i32
    %c0_i32_0 = arith.constant 0 : i32
    return %c0_i32, %arg0 : i32, i32
  }
}

module attributes {stable_mosaic.version = 11 : i64} {
  func.func @kernel(%arg0: i32, %arg1: memref<16x128xbf16, #tpu.memory_space<vmem>>, %arg2: memref<9x32x16xbf16, #tpu.memory_space<vmem>>, %arg3: memref<1x8xi32, #tpu.memory_space<vmem>>, %arg4: memref<32x1xf32, #tpu.memory_space<vmem>>, %arg5: memref<32x8xbf16, #tpu.memory_space<vmem>>) attributes {dimension_semantics = [#tpu.dimension_semantics<parallel>], iteration_bounds = array<i64: 1>, scalar_prefetch = 0 : i64, scratch_operands = 0 : i64, tpu.core_type = #tpu.core_type<tc>, window_params = [{pipeline_mode = #tpu.pipeline_mode<synchronous>, transform_indices = @transform_0, window_bounds = array<i64: 16, 128>}, {pipeline_mode = #tpu.pipeline_mode<synchronous>, transform_indices = @transform_1, window_bounds = array<i64: 9, 32, 16>}, {transform_indices = @transform_2, window_bounds = array<i64: 1, 8>}, {pipeline_mode = #tpu.pipeline_mode<synchronous>, transform_indices = @transform_3, window_bounds = array<i64: 32, 1>}, {transform_indices = @transform_4, window_bounds = array<i64: 32, 8>}]} {
    %c0 = arith.constant 0 : index
    %c0_0 = arith.constant 0 : index
    %0 = vector.load %arg3[%c0, %c0_0] : memref<1x8xi32, #tpu.memory_space<vmem>>, vector<1x8xi32>
    %c65535_i32 = arith.constant 65535 : i32
    %1 = vector.broadcast %c65535_i32 : i32 to vector<1x8xi32>
    %2 = arith.andi %0, %1 : vector<1x8xi32>
    %c16_i32 = arith.constant 16 : i32
    %3 = vector.broadcast %c16_i32 : i32 to vector<1x8xi32>
    %4 = arith.shrsi %0, %3 : vector<1x8xi32>
    %cst = arith.constant 0.000000e+00 : f32
    %5 = vector.broadcast %cst : f32 to vector<32x8xf32>
    %c0_1 = arith.constant 0 : index
    %c0_2 = arith.constant 0 : index
    %6 = vector.load %arg1[%c0_1, %c0_2] : memref<16x128xbf16, #tpu.memory_space<vmem>>, vector<16x8xbf16>
    %c1_i32 = arith.constant 1 : i32
    %7 = vector.broadcast %c1_i32 : i32 to vector<1x8xi32>
    %8 = arith.cmpi sge, %4, %7 : vector<1x8xi32>
    %c1_i32_3 = arith.constant 1 : i32
    %9 = vector.broadcast %c1_i32_3 : i32 to vector<1x8xi32>
    %10 = arith.cmpi sge, %2, %9 : vector<1x8xi32>
    %11 = arith.andi %8, %10 : vector<1x8xi1>
    %12 = arith.extui %11 : vector<1x8xi1> to vector<1x8xi32>
    %13 = arith.sitofp %12 : vector<1x8xi32> to vector<1x8xf32>
    %14 = arith.truncf %13 : vector<1x8xf32> to vector<1x8xbf16>
    %15 = vector.broadcast %14 : vector<1x8xbf16> to vector<16x8xbf16>
    %16 = arith.mulf %6, %15 : vector<16x8xbf16>
    %c0_4 = arith.constant 0 : index
    %c0_5 = arith.constant 0 : index
    %c0_6 = arith.constant 0 : index
    %17 = vector.load %arg2[%c0_4, %c0_5, %c0_6] : memref<9x32x16xbf16, #tpu.memory_space<vmem>>, vector<1x32x16xbf16>
    %18 = vector.shape_cast %17 : vector<1x32x16xbf16> to vector<32x16xbf16>
    %cst_7 = arith.constant dense<0.000000e+00> : vector<32x8xf32>
    %19 = tpu.matmul %18, %16, %cst_7 {dimension_numbers = #tpu.dot_dimension_numbers<[1], [0], [0], [1], [0, 0, 1, 1], [], []>} : vector<32x16xbf16>, vector<16x8xbf16>, vector<32x8xf32> -> vector<32x8xf32>
    %20 = arith.addf %5, %19 : vector<32x8xf32>
    %c0_8 = arith.constant 0 : index
    %c1 = arith.constant 1 : index
    %21 = vector.load %arg1[%c0_8, %c1] : memref<16x128xbf16, #tpu.memory_space<vmem>>, vector<16x8xbf16>
    %c1_i32_9 = arith.constant 1 : i32
    %22 = vector.broadcast %c1_i32_9 : i32 to vector<1x8xi32>
    %23 = arith.cmpi sge, %4, %22 : vector<1x8xi32>
    %24 = arith.extui %23 : vector<1x8xi1> to vector<1x8xi32>
    %25 = arith.sitofp %24 : vector<1x8xi32> to vector<1x8xf32>
    %26 = arith.truncf %25 : vector<1x8xf32> to vector<1x8xbf16>
    %27 = vector.broadcast %26 : vector<1x8xbf16> to vector<16x8xbf16>
    %28 = arith.mulf %21, %27 : vector<16x8xbf16>
    %c1_10 = arith.constant 1 : index
    %c0_11 = arith.constant 0 : index
    %c0_12 = arith.constant 0 : index
    %29 = vector.load %arg2[%c1_10, %c0_11, %c0_12] : memref<9x32x16xbf16, #tpu.memory_space<vmem>>, vector<1x32x16xbf16>
    %30 = vector.shape_cast %29 : vector<1x32x16xbf16> to vector<32x16xbf16>
    %cst_13 = arith.constant dense<0.000000e+00> : vector<32x8xf32>
    %31 = tpu.matmul %30, %28, %cst_13 {dimension_numbers = #tpu.dot_dimension_numbers<[1], [0], [0], [1], [0, 0, 1, 1], [], []>} : vector<32x16xbf16>, vector<16x8xbf16>, vector<32x8xf32> -> vector<32x8xf32>
    %32 = arith.addf %20, %31 : vector<32x8xf32>
    %c0_14 = arith.constant 0 : index
    %c2 = arith.constant 2 : index
    %33 = vector.load %arg1[%c0_14, %c2] : memref<16x128xbf16, #tpu.memory_space<vmem>>, vector<16x8xbf16>
    %c1_i32_15 = arith.constant 1 : i32
    %34 = vector.broadcast %c1_i32_15 : i32 to vector<1x8xi32>
    %35 = arith.cmpi sge, %4, %34 : vector<1x8xi32>
    %c1_i32_16 = arith.constant 1 : i32
    %36 = vector.broadcast %c1_i32_16 : i32 to vector<1x8xi32>
    %37 = arith.cmpi slt, %2, %36 : vector<1x8xi32>
    %38 = arith.andi %35, %37 : vector<1x8xi1>
    %39 = arith.extui %38 : vector<1x8xi1> to vector<1x8xi32>
    %40 = arith.sitofp %39 : vector<1x8xi32> to vector<1x8xf32>
    %41 = arith.truncf %40 : vector<1x8xf32> to vector<1x8xbf16>
    %42 = vector.broadcast %41 : vector<1x8xbf16> to vector<16x8xbf16>
    %43 = arith.mulf %33, %42 : vector<16x8xbf16>
    %c2_17 = arith.constant 2 : index
    %c0_18 = arith.constant 0 : index
    %c0_19 = arith.constant 0 : index
    %44 = vector.load %arg2[%c2_17, %c0_18, %c0_19] : memref<9x32x16xbf16, #tpu.memory_space<vmem>>, vector<1x32x16xbf16>
    %45 = vector.shape_cast %44 : vector<1x32x16xbf16> to vector<32x16xbf16>
    %cst_20 = arith.constant dense<0.000000e+00> : vector<32x8xf32>
    %46 = tpu.matmul %45, %43, %cst_20 {dimension_numbers = #tpu.dot_dimension_numbers<[1], [0], [0], [1], [0, 0, 1, 1], [], []>} : vector<32x16xbf16>, vector<16x8xbf16>, vector<32x8xf32> -> vector<32x8xf32>
    %47 = arith.addf %32, %46 : vector<32x8xf32>
    %c0_21 = arith.constant 0 : index
    %c2_22 = arith.constant 2 : index
    %48 = vector.load %arg1[%c0_21, %c2_22] : memref<16x128xbf16, #tpu.memory_space<vmem>>, vector<16x8xbf16>
    %c1_i32_23 = arith.constant 1 : i32
    %49 = vector.broadcast %c1_i32_23 : i32 to vector<1x8xi32>
    %50 = arith.cmpi sge, %2, %49 : vector<1x8xi32>
    %51 = arith.extui %50 : vector<1x8xi1> to vector<1x8xi32>
    %52 = arith.sitofp %51 : vector<1x8xi32> to vector<1x8xf32>
    %53 = arith.truncf %52 : vector<1x8xf32> to vector<1x8xbf16>
    %54 = vector.broadcast %53 : vector<1x8xbf16> to vector<16x8xbf16>
    %55 = arith.mulf %48, %54 : vector<16x8xbf16>
    %c3 = arith.constant 3 : index
    %c0_24 = arith.constant 0 : index
    %c0_25 = arith.constant 0 : index
    %56 = vector.load %arg2[%c3, %c0_24, %c0_25] : memref<9x32x16xbf16, #tpu.memory_space<vmem>>, vector<1x32x16xbf16>
    %57 = vector.shape_cast %56 : vector<1x32x16xbf16> to vector<32x16xbf16>
    %cst_26 = arith.constant dense<0.000000e+00> : vector<32x8xf32>
    %58 = tpu.matmul %57, %55, %cst_26 {dimension_numbers = #tpu.dot_dimension_numbers<[1], [0], [0], [1], [0, 0, 1, 1], [], []>} : vector<32x16xbf16>, vector<16x8xbf16>, vector<32x8xf32> -> vector<32x8xf32>
    %59 = arith.addf %47, %58 : vector<32x8xf32>
    %c0_27 = arith.constant 0 : index
    %c3_28 = arith.constant 3 : index
    %60 = vector.load %arg1[%c0_27, %c3_28] : memref<16x128xbf16, #tpu.memory_space<vmem>>, vector<16x8xbf16>
    %c4 = arith.constant 4 : index
    %c0_29 = arith.constant 0 : index
    %c0_30 = arith.constant 0 : index
    %61 = vector.load %arg2[%c4, %c0_29, %c0_30] : memref<9x32x16xbf16, #tpu.memory_space<vmem>>, vector<1x32x16xbf16>
    %62 = vector.shape_cast %61 : vector<1x32x16xbf16> to vector<32x16xbf16>
    %cst_31 = arith.constant dense<0.000000e+00> : vector<32x8xf32>
    %63 = tpu.matmul %62, %60, %cst_31 {dimension_numbers = #tpu.dot_dimension_numbers<[1], [0], [0], [1], [0, 0, 1, 1], [], []>} : vector<32x16xbf16>, vector<16x8xbf16>, vector<32x8xf32> -> vector<32x8xf32>
    %64 = arith.addf %59, %63 : vector<32x8xf32>
    %c0_32 = arith.constant 0 : index
    %c4_33 = arith.constant 4 : index
    %65 = vector.load %arg1[%c0_32, %c4_33] : memref<16x128xbf16, #tpu.memory_space<vmem>>, vector<16x8xbf16>
    %c1_i32_34 = arith.constant 1 : i32
    %66 = vector.broadcast %c1_i32_34 : i32 to vector<1x8xi32>
    %67 = arith.cmpi slt, %2, %66 : vector<1x8xi32>
    %68 = arith.extui %67 : vector<1x8xi1> to vector<1x8xi32>
    %69 = arith.sitofp %68 : vector<1x8xi32> to vector<1x8xf32>
    %70 = arith.truncf %69 : vector<1x8xf32> to vector<1x8xbf16>
    %71 = vector.broadcast %70 : vector<1x8xbf16> to vector<16x8xbf16>
    %72 = arith.mulf %65, %71 : vector<16x8xbf16>
    %c5 = arith.constant 5 : index
    %c0_35 = arith.constant 0 : index
    %c0_36 = arith.constant 0 : index
    %73 = vector.load %arg2[%c5, %c0_35, %c0_36] : memref<9x32x16xbf16, #tpu.memory_space<vmem>>, vector<1x32x16xbf16>
    %74 = vector.shape_cast %73 : vector<1x32x16xbf16> to vector<32x16xbf16>
    %cst_37 = arith.constant dense<0.000000e+00> : vector<32x8xf32>
    %75 = tpu.matmul %74, %72, %cst_37 {dimension_numbers = #tpu.dot_dimension_numbers<[1], [0], [0], [1], [0, 0, 1, 1], [], []>} : vector<32x16xbf16>, vector<16x8xbf16>, vector<32x8xf32> -> vector<32x8xf32>
    %76 = arith.addf %64, %75 : vector<32x8xf32>
    %c0_38 = arith.constant 0 : index
    %c4_39 = arith.constant 4 : index
    %77 = vector.load %arg1[%c0_38, %c4_39] : memref<16x128xbf16, #tpu.memory_space<vmem>>, vector<16x8xbf16>
    %c1_i32_40 = arith.constant 1 : i32
    %78 = vector.broadcast %c1_i32_40 : i32 to vector<1x8xi32>
    %79 = arith.cmpi slt, %4, %78 : vector<1x8xi32>
    %c1_i32_41 = arith.constant 1 : i32
    %80 = vector.broadcast %c1_i32_41 : i32 to vector<1x8xi32>
    %81 = arith.cmpi sge, %2, %80 : vector<1x8xi32>
    %82 = arith.andi %79, %81 : vector<1x8xi1>
    %83 = arith.extui %82 : vector<1x8xi1> to vector<1x8xi32>
    %84 = arith.sitofp %83 : vector<1x8xi32> to vector<1x8xf32>
    %85 = arith.truncf %84 : vector<1x8xf32> to vector<1x8xbf16>
    %86 = vector.broadcast %85 : vector<1x8xbf16> to vector<16x8xbf16>
    %87 = arith.mulf %77, %86 : vector<16x8xbf16>
    %c6 = arith.constant 6 : index
    %c0_42 = arith.constant 0 : index
    %c0_43 = arith.constant 0 : index
    %88 = vector.load %arg2[%c6, %c0_42, %c0_43] : memref<9x32x16xbf16, #tpu.memory_space<vmem>>, vector<1x32x16xbf16>
    %89 = vector.shape_cast %88 : vector<1x32x16xbf16> to vector<32x16xbf16>
    %cst_44 = arith.constant dense<0.000000e+00> : vector<32x8xf32>
    %90 = tpu.matmul %89, %87, %cst_44 {dimension_numbers = #tpu.dot_dimension_numbers<[1], [0], [0], [1], [0, 0, 1, 1], [], []>} : vector<32x16xbf16>, vector<16x8xbf16>, vector<32x8xf32> -> vector<32x8xf32>
    %91 = arith.addf %76, %90 : vector<32x8xf32>
    %c0_45 = arith.constant 0 : index
    %c5_46 = arith.constant 5 : index
    %92 = vector.load %arg1[%c0_45, %c5_46] : memref<16x128xbf16, #tpu.memory_space<vmem>>, vector<16x8xbf16>
    %c1_i32_47 = arith.constant 1 : i32
    %93 = vector.broadcast %c1_i32_47 : i32 to vector<1x8xi32>
    %94 = arith.cmpi slt, %4, %93 : vector<1x8xi32>
    %95 = arith.extui %94 : vector<1x8xi1> to vector<1x8xi32>
    %96 = arith.sitofp %95 : vector<1x8xi32> to vector<1x8xf32>
    %97 = arith.truncf %96 : vector<1x8xf32> to vector<1x8xbf16>
    %98 = vector.broadcast %97 : vector<1x8xbf16> to vector<16x8xbf16>
    %99 = arith.mulf %92, %98 : vector<16x8xbf16>
    %c7 = arith.constant 7 : index
    %c0_48 = arith.constant 0 : index
    %c0_49 = arith.constant 0 : index
    %100 = vector.load %arg2[%c7, %c0_48, %c0_49] : memref<9x32x16xbf16, #tpu.memory_space<vmem>>, vector<1x32x16xbf16>
    %101 = vector.shape_cast %100 : vector<1x32x16xbf16> to vector<32x16xbf16>
    %cst_50 = arith.constant dense<0.000000e+00> : vector<32x8xf32>
    %102 = tpu.matmul %101, %99, %cst_50 {dimension_numbers = #tpu.dot_dimension_numbers<[1], [0], [0], [1], [0, 0, 1, 1], [], []>} : vector<32x16xbf16>, vector<16x8xbf16>, vector<32x8xf32> -> vector<32x8xf32>
    %103 = arith.addf %91, %102 : vector<32x8xf32>
    %c0_51 = arith.constant 0 : index
    %c6_52 = arith.constant 6 : index
    %104 = vector.load %arg1[%c0_51, %c6_52] : memref<16x128xbf16, #tpu.memory_space<vmem>>, vector<16x8xbf16>
    %c1_i32_53 = arith.constant 1 : i32
    %105 = vector.broadcast %c1_i32_53 : i32 to vector<1x8xi32>
    %106 = arith.cmpi slt, %4, %105 : vector<1x8xi32>
    %c1_i32_54 = arith.constant 1 : i32
    %107 = vector.broadcast %c1_i32_54 : i32 to vector<1x8xi32>
    %108 = arith.cmpi slt, %2, %107 : vector<1x8xi32>
    %109 = arith.andi %106, %108 : vector<1x8xi1>
    %110 = arith.extui %109 : vector<1x8xi1> to vector<1x8xi32>
    %111 = arith.sitofp %110 : vector<1x8xi32> to vector<1x8xf32>
    %112 = arith.truncf %111 : vector<1x8xf32> to vector<1x8xbf16>
    %113 = vector.broadcast %112 : vector<1x8xbf16> to vector<16x8xbf16>
    %114 = arith.mulf %104, %113 : vector<16x8xbf16>
    %c8 = arith.constant 8 : index
    %c0_55 = arith.constant 0 : index
    %c0_56 = arith.constant 0 : index
    %115 = vector.load %arg2[%c8, %c0_55, %c0_56] : memref<9x32x16xbf16, #tpu.memory_space<vmem>>, vector<1x32x16xbf16>
    %116 = vector.shape_cast %115 : vector<1x32x16xbf16> to vector<32x16xbf16>
    %cst_57 = arith.constant dense<0.000000e+00> : vector<32x8xf32>
    %117 = tpu.matmul %116, %114, %cst_57 {dimension_numbers = #tpu.dot_dimension_numbers<[1], [0], [0], [1], [0, 0, 1, 1], [], []>} : vector<32x16xbf16>, vector<16x8xbf16>, vector<32x8xf32> -> vector<32x8xf32>
    %118 = arith.addf %103, %117 : vector<32x8xf32>
    %c0_58 = arith.constant 0 : index
    %c0_59 = arith.constant 0 : index
    %119 = vector.load %arg4[%c0_58, %c0_59] : memref<32x1xf32, #tpu.memory_space<vmem>>, vector<32x1xf32>
    %120 = vector.broadcast %119 : vector<32x1xf32> to vector<32x8xf32>
    %121 = arith.addf %118, %120 : vector<32x8xf32>
    %cst_60 = arith.constant 0.000000e+00 : f32
    %122 = vector.broadcast %cst_60 : f32 to vector<32x8xf32>
    %123 = arith.cmpf ogt, %121, %122 : vector<32x8xf32>
    %cst_61 = arith.constant 1.000000e-01 : f32
    %124 = vector.broadcast %cst_61 : f32 to vector<32x8xf32>
    %125 = arith.mulf %124, %121 : vector<32x8xf32>
    %126 = arith.select %123, %121, %125 : vector<32x8xi1>, vector<32x8xf32>
    %127 = arith.truncf %126 : vector<32x8xf32> to vector<32x8xbf16>
    %c0_62 = arith.constant 0 : index
    %c0_63 = arith.constant 0 : index
    %128 = vector.load %arg5[%c0_62, %c0_63] : memref<32x8xbf16, #tpu.memory_space<vmem>>, vector<32x8xbf16>
    tpu.vector_store %arg5[%c0_62, %c0_63], %127 {strides = array<i32>} : memref<32x8xbf16, #tpu.memory_space<vmem>>, vector<32x8xbf16>,
    return
  }
  func.func @transform_0(%arg0: i32) -> (i32, i32) {
    %c0_i32 = arith.constant 0 : i32
    %c0_i32_0 = arith.constant 0 : i32
    %c0_i32_1 = arith.constant 0 : i32
    return %c0_i32, %c0_i32_0 : i32, i32
  }
  func.func @transform_1(%arg0: i32) -> (i32, i32, i32) {
    %c0_i32 = arith.constant 0 : i32
    %c0_i32_0 = arith.constant 0 : i32
    %c0_i32_1 = arith.constant 0 : i32
    %c0_i32_2 = arith.constant 0 : i32
    return %c0_i32, %c0_i32_0, %c0_i32_1 : i32, i32, i32
  }
  func.func @transform_2(%arg0: i32) -> (i32, i32) {
    %c0_i32 = arith.constant 0 : i32
    %c0_i32_0 = arith.constant 0 : i32
    return %c0_i32, %arg0 : i32, i32
  }
  func.func @transform_3(%arg0: i32) -> (i32, i32) {
    %c0_i32 = arith.constant 0 : i32
    %c0_i32_0 = arith.constant 0 : i32
    %c0_i32_1 = arith.constant 0 : i32
    return %c0_i32, %c0_i32_0 : i32, i32
  }
  func.func @transform_4(%arg0: i32) -> (i32, i32) {
    %c0_i32 = arith.constant 0 : i32
    %c0_i32_0 = arith.constant 0 : i32
    return %c0_i32, %arg0 : i32, i32
  }
}

module attributes {stable_mosaic.version = 11 : i64} {
  func.func @_detect_kernel(%arg0: i32, %arg1: memref<16x32xbf16, #tpu.memory_space<vmem>>, %arg2: memref<18x16xbf16, #tpu.memory_space<vmem>>, %arg3: memref<18x1xf32, #tpu.memory_space<vmem>>, %arg4: memref<32x8xbf16, #tpu.memory_space<vmem>>, %arg5: memref<18x32xbf16, #tpu.memory_space<vmem>>, %arg6: memref<18x1xf32, #tpu.memory_space<vmem>>, %arg7: memref<18x32xf32, #tpu.memory_space<vmem>>, %arg8: memref<18x8xf32, #tpu.memory_space<vmem>>) attributes {dimension_semantics = [#tpu.dimension_semantics<arbitrary>], iteration_bounds = array<i64: 1>, scalar_prefetch = 0 : i64, scratch_operands = 0 : i64, tpu.core_type = #tpu.core_type<tc>, window_params = [{pipeline_mode = #tpu.pipeline_mode<synchronous>, transform_indices = @transform_0, window_bounds = array<i64: 16, 32>}, {pipeline_mode = #tpu.pipeline_mode<synchronous>, transform_indices = @transform_1, window_bounds = array<i64: 18, 16>}, {pipeline_mode = #tpu.pipeline_mode<synchronous>, transform_indices = @transform_2, window_bounds = array<i64: 18, 1>}, {pipeline_mode = #tpu.pipeline_mode<synchronous>, transform_indices = @transform_3, window_bounds = array<i64: 32, 8>}, {pipeline_mode = #tpu.pipeline_mode<synchronous>, transform_indices = @transform_4, window_bounds = array<i64: 18, 32>}, {pipeline_mode = #tpu.pipeline_mode<synchronous>, transform_indices = @transform_5, window_bounds = array<i64: 18, 1>}, {pipeline_mode = #tpu.pipeline_mode<synchronous>, transform_indices = @transform_6, window_bounds = array<i64: 18, 32>}, {pipeline_mode = #tpu.pipeline_mode<synchronous>, transform_indices = @transform_7, window_bounds = array<i64: 18, 8>}]} {
    %c0 = arith.constant 0 : index
    %c0_0 = arith.constant 0 : index
    %0 = vector.load %arg2[%c0, %c0_0] : memref<18x16xbf16, #tpu.memory_space<vmem>>, vector<18x16xbf16>
    %c0_1 = arith.constant 0 : index
    %c0_2 = arith.constant 0 : index
    %1 = vector.load %arg1[%c0_1, %c0_2] : memref<16x32xbf16, #tpu.memory_space<vmem>>, vector<16x32xbf16>
    %cst = arith.constant dense<0.000000e+00> : vector<18x32xf32>
    %2 = tpu.matmul %0, %1, %cst {dimension_numbers = #tpu.dot_dimension_numbers<[1], [0], [0], [1], [0, 0, 1, 1], [], []>} : vector<18x16xbf16>, vector<16x32xbf16>, vector<18x32xf32> -> vector<18x32xf32>
    %c0_3 = arith.constant 0 : index
    %c0_4 = arith.constant 0 : index
    %3 = vector.load %arg3[%c0_3, %c0_4] : memref<18x1xf32, #tpu.memory_space<vmem>>, vector<18x1xf32>
    %4 = vector.broadcast %3 : vector<18x1xf32> to vector<18x32xf32>
    %5 = arith.addf %2, %4 : vector<18x32xf32>
    %c0_5 = arith.constant 0 : index
    %c0_6 = arith.constant 0 : index
    %6 = vector.load %arg7[%c0_5, %c0_6] : memref<18x32xf32, #tpu.memory_space<vmem>>, vector<18x32xf32>
    tpu.vector_store %arg7[%c0_5, %c0_6], %5 {strides = array<i32>} : memref<18x32xf32, #tpu.memory_space<vmem>>, vector<18x32xf32>,
    %c0_7 = arith.constant 0 : index
    %c0_8 = arith.constant 0 : index
    %7 = vector.load %arg5[%c0_7, %c0_8] : memref<18x32xbf16, #tpu.memory_space<vmem>>, vector<18x32xbf16>
    %c0_9 = arith.constant 0 : index
    %c0_10 = arith.constant 0 : index
    %8 = vector.load %arg4[%c0_9, %c0_10] : memref<32x8xbf16, #tpu.memory_space<vmem>>, vector<32x8xbf16>
    %cst_11 = arith.constant dense<0.000000e+00> : vector<18x8xf32>
    %9 = tpu.matmul %7, %8, %cst_11 {dimension_numbers = #tpu.dot_dimension_numbers<[1], [0], [0], [1], [0, 0, 1, 1], [], []>} : vector<18x32xbf16>, vector<32x8xbf16>, vector<18x8xf32> -> vector<18x8xf32>
    %c0_12 = arith.constant 0 : index
    %c0_13 = arith.constant 0 : index
    %10 = vector.load %arg6[%c0_12, %c0_13] : memref<18x1xf32, #tpu.memory_space<vmem>>, vector<18x1xf32>
    %11 = vector.broadcast %10 : vector<18x1xf32> to vector<18x8xf32>
    %12 = arith.addf %9, %11 : vector<18x8xf32>
    %c0_14 = arith.constant 0 : index
    %c0_15 = arith.constant 0 : index
    %13 = vector.load %arg8[%c0_14, %c0_15] : memref<18x8xf32, #tpu.memory_space<vmem>>, vector<18x8xf32>
    tpu.vector_store %arg8[%c0_14, %c0_15], %12 {strides = array<i32>} : memref<18x8xf32, #tpu.memory_space<vmem>>, vector<18x8xf32>,
    return
  }
  func.func @transform_0(%arg0: i32) -> (i32, i32) {
    %c0_i32 = arith.constant 0 : i32
    %c0_i32_0 = arith.constant 0 : i32
    %c0_i32_1 = arith.constant 0 : i32
    return %c0_i32, %c0_i32_0 : i32, i32
  }
  func.func @transform_1(%arg0: i32) -> (i32, i32) {
    %c0_i32 = arith.constant 0 : i32
    %c0_i32_0 = arith.constant 0 : i32
    %c0_i32_1 = arith.constant 0 : i32
    return %c0_i32, %c0_i32_0 : i32, i32
  }
  func.func @transform_2(%arg0: i32) -> (i32, i32) {
    %c0_i32 = arith.constant 0 : i32
    %c0_i32_0 = arith.constant 0 : i32
    %c0_i32_1 = arith.constant 0 : i32
    return %c0_i32, %c0_i32_0 : i32, i32
  }
  func.func @transform_3(%arg0: i32) -> (i32, i32) {
    %c0_i32 = arith.constant 0 : i32
    %c0_i32_0 = arith.constant 0 : i32
    %c0_i32_1 = arith.constant 0 : i32
    return %c0_i32, %c0_i32_0 : i32, i32
  }
  func.func @transform_4(%arg0: i32) -> (i32, i32) {
    %c0_i32 = arith.constant 0 : i32
    %c0_i32_0 = arith.constant 0 : i32
    %c0_i32_1 = arith.constant 0 : i32
    return %c0_i32, %c0_i32_0 : i32, i32
  }
  func.func @transform_5(%arg0: i32) -> (i32, i32) {
    %c0_i32 = arith.constant 0 : i32
    %c0_i32_0 = arith.constant 0 : i32
    %c0_i32_1 = arith.constant 0 : i32
    return %c0_i32, %c0_i32_0 : i32, i32
  }
  func.func @transform_6(%arg0: i32) -> (i32, i32) {
    %c0_i32 = arith.constant 0 : i32
    %c0_i32_0 = arith.constant 0 : i32
    %c0_i32_1 = arith.constant 0 : i32
    return %c0_i32, %c0_i32_0 : i32, i32
  }
  func.func @transform_7(%arg0: i32) -> (i32, i32) {
    %c0_i32 = arith.constant 0 : i32
    %c0_i32_0 = arith.constant 0 : i32
    %c0_i32_1 = arith.constant 0 : i32
    return %c0_i32, %c0_i32_0 : i32, i32
  }
}

</mosaic_0001>

<llo_original>
// kernel: forward_once.7
$region0: #{forward_once.7}
  #allocation0 [shape = 'u32[]', space=smem, size = 0x4, offset = 0x4, fixed_abs, tag = 'smem constant byte address 0x4 - core index']
  #allocation1 [shape = 'u32[72,128]{1,0:T(1,128)}', space=vmem, size = 0x9000, scoped, tag = 'internal scratch']
  %s0 = inlined_call_operand.vmem [shape: bf16[12,256], index: 0, kind: input, shape index: {}]
  %s1 = inlined_call_operand.vmem [shape: bf16[4,8,12], index: 1, kind: input, shape index: {}]
  %s2 = inlined_call_operand.vmem [shape: s32[1,128], index: 2, kind: input, shape index: {}]
  %s3 = inlined_call_operand.vmem [shape: f32[8,1], index: 3, kind: input, shape index: {}]
  %s4 = inlined_call_operand.vmem [shape: bf16[8,128], index: 4, kind: output, shape index: {}]
  %s5 = sld [smem:[#allocation0]]
  $region26: #{forward_once.7} parent=0
    _
  %s7 = ssub.s32 1, %s5
  %s8 = scalar_select 0, %s7, %s5
  // Predicated region
  $region2: #{forward_once.7} parent=0 // pred_check
    _
  $region3: #{forward_once.7} parent=0 // pred_check_branch
    %10 = sbr.rel (0) target = $region5
  $region4: #{forward_once.7} parent=0 // pred_region
    _
  $region5: #{forward_once.7} parent=0 // pred_fallthru
    _
  // Predicated region
  $region6: #{forward_once.7} parent=0 // pred_check
    _
  $region7: #{forward_once.7} parent=0 // pred_check_branch
    %12 = sbr.rel (0) target = $region9
  $region8: #{forward_once.7} parent=0 // pred_region
    _
  $region9: #{forward_once.7} parent=0 // pred_fallthru
    _
  // Predicated region
  $region10: #{forward_once.7} parent=0 // pred_check
    _
  $region11: #{forward_once.7} parent=0 // pred_check_branch
    %14 = sbr.rel (0) target = $region13
  $region12: #{forward_once.7} parent=0 // pred_region
    _
  $region13: #{forward_once.7} parent=0 // pred_fallthru
    _
  // Predicated region
  $region14: #{forward_once.7} parent=0 // pred_check
    _
  $region15: #{forward_once.7} parent=0 // pred_check_branch
    %16 = sbr.rel (0) target = $region17
  $region16: #{forward_once.7} parent=0 // pred_region
    _
  $region17: #{forward_once.7} parent=0 // pred_fallthru
    _
  %v18 = vld [vmem:[%s2] sm:$0x1]
  %v19 = vand.u32 %v18, 65535
  %v20 = vshra.s32 %v18, 16
  %v21 = vld [vmem:[%s0] sm:$0xf]
  %v22 = vld [vmem:[%s0 + $0x8] sm:$0x3]
  %vm23 = vcmp.ge.s32.totalorder %v20, 1
  %vm24 = vcmp.ge.s32.totalorder %v19, 1
  %vm25 = vmand %vm23, %vm24
  %v26 = vsel %vm25, 1, 0
  %v27 = vcvt.s32.f32 %v26
  %v28 = vpack.c.bf16 %v27, %v27
  %v30 = vpack.i.b16 %v28, %v28
  %v32 = vperm.slane %v30, 0
  %v33 = vunpack.c.l.bf16 %v21
  %v34 = vunpack.c.l.bf16 %v22
  %v35 = vunpack.c.l.bf16 %v32
  %v36 = vmul.f32 %v33, %v35
  %v37 = vmul.f32 %v34, %v35
  %v38 = vpack.c.bf16 %v37, %v36
  %v39 = vld [vmem:[%s1] sm:$0xf]
  %v40 = vld [vmem:[%s0] sm:$0xff]
  %v41 = vld [vmem:[%s0 + $0x8] sm:$0x33]
  %v42 = vsel %vm23, 1, 0
  %v43 = vcvt.s32.f32 %v42
  %v44 = vpack.c.bf16 %v43, %v43
  %v46 = vpack.i.b16 %v44, %v44
  %v48 = vperm.slane %v46, 0
  %v49 = vunpack.c.l.bf16 %v40
  %v50 = vunpack.c.h.bf16 %v40
  %v51 = vunpack.c.l.bf16 %v41
  %v52 = vunpack.c.h.bf16 %v41
  %v53 = vunpack.c.l.bf16 %v48
  %55 = vrot.lane.b32.xlu0 %v53, 1
  %v56 = vpop.permute.xlu0 %55
  %v58 = vmul.f32 %v49, %v56
  %v59 = vmul.f32 %v50, %v56
  %v60 = vmul.f32 %v51, %v56
  %v61 = vmul.f32 %v52, %v56
  %v62 = vpack.c.bf16 %v60, %v58
  %v63 = vpack.c.bf16 %v61, %v59
  %s64 = scalar_lea.vmem %s1, 4
  %v65 = vld [vmem:[%s64] sm:$0xf]
  %68 = vrot.lane.b32.xlu0 %v62, 127
  %v69 = vpop.permute.xlu0 %68
  %70 = vrot.lane.b32.xlu0 %v63, 127
  %v71 = vpop.permute.xlu0 %70
  %vm72 = vcmask 1039360
  %v73 = vsel %vm72, %v69, %v71
  %vm74 = vcmask 97280
  %v76 = vsel %vm74, %v65, 0
  %vm78 = vcmask 1045504
  %v80 = vsel %vm78, %v73, 0
  %82 = vmatpush.bf16.msra.mxu0 0
  %83 = vmatpush.bf16.msra.mxu0 0
  %84 = vmatpush.bf16.msra.mxu0 0
  %85 = vmatpush.bf16.msra.mxu0 0
  %86 = vmatpush.bf16.msra.mxu0 0
  %87 = vmatpush.bf16.msra.mxu0 0
  %88 = vmatpush.bf16.msra.mxu0 0
  %89 = vmatpush.bf16.msra.mxu0 %v80
  %90 = vmatmul.bf16.gmra.mxu0 %v76
  %v91 = vpop.f32.mrf.mxu0
  %v92 = vadd.f32 0.0, %v91
  %v93 = vpop.f32.mrf.mxu0
  %94 = vdwg.mxu0
  %v96 = vsel %vm74, %v39, 0
  %v99 = vsel %vm78, %v38, 0
  %101 = vmatpush.bf16.msra.mxu0 0
  %102 = vmatpush.bf16.msra.mxu0 0
  %103 = vmatpush.bf16.msra.mxu0 0
  %104 = vmatpush.bf16.msra.mxu0 0
  %105 = vmatpush.bf16.msra.mxu0 0
  %106 = vmatpush.bf16.msra.mxu0 0
  %107 = vmatpush.bf16.msra.mxu0 0
  %108 = vmatpush.bf16.msra.mxu0 %v99
  %109 = vmatmul.bf16.gmra.mxu0 %v96
  %v110 = vpop.f32.mrf.mxu0
  %v111 = vadd.f32 %v92, %v110
  %v112 = vpop.f32.mrf.mxu0
  %113 = vdwg.mxu0
  %v114 = vsel %vm24, 1, 0
  %v115 = vcvt.s32.f32 %v114
  %v116 = vpack.c.bf16 %v115, %v115
  %v118 = vpack.i.b16 %v116, %v116
  %v120 = vperm.slane %v118, 0
  %v121 = vunpack.c.l.bf16 %v120
  %123 = vrot.lane.b32.xlu0 %v121, 8
  %v124 = vpop.permute.xlu0 %123
  %v126 = vmul.f32 %v49, %v124
  %v127 = vmul.f32 %v50, %v124
  %v128 = vmul.f32 %v51, %v124
  %v129 = vmul.f32 %v52, %v124
  %v130 = vpack.c.bf16 %v128, %v126
  %v131 = vpack.c.bf16 %v129, %v127
  %s132 = scalar_lea.vmem %s1, 8
  %v133 = vld [vmem:[%s132] sm:$0xf]
  %136 = vrot.lane.b32.xlu0 %v130, 120
  %v137 = vpop.permute.xlu0 %136
  %138 = vrot.lane.b32.xlu0 %v131, 120
  %v139 = vpop.permute.xlu0 %138
  %vm140 = vcmask 982016
  %v141 = vsel %vm140, %v137, %v139
  %v143 = vsel %vm74, %v133, 0
  %v146 = vsel %vm78, %v141, 0
  %148 = vmatpush.bf16.msra.mxu0 0
  %149 = vmatpush.bf16.msra.mxu0 0
  %150 = vmatpush.bf16.msra.mxu0 0
  %151 = vmatpush.bf16.msra.mxu0 0
  %152 = vmatpush.bf16.msra.mxu0 0
  %153 = vmatpush.bf16.msra.mxu0 0
  %154 = vmatpush.bf16.msra.mxu0 0
  %155 = vmatpush.bf16.msra.mxu0 %v146
  %156 = vmatmul.bf16.gmra.mxu0 %v143
  %v157 = vpop.f32.mrf.mxu0
  %v158 = vadd.f32 0.0, %v157
  %v159 = vpop.f32.mrf.mxu0
  %160 = vdwg.mxu0
  %v161 = vadd.f32 %v111, %v158
  %s162 = scalar_lea.vmem %s1, 12
  %v163 = vld [vmem:[%s162] sm:$0xf]
  %v166 = vunpack.c.l.b16 %v40
  %v167 = vunpack.c.h.b16 %v40
  %v168 = vunpack.c.l.b16 %v41
  %v169 = vunpack.c.h.b16 %v41
  %v170 = vpack.c.b16 %v168, %v166
  %v171 = vpack.c.b16 %v169, %v167
  %172 = vrot.lane.b32.xlu0 %v170, 119
  %v173 = vpop.permute.xlu0 %172
  %174 = vrot.lane.b32.xlu0 %v171, 119
  %v175 = vpop.permute.xlu0 %174
  %vm176 = vcmask 973824
  %v177 = vsel %vm176, %v173, %v175
  %v179 = vsel %vm74, %v163, 0
  %v182 = vsel %vm78, %v177, 0
  %184 = vmatpush.bf16.msra.mxu0 0
  %185 = vmatpush.bf16.msra.mxu0 0
  %186 = vmatpush.bf16.msra.mxu0 0
  %187 = vmatpush.bf16.msra.mxu0 0
  %188 = vmatpush.bf16.msra.mxu0 0
  %189 = vmatpush.bf16.msra.mxu0 0
  %190 = vmatpush.bf16.msra.mxu0 0
  %191 = vmatpush.bf16.msra.mxu0 %v182
  %192 = vmatmul.bf16.gmra.mxu0 %v179
  %v193 = vpop.f32.mrf.mxu0
  %v194 = vadd.f32 0.0, %v193
  %v195 = vpop.f32.mrf.mxu0
  %196 = vdwg.mxu0
  %v197 = vadd.f32 %v161, %v194
  %v198 = vld [vmem:[%s3] sm:$0xff]
  %200 = vset.pattern.permute.xlu0 0
  %201 = vperm.xlu0 %200, %v198
  %v202 = vpop.permute.xlu0 %201
  %v204 = vadd.f32 %v197, %v202
  %vm205 = vcmp.gt.f32.partialorder %v204, 0.0
  %v206 = vmul.f32 %v204, 0.1
  %v207 = vsel %vm205, %v204, %v206
  %v208 = vpack.c.bf16 %v207, %v207
  %209 = vst [vmem:[%s4] sm:$0xf] %v208
  // Predicated region
  $region18: #{forward_once.7} parent=0 // pred_check
    _
  $region19: #{forward_once.7} parent=0 // pred_check_branch
    %211 = sbr.rel (0) target = $region21
  $region20: #{forward_once.7} parent=0 // pred_region
    _
  $region21: #{forward_once.7} parent=0 // pred_fallthru
    _
  // Predicated region
  $region22: #{forward_once.7} parent=0 // pred_check
    _
  $region23: #{forward_once.7} parent=0 // pred_check_branch
    %213 = sbr.rel (0) target = $region25
  $region24: #{forward_once.7} parent=0 // pred_region
    _
  $region25: #{forward_once.7} parent=0 // pred_fallthru
    _

// kernel: forward_once.8
$region0: #{forward_once.8}
  #allocation0 [shape = 'u32[]', space=smem, size = 0x4, offset = 0x4, fixed_abs, tag = 'smem constant byte address 0x4 - core index']
  #allocation1 [shape = 'u32[72,128]{1,0:T(1,128)}', space=vmem, size = 0x9000, scoped, tag = 'internal scratch']
  %s0 = inlined_call_operand.vmem [shape: bf16[32,128], index: 0, kind: input, shape index: {}]
  %s1 = inlined_call_operand.vmem [shape: bf16[4,16,32], index: 1, kind: input, shape index: {}]
  %s2 = inlined_call_operand.vmem [shape: s32[1,32], index: 2, kind: input, shape index: {}]
  %s3 = inlined_call_operand.vmem [shape: f32[16,1], index: 3, kind: input, shape index: {}]
  %s4 = inlined_call_operand.vmem [shape: bf16[16,32], index: 4, kind: output, shape index: {}]
  %s5 = sld [smem:[#allocation0]]
  $region26: #{forward_once.8} parent=0
    _
  %s7 = ssub.s32 1, %s5
  %s8 = scalar_select 0, %s7, %s5
  // Predicated region
  $region2: #{forward_once.8} parent=0 // pred_check
    _
  $region3: #{forward_once.8} parent=0 // pred_check_branch
    %10 = sbr.rel (0) target = $region5
  $region4: #{forward_once.8} parent=0 // pred_region
    _
  $region5: #{forward_once.8} parent=0 // pred_fallthru
    _
  // Predicated region
  $region6: #{forward_once.8} parent=0 // pred_check
    _
  $region7: #{forward_once.8} parent=0 // pred_check_branch
    %12 = sbr.rel (0) target = $region9
  $region8: #{forward_once.8} parent=0 // pred_region
    _
  $region9: #{forward_once.8} parent=0 // pred_fallthru
    _
  // Predicated region
  $region10: #{forward_once.8} parent=0 // pred_check
    _
  $region11: #{forward_once.8} parent=0 // pred_check_branch
    %14 = sbr.rel (0) target = $region13
  $region12: #{forward_once.8} parent=0 // pred_region
    _
  $region13: #{forward_once.8} parent=0 // pred_fallthru
    _
  // Predicated region
  $region14: #{forward_once.8} parent=0 // pred_check
    _
  $region15: #{forward_once.8} parent=0 // pred_check_branch
    %16 = sbr.rel (0) target = $region17
  $region16: #{forward_once.8} parent=0 // pred_region
    _
  $region17: #{forward_once.8} parent=0 // pred_fallthru
    _
  %v18 = vld [vmem:[%s2] sm:$0x1]
  %v19 = vand.u32 %v18, 65535
  %v20 = vshra.s32 %v18, 16
  %v21 = vld [vmem:[%s0] sm:$0xf]
  %v22 = vld [vmem:[%s0 + $0x4] sm:$0xf]
  %v23 = vld [vmem:[%s0 + $0x8] sm:$0xf]
  %v24 = vld [vmem:[%s0 + $0xc] sm:$0xf]
  %vm25 = vcmp.ge.s32.totalorder %v20, 1
  %vm26 = vcmp.ge.s32.totalorder %v19, 1
  %vm27 = vmand %vm25, %vm26
  %v28 = vsel %vm27, 1, 0
  %v29 = vcvt.s32.f32 %v28
  %v30 = vpack.c.bf16 %v29, %v29
  %v32 = vpack.i.b16 %v30, %v30
  %v34 = vperm.slane %v32, 0
  %v35 = vunpack.c.l.bf16 %v21
  %v36 = vunpack.c.l.bf16 %v22
  %v37 = vunpack.c.l.bf16 %v23
  %v38 = vunpack.c.l.bf16 %v24
  %v39 = vunpack.c.l.bf16 %v34
  %v40 = vmul.f32 %v35, %v39
  %v41 = vmul.f32 %v36, %v39
  %v42 = vmul.f32 %v37, %v39
  %v43 = vmul.f32 %v38, %v39
  %v44 = vpack.c.bf16 %v41, %v40
  %v45 = vpack.c.bf16 %v43, %v42
  %v46 = vld [vmem:[%s1] sm:$0xf]
  %v47 = vld [vmem:[%s1 + $0x4] sm:$0xf]
  %v48 = vsel %vm25, 1, 0
  %v49 = vcvt.s32.f32 %v48
  %v50 = vpack.c.bf16 %v49, %v49
  %v52 = vpack.i.b16 %v50, %v50
  %v54 = vperm.slane %v52, 0
  %v55 = vunpack.c.l.bf16 %v54
  %57 = vrot.lane.b32.xlu0 %v55, 1
  %v58 = vpop.permute.xlu0 %57
  %v60 = vmul.f32 %v35, %v58
  %v61 = vmul.f32 %v36, %v58
  %v62 = vmul.f32 %v37, %v58
  %v63 = vmul.f32 %v38, %v58
  %v64 = vpack.c.bf16 %v61, %v60
  %v65 = vpack.c.bf16 %v63, %v62
  %s66 = scalar_lea.vmem %s1, 8
  %v67 = vld [vmem:[%s66] sm:$0xf]
  %v68 = vld [vmem:[%s66 + $0x4] sm:$0xf]
  %v71 = vunpack.c.l.b16 %v67
  %v72 = vunpack.c.l.b16 %v68
  %v73 = vpack.c.b16 %v72, %v71
  %76 = vrot.lane.b32.xlu0 %v64, 127
  %v77 = vpop.permute.xlu0 %76
  %78 = vrot.lane.b32.xlu0 %v65, 127
  %v79 = vpop.permute.xlu0 %78
  %vm82 = vcmask 261120
  %v84 = vsel %vm82, %v73, 0
  %86 = vmatpush.bf16.msra.mxu0 0
  %87 = vmatpush.bf16.msra.mxu0 0
  %88 = vmatpush.bf16.msra.mxu0 0
  %89 = vmatpush.bf16.msra.mxu0 0
  %90 = vmatpush.bf16.msra.mxu0 0
  %91 = vmatpush.bf16.msra.mxu0 0
  %92 = vmatpush.bf16.msra.mxu0 %v79
  %93 = vmatpush.bf16.msra.mxu0 %v77
  %94 = vmatmul.bf16.gmra.mxu0 %v84
  %v95 = vpop.f32.mrf.mxu0
  %v96 = vadd.f32 0.0, %v95
  %v97 = vpop.f32.mrf.mxu0
  %v98 = vadd.f32 0.0, %v97
  %99 = vdwg.mxu0
  %v102 = vunpack.c.l.b16 %v46
  %v103 = vunpack.c.l.b16 %v47
  %v104 = vpack.c.b16 %v103, %v102
  %v106 = vsel %vm82, %v104, 0
  %108 = vmatpush.bf16.msra.mxu0 0
  %109 = vmatpush.bf16.msra.mxu0 0
  %110 = vmatpush.bf16.msra.mxu0 0
  %111 = vmatpush.bf16.msra.mxu0 0
  %112 = vmatpush.bf16.msra.mxu0 0
  %113 = vmatpush.bf16.msra.mxu0 0
  %114 = vmatpush.bf16.msra.mxu0 %v45
  %115 = vmatpush.bf16.msra.mxu0 %v44
  %116 = vmatmul.bf16.gmra.mxu0 %v106
  %v117 = vpop.f32.mrf.mxu0
  %v118 = vadd.f32 %v96, %v117
  %v119 = vpop.f32.mrf.mxu0
  %v120 = vadd.f32 %v98, %v119
  %121 = vdwg.mxu0
  %v122 = vsel %vm26, 1, 0
  %v123 = vcvt.s32.f32 %v122
  %v124 = vpack.c.bf16 %v123, %v123
  %v126 = vpack.i.b16 %v124, %v124
  %v128 = vperm.slane %v126, 0
  %v129 = vunpack.c.l.bf16 %v128
  %131 = vrot.lane.b32.xlu0 %v129, 4
  %v132 = vpop.permute.xlu0 %131
  %v134 = vmul.f32 %v35, %v132
  %v135 = vmul.f32 %v36, %v132
  %v136 = vmul.f32 %v37, %v132
  %v137 = vmul.f32 %v38, %v132
  %v138 = vpack.c.bf16 %v135, %v134
  %v139 = vpack.c.bf16 %v137, %v136
  %s140 = scalar_lea.vmem %s1, 16
  %v141 = vld [vmem:[%s140] sm:$0xf]
  %v142 = vld [vmem:[%s140 + $0x4] sm:$0xf]
  %v145 = vunpack.c.l.b16 %v141
  %v146 = vunpack.c.l.b16 %v142
  %v147 = vpack.c.b16 %v146, %v145
  %150 = vrot.lane.b32.xlu0 %v138, 124
  %v151 = vpop.permute.xlu0 %150
  %152 = vrot.lane.b32.xlu0 %v139, 124
  %v153 = vpop.permute.xlu0 %152
  %v157 = vsel %vm82, %v147, 0
  %159 = vmatpush.bf16.msra.mxu0 0
  %160 = vmatpush.bf16.msra.mxu0 0
  %161 = vmatpush.bf16.msra.mxu0 0
  %162 = vmatpush.bf16.msra.mxu0 0
  %163 = vmatpush.bf16.msra.mxu0 0
  %164 = vmatpush.bf16.msra.mxu0 0
  %165 = vmatpush.bf16.msra.mxu0 %v153
  %166 = vmatpush.bf16.msra.mxu0 %v151
  %167 = vmatmul.bf16.gmra.mxu0 %v157
  %v168 = vpop.f32.mrf.mxu0
  %v169 = vadd.f32 0.0, %v168
  %v170 = vpop.f32.mrf.mxu0
  %v171 = vadd.f32 0.0, %v170
  %172 = vdwg.mxu0
  %v173 = vadd.f32 %v118, %v169
  %v174 = vadd.f32 %v120, %v171
  %s175 = scalar_lea.vmem %s1, 24
  %v176 = vld [vmem:[%s175] sm:$0xf]
  %v177 = vld [vmem:[%s175 + $0x4] sm:$0xf]
  %v180 = vunpack.c.l.b16 %v176
  %v181 = vunpack.c.l.b16 %v177
  %v182 = vpack.c.b16 %v181, %v180
  %v187 = vunpack.c.l.b16 %v21
  %v188 = vunpack.c.l.b16 %v22
  %v189 = vunpack.c.l.b16 %v23
  %v190 = vunpack.c.l.b16 %v24
  %v191 = vpack.c.b16 %v188, %v187
  %v192 = vpack.c.b16 %v190, %v189
  %193 = vrot.lane.b32.xlu0 %v191, 123
  %v194 = vpop.permute.xlu0 %193
  %195 = vrot.lane.b32.xlu0 %v192, 123
  %v196 = vpop.permute.xlu0 %195
  %v200 = vsel %vm82, %v182, 0
  %202 = vmatpush.bf16.msra.mxu0 0
  %203 = vmatpush.bf16.msra.mxu0 0
  %204 = vmatpush.bf16.msra.mxu0 0
  %205 = vmatpush.bf16.msra.mxu0 0
  %206 = vmatpush.bf16.msra.mxu0 0
  %207 = vmatpush.bf16.msra.mxu0 0
  %208 = vmatpush.bf16.msra.mxu0 %v196
  %209 = vmatpush.bf16.msra.mxu0 %v194
  %210 = vmatmul.bf16.gmra.mxu0 %v200
  %v211 = vpop.f32.mrf.mxu0
  %v212 = vadd.f32 0.0, %v211
  %v213 = vpop.f32.mrf.mxu0
  %v214 = vadd.f32 0.0, %v213
  %215 = vdwg.mxu0
  %v216 = vadd.f32 %v173, %v212
  %v217 = vadd.f32 %v174, %v214
  %v218 = vld [vmem:[%s3] sm:$0xff]
  %v219 = vld [vmem:[%s3 + $0x8] sm:$0xff]
  %221 = vset.pattern.permute.xlu0 0
  %222 = vperm.xlu0 %221, %v218
  %v223 = vpop.permute.xlu0 %222
  %226 = vset.pattern.permute.xlu0 0
  %227 = vperm.xlu0 %226, %v219
  %v228 = vpop.permute.xlu0 %227
  %v230 = vadd.f32 %v216, %v223
  %v231 = vadd.f32 %v217, %v228
  %vm232 = vcmp.gt.f32.partialorder %v230, 0.0
  %vm233 = vcmp.gt.f32.partialorder %v231, 0.0
  %v234 = vmul.f32 %v230, 0.1
  %v235 = vmul.f32 %v231, 0.1
  %v236 = vsel %vm232, %v230, %v234
  %v237 = vsel %vm233, %v231, %v235
  %v238 = vpack.c.bf16 %v236, %v236
  %v239 = vpack.c.bf16 %v237, %v237
  %vm240 = vcmask 257024
  %241 = vst.msk [vmem:[%s4] sm:$0xf] %vm240, %v238
  %242 = vst.msk [vmem:[%s4 + $0x4] sm:$0xf] %vm240, %v239
  // Predicated region
  $region18: #{forward_once.8} parent=0 // pred_check
    _
  $region19: #{forward_once.8} parent=0 // pred_check_branch
    %244 = sbr.rel (0) target = $region21
  $region20: #{forward_once.8} parent=0 // pred_region
    _
  $region21: #{forward_once.8} parent=0 // pred_fallthru
    _
  // Predicated region
  $region22: #{forward_once.8} parent=0 // pred_check
    _
  $region23: #{forward_once.8} parent=0 // pred_check_branch
    %246 = sbr.rel (0) target = $region25
  $region24: #{forward_once.8} parent=0 // pred_region
    _
  $region25: #{forward_once.8} parent=0 // pred_fallthru
    _

// kernel: forward_once.10
$region0: #{forward_once.10}
  #allocation0 [shape = 'u32[]', space=smem, size = 0x4, offset = 0x4, fixed_abs, tag = 'smem constant byte address 0x4 - core index']
  #allocation1 [shape = 'u32[72,128]{1,0:T(1,128)}', space=vmem, size = 0x9000, scoped, tag = 'internal scratch']
  %s0 = inlined_call_operand.vmem [shape: bf16[32,128], index: 0, kind: input, shape index: {}]
  %s1 = inlined_call_operand.vmem [shape: bf16[1,16,32], index: 1, kind: input, shape index: {}]
  %s2 = inlined_call_operand.vmem [shape: f32[16,1], index: 2, kind: input, shape index: {}]
  %s3 = inlined_call_operand.vmem [shape: bf16[16,8], index: 3, kind: output, shape index: {}]
  %s4 = sld [smem:[#allocation0]]
  $region22: #{forward_once.10} parent=0
    _
  %s6 = ssub.s32 1, %s4
  %s7 = scalar_select 0, %s6, %s4
  // Predicated region
  $region2: #{forward_once.10} parent=0 // pred_check
    _
  $region3: #{forward_once.10} parent=0 // pred_check_branch
    %9 = sbr.rel (0) target = $region5
  $region4: #{forward_once.10} parent=0 // pred_region
    _
  $region5: #{forward_once.10} parent=0 // pred_fallthru
    _
  // Predicated region
  $region6: #{forward_once.10} parent=0 // pred_check
    _
  $region7: #{forward_once.10} parent=0 // pred_check_branch
    %11 = sbr.rel (0) target = $region9
  $region8: #{forward_once.10} parent=0 // pred_region
    _
  $region9: #{forward_once.10} parent=0 // pred_fallthru
    _
  // Predicated region
  $region10: #{forward_once.10} parent=0 // pred_check
    _
  $region11: #{forward_once.10} parent=0 // pred_check_branch
    %13 = sbr.rel (0) target = $region13
  $region12: #{forward_once.10} parent=0 // pred_region
    _
  $region13: #{forward_once.10} parent=0 // pred_fallthru
    _
  %v15 = vld [vmem:[%s0] sm:$0xf]
  %v16 = vld [vmem:[%s0 + $0x4] sm:$0xf]
  %v17 = vld [vmem:[%s0 + $0x8] sm:$0xf]
  %v18 = vld [vmem:[%s0 + $0xc] sm:$0xf]
  %v19 = vld [vmem:[%s1] sm:$0xf]
  %v20 = vld [vmem:[%s1 + $0x4] sm:$0xf]
  %v21 = vld [vmem:[%s2] sm:$0xff]
  %v22 = vld [vmem:[%s2 + $0x8] sm:$0xff]
  %24 = vset.pattern.permute.xlu0 0
  %25 = vperm.xlu0 %24, %v21
  %v26 = vpop.permute.xlu0 %25
  %29 = vset.pattern.permute.xlu0 0
  %30 = vperm.xlu0 %29, %v22
  %v31 = vpop.permute.xlu0 %30
  %v35 = vunpack.c.l.b16 %v19
  %v36 = vunpack.c.l.b16 %v20
  %v37 = vpack.c.b16 %v36, %v35
  %v42 = vunpack.c.l.b16 %v15
  %v43 = vunpack.c.l.b16 %v16
  %v44 = vunpack.c.l.b16 %v17
  %v45 = vunpack.c.l.b16 %v18
  %v46 = vpack.c.b16 %v43, %v42
  %v47 = vpack.c.b16 %v45, %v44
  %vm50 = vcmask 261120
  %v52 = vsel %vm50, %v37, 0
  %54 = vmatpush.bf16.msra.mxu0 0
  %55 = vmatpush.bf16.msra.mxu0 0
  %56 = vmatpush.bf16.msra.mxu0 0
  %57 = vmatpush.bf16.msra.mxu0 0
  %58 = vmatpush.bf16.msra.mxu0 0
  %59 = vmatpush.bf16.msra.mxu0 0
  %60 = vmatpush.bf16.msra.mxu0 %v47
  %61 = vmatpush.bf16.msra.mxu0 %v46
  %62 = vmatmul.bf16.gmra.mxu0 %v52
  %v63 = vpop.f32.mrf.mxu0
  %v64 = vadd.f32 %v26, %v63
  %v65 = vpop.f32.mrf.mxu0
  %v66 = vadd.f32 %v31, %v65
  %67 = vdwg.mxu0
  %vm68 = vcmp.gt.f32.partialorder %v64, 0.0
  %vm69 = vcmp.gt.f32.partialorder %v66, 0.0
  %v70 = vmul.f32 %v64, 0.1
  %v71 = vmul.f32 %v66, 0.1
  %v72 = vsel %vm68, %v64, %v70
  %v73 = vsel %vm69, %v66, %v71
  %v74 = vpack.c.bf16 %v72, %v72
  %v75 = vpack.c.bf16 %v73, %v73
  %vm76 = vcmask 60416
  %77 = vst.msk [vmem:[%s3] sm:$0xf] %vm76, %v74
  %78 = vst.msk [vmem:[%s3 + $0x4] sm:$0xf] %vm76, %v75
  // Predicated region
  $region14: #{forward_once.10} parent=0 // pred_check
    _
  $region15: #{forward_once.10} parent=0 // pred_check_branch
    %80 = sbr.rel (0) target = $region17
  $region16: #{forward_once.10} parent=0 // pred_region
    _
  $region17: #{forward_once.10} parent=0 // pred_fallthru
    _
  // Predicated region
  $region18: #{forward_once.10} parent=0 // pred_check
    _
  $region19: #{forward_once.10} parent=0 // pred_check_branch
    %82 = sbr.rel (0) target = $region21
  $region20: #{forward_once.10} parent=0 // pred_region
    _
  $region21: #{forward_once.10} parent=0 // pred_fallthru
    _

// kernel: forward_once.9
$region0: #{forward_once.9}
  #allocation0 [shape = 'u32[]', space=smem, size = 0x4, offset = 0x4, fixed_abs, tag = 'smem constant byte address 0x4 - core index']
  #allocation1 [shape = 'u32[72,128]{1,0:T(1,128)}', space=vmem, size = 0x9000, scoped, tag = 'internal scratch']
  %s0 = inlined_call_operand.vmem [shape: bf16[64,128], index: 0, kind: input, shape index: {}]
  %s1 = inlined_call_operand.vmem [shape: bf16[4,32,64], index: 1, kind: input, shape index: {}]
  %s2 = inlined_call_operand.vmem [shape: s32[1,8], index: 2, kind: input, shape index: {}]
  %s3 = inlined_call_operand.vmem [shape: f32[32,1], index: 3, kind: input, shape index: {}]
  %s4 = inlined_call_operand.vmem [shape: bf16[32,8], index: 4, kind: output, shape index: {}]
  %s5 = sld [smem:[#allocation0]]
  $region26: #{forward_once.9} parent=0
    _
  %s7 = ssub.s32 1, %s5
  %s8 = scalar_select 0, %s7, %s5
  // Predicated region
  $region2: #{forward_once.9} parent=0 // pred_check
    _
  $region3: #{forward_once.9} parent=0 // pred_check_branch
    %10 = sbr.rel (0) target = $region5
  $region4: #{forward_once.9} parent=0 // pred_region
    _
  $region5: #{forward_once.9} parent=0 // pred_fallthru
    _
  // Predicated region
  $region6: #{forward_once.9} parent=0 // pred_check
    _
  $region7: #{forward_once.9} parent=0 // pred_check_branch
    %12 = sbr.rel (0) target = $region9
  $region8: #{forward_once.9} parent=0 // pred_region
    _
  $region9: #{forward_once.9} parent=0 // pred_fallthru
    _
  // Predicated region
  $region10: #{forward_once.9} parent=0 // pred_check
    _
  $region11: #{forward_once.9} parent=0 // pred_check_branch
    %14 = sbr.rel (0) target = $region13
  $region12: #{forward_once.9} parent=0 // pred_region
    _
  $region13: #{forward_once.9} parent=0 // pred_fallthru
    _
  // Predicated region
  $region14: #{forward_once.9} parent=0 // pred_check
    _
  $region15: #{forward_once.9} parent=0 // pred_check_branch
    %16 = sbr.rel (0) target = $region17
  $region16: #{forward_once.9} parent=0 // pred_region
    _
  $region17: #{forward_once.9} parent=0 // pred_fallthru
    _
  %v18 = vld [vmem:[%s2] sm:$0x1]
  %v19 = vand.u32 %v18, 65535
  %v20 = vshra.s32 %v18, 16
  %v21 = vld [vmem:[%s0] sm:$0xf]
  %v22 = vld [vmem:[%s0 + $0x4] sm:$0xf]
  %v23 = vld [vmem:[%s0 + $0x8] sm:$0xf]
  %v24 = vld [vmem:[%s0 + $0xc] sm:$0xf]
  %v25 = vld [vmem:[%s0 + $0x10] sm:$0xf]
  %v26 = vld [vmem:[%s0 + $0x14] sm:$0xf]
  %v27 = vld [vmem:[%s0 + $0x18] sm:$0xf]
  %v28 = vld [vmem:[%s0 + $0x1c] sm:$0xf]
  %vm29 = vcmp.ge.s32.totalorder %v20, 1
  %vm30 = vcmp.ge.s32.totalorder %v19, 1
  %vm31 = vmand %vm29, %vm30
  %v32 = vsel %vm31, 1, 0
  %v33 = vcvt.s32.f32 %v32
  %v34 = vpack.c.bf16 %v33, %v33
  %v36 = vpack.i.b16 %v34, %v34
  %v38 = vperm.slane %v36, 0
  %v39 = vunpack.c.l.bf16 %v21
  %v40 = vunpack.c.l.bf16 %v22
  %v41 = vunpack.c.l.bf16 %v23
  %v42 = vunpack.c.l.bf16 %v24
  %v43 = vunpack.c.l.bf16 %v25
  %v44 = vunpack.c.l.bf16 %v26
  %v45 = vunpack.c.l.bf16 %v27
  %v46 = vunpack.c.l.bf16 %v28
  %v47 = vunpack.c.l.bf16 %v38
  %v48 = vmul.f32 %v39, %v47
  %v49 = vmul.f32 %v40, %v47
  %v50 = vmul.f32 %v41, %v47
  %v51 = vmul.f32 %v42, %v47
  %v52 = vmul.f32 %v43, %v47
  %v53 = vmul.f32 %v44, %v47
  %v54 = vmul.f32 %v45, %v47
  %v55 = vmul.f32 %v46, %v47
  %v56 = vpack.c.bf16 %v49, %v48
  %v57 = vpack.c.bf16 %v51, %v50
  %v58 = vpack.c.bf16 %v53, %v52
  %v59 = vpack.c.bf16 %v55, %v54
  %v60 = vld [vmem:[%s1] sm:$0xf]
  %v61 = vld [vmem:[%s1 + $0x4] sm:$0xf]
  %v62 = vld [vmem:[%s1 + $0x8] sm:$0xf]
  %v63 = vld [vmem:[%s1 + $0xc] sm:$0xf]
  %v64 = vsel %vm29, 1, 0
  %v65 = vcvt.s32.f32 %v64
  %v66 = vpack.c.bf16 %v65, %v65
  %v68 = vpack.i.b16 %v66, %v66
  %v70 = vperm.slane %v68, 0
  %v71 = vunpack.c.l.bf16 %v70
  %73 = vrot.lane.b32.xlu0 %v71, 1
  %v74 = vpop.permute.xlu0 %73
  %v76 = vmul.f32 %v39, %v74
  %v77 = vmul.f32 %v40, %v74
  %v78 = vmul.f32 %v41, %v74
  %v79 = vmul.f32 %v42, %v74
  %v80 = vmul.f32 %v43, %v74
  %v81 = vmul.f32 %v44, %v74
  %v82 = vmul.f32 %v45, %v74
  %v83 = vmul.f32 %v46, %v74
  %v84 = vpack.c.bf16 %v77, %v76
  %v85 = vpack.c.bf16 %v79, %v78
  %v86 = vpack.c.bf16 %v81, %v80
  %v87 = vpack.c.bf16 %v83, %v82
  %s88 = scalar_lea.vmem %s1, 16
  %v89 = vld [vmem:[%s88] sm:$0xf]
  %v90 = vld [vmem:[%s88 + $0x4] sm:$0xf]
  %v91 = vld [vmem:[%s88 + $0x8] sm:$0xf]
  %v92 = vld [vmem:[%s88 + $0xc] sm:$0xf]
  %v97 = vunpack.c.l.b16 %v89
  %v98 = vunpack.c.l.b16 %v90
  %v99 = vunpack.c.l.b16 %v91
  %v100 = vunpack.c.l.b16 %v92
  %v101 = vpack.c.b16 %v98, %v97
  %v102 = vpack.c.b16 %v100, %v99
  %107 = vrot.lane.b32.xlu0 %v84, 127
  %v108 = vpop.permute.xlu0 %107
  %109 = vrot.lane.b32.xlu0 %v85, 127
  %v110 = vpop.permute.xlu0 %109
  %111 = vrot.lane.b32.xlu0 %v86, 127
  %v112 = vpop.permute.xlu0 %111
  %113 = vrot.lane.b32.xlu0 %v87, 127
  %v114 = vpop.permute.xlu0 %113
  %vm119 = vcmask 523264
  %v121 = vsel %vm119, %v101, 0
  %v124 = vsel %vm119, %v102, 0
  %126 = vmatpush.bf16.msra.mxu0 0
  %127 = vmatpush.bf16.msra.mxu0 0
  %128 = vmatpush.bf16.msra.mxu0 0
  %129 = vmatpush.bf16.msra.mxu0 0
  %130 = vmatpush.bf16.msra.mxu0 %v114
  %131 = vmatpush.bf16.msra.mxu0 %v112
  %132 = vmatpush.bf16.msra.mxu0 %v110
  %133 = vmatpush.bf16.msra.mxu0 %v108
  %134 = vmatmul.bf16.gmra.mxu0 %v121
  %v135 = vpop.f32.mrf.mxu0
  %v136 = vadd.f32 0.0, %v135
  %v137 = vpop.f32.mrf.mxu0
  %v138 = vadd.f32 0.0, %v137
  %139 = vmatmul.bf16.gmra.mxu0 %v124
  %v140 = vpop.f32.mrf.mxu0
  %v141 = vadd.f32 0.0, %v140
  %v142 = vpop.f32.mrf.mxu0
  %v143 = vadd.f32 0.0, %v142
  %144 = vdwg.mxu0
  %v149 = vunpack.c.l.b16 %v60
  %v150 = vunpack.c.l.b16 %v61
  %v151 = vunpack.c.l.b16 %v62
  %v152 = vunpack.c.l.b16 %v63
  %v153 = vpack.c.b16 %v150, %v149
  %v154 = vpack.c.b16 %v152, %v151
  %v156 = vsel %vm119, %v153, 0
  %v159 = vsel %vm119, %v154, 0
  %161 = vmatpush.bf16.msra.mxu0 0
  %162 = vmatpush.bf16.msra.mxu0 0
  %163 = vmatpush.bf16.msra.mxu0 0
  %164 = vmatpush.bf16.msra.mxu0 0
  %165 = vmatpush.bf16.msra.mxu0 %v59
  %166 = vmatpush.bf16.msra.mxu0 %v58
  %167 = vmatpush.bf16.msra.mxu0 %v57
  %168 = vmatpush.bf16.msra.mxu0 %v56
  %169 = vmatmul.bf16.gmra.mxu0 %v156
  %v170 = vpop.f32.mrf.mxu0
  %v171 = vadd.f32 %v136, %v170
  %v172 = vpop.f32.mrf.mxu0
  %v173 = vadd.f32 %v138, %v172
  %174 = vmatmul.bf16.gmra.mxu0 %v159
  %v175 = vpop.f32.mrf.mxu0
  %v176 = vadd.f32 %v141, %v175
  %v177 = vpop.f32.mrf.mxu0
  %v178 = vadd.f32 %v143, %v177
  %179 = vdwg.mxu0
  %v180 = vsel %vm30, 1, 0
  %v181 = vcvt.s32.f32 %v180
  %v182 = vpack.c.bf16 %v181, %v181
  %v184 = vpack.i.b16 %v182, %v182
  %v186 = vperm.slane %v184, 0
  %v187 = vunpack.c.l.bf16 %v186
  %189 = vrot.lane.b32.xlu0 %v187, 2
  %v190 = vpop.permute.xlu0 %189
  %v192 = vmul.f32 %v39, %v190
  %v193 = vmul.f32 %v40, %v190
  %v194 = vmul.f32 %v41, %v190
  %v195 = vmul.f32 %v42, %v190
  %v196 = vmul.f32 %v43, %v190
  %v197 = vmul.f32 %v44, %v190
  %v198 = vmul.f32 %v45, %v190
  %v199 = vmul.f32 %v46, %v190
  %v200 = vpack.c.bf16 %v193, %v192
  %v201 = vpack.c.bf16 %v195, %v194
  %v202 = vpack.c.bf16 %v197, %v196
  %v203 = vpack.c.bf16 %v199, %v198
  %s204 = scalar_lea.vmem %s1, 32
  %v205 = vld [vmem:[%s204] sm:$0xf]
  %v206 = vld [vmem:[%s204 + $0x4] sm:$0xf]
  %v207 = vld [vmem:[%s204 + $0x8] sm:$0xf]
  %v208 = vld [vmem:[%s204 + $0xc] sm:$0xf]
  %v213 = vunpack.c.l.b16 %v205
  %v214 = vunpack.c.l.b16 %v206
  %v215 = vunpack.c.l.b16 %v207
  %v216 = vunpack.c.l.b16 %v208
  %v217 = vpack.c.b16 %v214, %v213
  %v218 = vpack.c.b16 %v216, %v215
  %223 = vrot.lane.b32.xlu0 %v200, 126
  %v224 = vpop.permute.xlu0 %223
  %225 = vrot.lane.b32.xlu0 %v201, 126
  %v226 = vpop.permute.xlu0 %225
  %227 = vrot.lane.b32.xlu0 %v202, 126
  %v228 = vpop.permute.xlu0 %227
  %229 = vrot.lane.b32.xlu0 %v203, 126
  %v230 = vpop.permute.xlu0 %229
  %v236 = vsel %vm119, %v217, 0
  %v239 = vsel %vm119, %v218, 0
  %241 = vmatpush.bf16.msra.mxu0 0
  %242 = vmatpush.bf16.msra.mxu0 0
  %243 = vmatpush.bf16.msra.mxu0 0
  %244 = vmatpush.bf16.msra.mxu0 0
  %245 = vmatpush.bf16.msra.mxu0 %v230
  %246 = vmatpush.bf16.msra.mxu0 %v228
  %247 = vmatpush.bf16.msra.mxu0 %v226
  %248 = vmatpush.bf16.msra.mxu0 %v224
  %249 = vmatmul.bf16.gmra.mxu0 %v236
  %v250 = vpop.f32.mrf.mxu0
  %v251 = vadd.f32 0.0, %v250
  %v252 = vpop.f32.mrf.mxu0
  %v253 = vadd.f32 0.0, %v252
  %254 = vmatmul.bf16.gmra.mxu0 %v239
  %v255 = vpop.f32.mrf.mxu0
  %v256 = vadd.f32 0.0, %v255
  %v257 = vpop.f32.mrf.mxu0
  %v258 = vadd.f32 0.0, %v257
  %259 = vdwg.mxu0
  %v260 = vadd.f32 %v171, %v251
  %v261 = vadd.f32 %v173, %v253
  %v262 = vadd.f32 %v176, %v256
  %v263 = vadd.f32 %v178, %v258
  %s264 = scalar_lea.vmem %s1, 48
  %v265 = vld [vmem:[%s264] sm:$0xf]
  %v266 = vld [vmem:[%s264 + $0x4] sm:$0xf]
  %v267 = vld [vmem:[%s264 + $0x8] sm:$0xf]
  %v268 = vld [vmem:[%s264 + $0xc] sm:$0xf]
  %v273 = vunpack.c.l.b16 %v265
  %v274 = vunpack.c.l.b16 %v266
  %v275 = vunpack.c.l.b16 %v267
  %v276 = vunpack.c.l.b16 %v268
  %v277 = vpack.c.b16 %v274, %v273
  %v278 = vpack.c.b16 %v276, %v275
  %v287 = vunpack.c.l.b16 %v21
  %v288 = vunpack.c.l.b16 %v22
  %v289 = vunpack.c.l.b16 %v23
  %v290 = vunpack.c.l.b16 %v24
  %v291 = vunpack.c.l.b16 %v25
  %v292 = vunpack.c.l.b16 %v26
  %v293 = vunpack.c.l.b16 %v27
  %v294 = vunpack.c.l.b16 %v28
  %v295 = vpack.c.b16 %v288, %v287
  %v296 = vpack.c.b16 %v290, %v289
  %v297 = vpack.c.b16 %v292, %v291
  %v298 = vpack.c.b16 %v294, %v293
  %299 = vrot.lane.b32.xlu0 %v295, 125
  %v300 = vpop.permute.xlu0 %299
  %301 = vrot.lane.b32.xlu0 %v296, 125
  %v302 = vpop.permute.xlu0 %301
  %303 = vrot.lane.b32.xlu0 %v297, 125
  %v304 = vpop.permute.xlu0 %303
  %305 = vrot.lane.b32.xlu0 %v298, 125
  %v306 = vpop.permute.xlu0 %305
  %v312 = vsel %vm119, %v277, 0
  %v315 = vsel %vm119, %v278, 0
  %317 = vmatpush.bf16.msra.mxu0 0
  %318 = vmatpush.bf16.msra.mxu0 0
  %319 = vmatpush.bf16.msra.mxu0 0
  %320 = vmatpush.bf16.msra.mxu0 0
  %321 = vmatpush.bf16.msra.mxu0 %v306
  %322 = vmatpush.bf16.msra.mxu0 %v304
  %323 = vmatpush.bf16.msra.mxu0 %v302
  %324 = vmatpush.bf16.msra.mxu0 %v300
  %325 = vmatmul.bf16.gmra.mxu0 %v312
  %v326 = vpop.f32.mrf.mxu0
  %v327 = vadd.f32 0.0, %v326
  %v328 = vpop.f32.mrf.mxu0
  %v329 = vadd.f32 0.0, %v328
  %330 = vmatmul.bf16.gmra.mxu0 %v315
  %v331 = vpop.f32.mrf.mxu0
  %v332 = vadd.f32 0.0, %v331
  %v333 = vpop.f32.mrf.mxu0
  %v334 = vadd.f32 0.0, %v333
  %335 = vdwg.mxu0
  %v336 = vadd.f32 %v260, %v327
  %v337 = vadd.f32 %v261, %v329
  %v338 = vadd.f32 %v262, %v332
  %v339 = vadd.f32 %v263, %v334
  %v340 = vld [vmem:[%s3] sm:$0xff]
  %v341 = vld [vmem:[%s3 + $0x8] sm:$0xff]
  %v342 = vld [vmem:[%s3 + $0x10] sm:$0xff]
  %v343 = vld [vmem:[%s3 + $0x18] sm:$0xff]
  %345 = vset.pattern.permute.xlu0 0
  %346 = vperm.xlu0 %345, %v340
  %v347 = vpop.permute.xlu0 %346
  %350 = vset.pattern.permute.xlu0 0
  %351 = vperm.xlu0 %350, %v341
  %v352 = vpop.permute.xlu0 %351
  %355 = vset.pattern.permute.xlu0 0
  %356 = vperm.xlu0 %355, %v342
  %v357 = vpop.permute.xlu0 %356
  %360 = vset.pattern.permute.xlu0 0
  %361 = vperm.xlu0 %360, %v343
  %v362 = vpop.permute.xlu0 %361
  %v364 = vadd.f32 %v336, %v347
  %v365 = vadd.f32 %v337, %v352
  %v366 = vadd.f32 %v338, %v357
  %v367 = vadd.f32 %v339, %v362
  %vm368 = vcmp.gt.f32.partialorder %v364, 0.0
  %vm369 = vcmp.gt.f32.partialorder %v365, 0.0
  %vm370 = vcmp.gt.f32.partialorder %v366, 0.0
  %vm371 = vcmp.gt.f32.partialorder %v367, 0.0
  %v372 = vmul.f32 %v364, 0.1
  %v373 = vmul.f32 %v365, 0.1
  %v374 = vmul.f32 %v366, 0.1
  %v375 = vmul.f32 %v367, 0.1
  %v376 = vsel %vm368, %v364, %v372
  %v377 = vsel %vm369, %v365, %v373
  %v378 = vsel %vm370, %v366, %v374
  %v379 = vsel %vm371, %v367, %v375
  %v380 = vpack.c.bf16 %v376, %v376
  %v381 = vpack.c.bf16 %v377, %v377
  %v382 = vpack.c.bf16 %v378, %v378
  %v383 = vpack.c.bf16 %v379, %v379
  %vm384 = vcmask 60416
  %385 = vst.msk [vmem:[%s4] sm:$0xf] %vm384, %v380
  %386 = vst.msk [vmem:[%s4 + $0x4] sm:$0xf] %vm384, %v381
  %387 = vst.msk [vmem:[%s4 + $0x8] sm:$0xf] %vm384, %v382
  %388 = vst.msk [vmem:[%s4 + $0xc] sm:$0xf] %vm384, %v383
  // Predicated region
  $region18: #{forward_once.9} parent=0 // pred_check
    _
  $region19: #{forward_once.9} parent=0 // pred_check_branch
    %390 = sbr.rel (0) target = $region21
  $region20: #{forward_once.9} parent=0 // pred_region
    _
  $region21: #{forward_once.9} parent=0 // pred_fallthru
    _
  // Predicated region
  $region22: #{forward_once.9} parent=0 // pred_check
    _
  $region23: #{forward_once.9} parent=0 // pred_check_branch
    %392 = sbr.rel (0) target = $region25
  $region24: #{forward_once.9} parent=0 // pred_region
    _
  $region25: #{forward_once.9} parent=0 // pred_fallthru
    _

// kernel: forward_once.13
$region0: #{forward_once.13}
  #allocation0 [shape = 'u32[]', space=smem, size = 0x4, offset = 0x4, fixed_abs, tag = 'smem constant byte address 0x4 - core index']
  #allocation1 [shape = 'u32[72,128]{1,0:T(1,128)}', space=vmem, size = 0x9000, scoped, tag = 'internal scratch']
  %s0 = inlined_call_operand.vmem [shape: bf16[16,32], index: 0, kind: input, shape index: {}]
  %s1 = inlined_call_operand.vmem [shape: bf16[18,16], index: 1, kind: input, shape index: {}]
  %s2 = inlined_call_operand.vmem [shape: f32[18,1], index: 2, kind: input, shape index: {}]
  %s3 = inlined_call_operand.vmem [shape: bf16[32,8], index: 3, kind: input, shape index: {}]
  %s4 = inlined_call_operand.vmem [shape: bf16[18,32], index: 4, kind: input, shape index: {}]
  %s5 = inlined_call_operand.vmem [shape: f32[18,1], index: 5, kind: input, shape index: {}]
  %s6 = inlined_call_operand.vmem [shape: f32[18,32], index: 6, kind: output, shape index: {0}]
  %s7 = inlined_call_operand.vmem [shape: f32[18,8], index: 7, kind: output, shape index: {1}]
  %8 = xla_tuple %s6, %s7
  %s9 = sld [smem:[#allocation0]]
  $region42: #{forward_once.13} parent=0
    _
  %s11 = ssub.s32 1, %s9
  %s12 = scalar_select 0, %s11, %s9
  // Predicated region
  $region2: #{forward_once.13} parent=0 // pred_check
    _
  $region3: #{forward_once.13} parent=0 // pred_check_branch
    %14 = sbr.rel (0) target = $region5
  $region4: #{forward_once.13} parent=0 // pred_region
    _
  $region5: #{forward_once.13} parent=0 // pred_fallthru
    _
  // Predicated region
  $region6: #{forward_once.13} parent=0 // pred_check
    _
  $region7: #{forward_once.13} parent=0 // pred_check_branch
    %16 = sbr.rel (0) target = $region9
  $region8: #{forward_once.13} parent=0 // pred_region
    _
  $region9: #{forward_once.13} parent=0 // pred_fallthru
    _
  // Predicated region
  $region10: #{forward_once.13} parent=0 // pred_check
    _
  $region11: #{forward_once.13} parent=0 // pred_check_branch
    %18 = sbr.rel (0) target = $region13
  $region12: #{forward_once.13} parent=0 // pred_region
    _
  $region13: #{forward_once.13} parent=0 // pred_fallthru
    _
  // Predicated region
  $region14: #{forward_once.13} parent=0 // pred_check
    _
  $region15: #{forward_once.13} parent=0 // pred_check_branch
    %20 = sbr.rel (0) target = $region17
  $region16: #{forward_once.13} parent=0 // pred_region
    _
  $region17: #{forward_once.13} parent=0 // pred_fallthru
    _
  // Predicated region
  $region18: #{forward_once.13} parent=0 // pred_check
    _
  $region19: #{forward_once.13} parent=0 // pred_check_branch
    %22 = sbr.rel (0) target = $region21
  $region20: #{forward_once.13} parent=0 // pred_region
    _
  $region21: #{forward_once.13} parent=0 // pred_fallthru
    _
  // Predicated region
  $region22: #{forward_once.13} parent=0 // pred_check
    _
  $region23: #{forward_once.13} parent=0 // pred_check_branch
    %24 = sbr.rel (0) target = $region25
  $region24: #{forward_once.13} parent=0 // pred_region
    _
  $region25: #{forward_once.13} parent=0 // pred_fallthru
    _
  %v26 = vld [vmem:[%s1] sm:$0xf]
  %v27 = vld [vmem:[%s1 + $0x4] sm:$0xf]
  %v28 = vld [vmem:[%s1 + $0x8] sm:$0x1]
  %v29 = vld [vmem:[%s0] sm:$0xf]
  %v30 = vld [vmem:[%s0 + $0x4] sm:$0xf]
  %v31 = vld [vmem:[%s2] sm:$0xff]
  %v32 = vld [vmem:[%s2 + $0x8] sm:$0xff]
  %v33 = vld [vmem:[%s2 + $0x10] sm:$0x3]
  %35 = vset.pattern.permute.xlu0 0
  %36 = vperm.xlu0 %35, %v31
  %v37 = vpop.permute.xlu0 %36
  %40 = vset.pattern.permute.xlu0 0
  %41 = vperm.xlu0 %40, %v32
  %v42 = vpop.permute.xlu0 %41
  %45 = vset.pattern.permute.xlu0 0
  %46 = vperm.xlu0 %45, %v33
  %v47 = vpop.permute.xlu0 %46
  %v52 = vunpack.c.l.b16 %v26
  %v53 = vunpack.c.l.b16 %v27
  %v54 = vunpack.c.l.b16 %v28
  %v55 = vpack.c.b16 %v53, %v52
  %v56 = vpack.c.b16 %v54, %v54
  %v59 = vunpack.c.l.b16 %v29
  %v60 = vunpack.c.l.b16 %v30
  %v61 = vpack.c.b16 %v60, %v59
  %vm63 = vcmask 130048
  %v65 = vsel %vm63, %v55, 0
  %v68 = vsel %vm63, %v56, 0
  %70 = vmatpush.bf16.msra.mxu0 0
  %71 = vmatpush.bf16.msra.mxu0 0
  %72 = vmatpush.bf16.msra.mxu0 0
  %73 = vmatpush.bf16.msra.mxu0 0
  %74 = vmatpush.bf16.msra.mxu0 0
  %75 = vmatpush.bf16.msra.mxu0 0
  %76 = vmatpush.bf16.msra.mxu0 0
  %77 = vmatpush.bf16.msra.mxu0 %v61
  %78 = vmatmul.bf16.gmra.mxu0 %v65
  %v79 = vpop.f32.mrf.mxu0
  %v80 = vadd.f32 %v37, %v79
  %v81 = vpop.f32.mrf.mxu0
  %v82 = vadd.f32 %v42, %v81
  %83 = vmatmul.bf16.gmra.mxu0 %v68
  %v84 = vpop.f32.mrf.mxu0
  %v85 = vadd.f32 %v47, %v84
  %v86 = vpop.f32.mrf.mxu0
  %87 = vdwg.mxu0
  %vm88 = vcmask 261120
  %89 = vst.msk [vmem:[%s6] sm:$0xff] %vm88, %v80
  %90 = vst.msk [vmem:[%s6 + $0x8] sm:$0xff] %vm88, %v82
  %vm91 = vcmask 254976
  %92 = vst.msk [vmem:[%s6 + $0x10] sm:$0x3] %vm91, %v85
  %v93 = vld [vmem:[%s4] sm:$0xf]
  %v94 = vld [vmem:[%s4 + $0x4] sm:$0xf]
  %v95 = vld [vmem:[%s4 + $0x8] sm:$0x1]
  %v96 = vld [vmem:[%s3] sm:$0xf]
  %v97 = vld [vmem:[%s3 + $0x4] sm:$0xf]
  %v98 = vld [vmem:[%s3 + $0x8] sm:$0xf]
  %v99 = vld [vmem:[%s3 + $0xc] sm:$0xf]
  %v100 = vld [vmem:[%s5] sm:$0xff]
  %v101 = vld [vmem:[%s5 + $0x8] sm:$0xff]
  %v102 = vld [vmem:[%s5 + $0x10] sm:$0x3]
  %104 = vset.pattern.permute.xlu0 0
  %105 = vperm.xlu0 %104, %v100
  %v106 = vpop.permute.xlu0 %105
  %109 = vset.pattern.permute.xlu0 0
  %110 = vperm.xlu0 %109, %v101
  %v111 = vpop.permute.xlu0 %110
  %114 = vset.pattern.permute.xlu0 0
  %115 = vperm.xlu0 %114, %v102
  %v116 = vpop.permute.xlu0 %115
  %v121 = vunpack.c.l.b16 %v93
  %v122 = vunpack.c.l.b16 %v94
  %v123 = vunpack.c.l.b16 %v95
  %v124 = vpack.c.b16 %v122, %v121
  %v125 = vpack.c.b16 %v123, %v123
  %v130 = vunpack.c.l.b16 %v96
  %v131 = vunpack.c.l.b16 %v97
  %v132 = vunpack.c.l.b16 %v98
  %v133 = vunpack.c.l.b16 %v99
  %v134 = vpack.c.b16 %v131, %v130
  %v135 = vpack.c.b16 %v133, %v132
  %v139 = vsel %vm88, %v124, 0
  %v142 = vsel %vm88, %v125, 0
  %144 = vmatpush.bf16.msra.mxu0 0
  %145 = vmatpush.bf16.msra.mxu0 0
  %146 = vmatpush.bf16.msra.mxu0 0
  %147 = vmatpush.bf16.msra.mxu0 0
  %148 = vmatpush.bf16.msra.mxu0 0
  %149 = vmatpush.bf16.msra.mxu0 0
  %150 = vmatpush.bf16.msra.mxu0 %v135
  %151 = vmatpush.bf16.msra.mxu0 %v134
  %152 = vmatmul.bf16.gmra.mxu0 %v139
  %v153 = vpop.f32.mrf.mxu0
  %v154 = vadd.f32 %v106, %v153
  %v155 = vpop.f32.mrf.mxu0
  %v156 = vadd.f32 %v111, %v155
  %157 = vmatmul.bf16.gmra.mxu0 %v142
  %v158 = vpop.f32.mrf.mxu0
  %v159 = vadd.f32 %v116, %v158
  %v160 = vpop.f32.mrf.mxu0
  %161 = vdwg.mxu0
  %vm162 = vcmask 64512
  %163 = vst.msk [vmem:[%s7] sm:$0xff] %vm162, %v154
  %164 = vst.msk [vmem:[%s7 + $0x8] sm:$0xff] %vm162, %v156
  %vm165 = vcmask 58368
  %166 = vst.msk [vmem:[%s7 + $0x10] sm:$0x3] %vm165, %v159
  // Predicated region
  $region26: #{forward_once.13} parent=0 // pred_check
    _
  $region27: #{forward_once.13} parent=0 // pred_check_branch
    %168 = sbr.rel (0) target = $region29
  $region28: #{forward_once.13} parent=0 // pred_region
    _
  $region29: #{forward_once.13} parent=0 // pred_fallthru
    _
  // Predicated region
  $region30: #{forward_once.13} parent=0 // pred_check
    _
  $region31: #{forward_once.13} parent=0 // pred_check_branch
    %170 = sbr.rel (0) target = $region33
  $region32: #{forward_once.13} parent=0 // pred_region
    _
  $region33: #{forward_once.13} parent=0 // pred_fallthru
    _
  // Predicated region
  $region34: #{forward_once.13} parent=0 // pred_check
    _
  $region35: #{forward_once.13} parent=0 // pred_check_branch
    %172 = sbr.rel (0) target = $region37
  $region36: #{forward_once.13} parent=0 // pred_region
    _
  $region37: #{forward_once.13} parent=0 // pred_fallthru
    _
  // Predicated region
  $region38: #{forward_once.13} parent=0 // pred_check
    _
  $region39: #{forward_once.13} parent=0 // pred_check_branch
    %174 = sbr.rel (0) target = $region41
  $region40: #{forward_once.13} parent=0 // pred_region
    _
  $region41: #{forward_once.13} parent=0 // pred_fallthru
    _

// kernel: forward_once.12
$region0: #{forward_once.12}
  #allocation0 [shape = 'u32[]', space=smem, size = 0x4, offset = 0x4, fixed_abs, tag = 'smem constant byte address 0x4 - core index']
  #allocation1 [shape = 'u32[72,128]{1,0:T(1,128)}', space=vmem, size = 0x9000, scoped, tag = 'internal scratch']
  %s0 = inlined_call_operand.vmem [shape: bf16[16,128], index: 0, kind: input, shape index: {}]
  %s1 = inlined_call_operand.vmem [shape: bf16[9,32,16], index: 1, kind: input, shape index: {}]
  %s2 = inlined_call_operand.vmem [shape: s32[1,8], index: 2, kind: input, shape index: {}]
  %s3 = inlined_call_operand.vmem [shape: f32[32,1], index: 3, kind: input, shape index: {}]
  %s4 = inlined_call_operand.vmem [shape: bf16[32,8], index: 4, kind: output, shape index: {}]
  %s5 = sld [smem:[#allocation0]]
  $region26: #{forward_once.12} parent=0
    _
  %s7 = ssub.s32 1, %s5
  %s8 = scalar_select 0, %s7, %s5
  // Predicated region
  $region2: #{forward_once.12} parent=0 // pred_check
    _
  $region3: #{forward_once.12} parent=0 // pred_check_branch
    %10 = sbr.rel (0) target = $region5
  $region4: #{forward_once.12} parent=0 // pred_region
    _
  $region5: #{forward_once.12} parent=0 // pred_fallthru
    _
  // Predicated region
  $region6: #{forward_once.12} parent=0 // pred_check
    _
  $region7: #{forward_once.12} parent=0 // pred_check_branch
    %12 = sbr.rel (0) target = $region9
  $region8: #{forward_once.12} parent=0 // pred_region
    _
  $region9: #{forward_once.12} parent=0 // pred_fallthru
    _
  // Predicated region
  $region10: #{forward_once.12} parent=0 // pred_check
    _
  $region11: #{forward_once.12} parent=0 // pred_check_branch
    %14 = sbr.rel (0) target = $region13
  $region12: #{forward_once.12} parent=0 // pred_region
    _
  $region13: #{forward_once.12} parent=0 // pred_fallthru
    _
  // Predicated region
  $region14: #{forward_once.12} parent=0 // pred_check
    _
  $region15: #{forward_once.12} parent=0 // pred_check_branch
    %16 = sbr.rel (0) target = $region17
  $region16: #{forward_once.12} parent=0 // pred_region
    _
  $region17: #{forward_once.12} parent=0 // pred_fallthru
    _
  %v18 = vld [vmem:[%s2] sm:$0x1]
  %v19 = vand.u32 %v18, 65535
  %v20 = vshra.s32 %v18, 16
  %v21 = vld [vmem:[%s0] sm:$0xf]
  %v22 = vld [vmem:[%s0 + $0x4] sm:$0xf]
  %vm23 = vcmp.ge.s32.totalorder %v20, 1
  %vm24 = vcmp.ge.s32.totalorder %v19, 1
  %vm25 = vmand %vm23, %vm24
  %v26 = vsel %vm25, 1, 0
  %v27 = vcvt.s32.f32 %v26
  %v28 = vpack.c.bf16 %v27, %v27
  %v30 = vpack.i.b16 %v28, %v28
  %v32 = vperm.slane %v30, 0
  %v33 = vunpack.c.l.bf16 %v21
  %v34 = vunpack.c.l.bf16 %v22
  %v35 = vunpack.c.l.bf16 %v32
  %v36 = vmul.f32 %v33, %v35
  %v37 = vmul.f32 %v34, %v35
  %v38 = vpack.c.bf16 %v37, %v36
  %v39 = vld [vmem:[%s1] sm:$0xf]
  %v40 = vld [vmem:[%s1 + $0x4] sm:$0xf]
  %v41 = vld [vmem:[%s1 + $0x8] sm:$0xf]
  %v42 = vld [vmem:[%s1 + $0xc] sm:$0xf]
  %v43 = vsel %vm23, 1, 0
  %v44 = vcvt.s32.f32 %v43
  %v45 = vpack.c.bf16 %v44, %v44
  %v47 = vpack.i.b16 %v45, %v45
  %v49 = vperm.slane %v47, 0
  %v50 = vunpack.c.l.bf16 %v49
  %52 = vrot.lane.b32.xlu0 %v50, 1
  %v53 = vpop.permute.xlu0 %52
  %v55 = vmul.f32 %v33, %v53
  %v56 = vmul.f32 %v34, %v53
  %v57 = vpack.c.bf16 %v56, %v55
  %s58 = scalar_lea.vmem %s1, 16
  %v59 = vld [vmem:[%s58] sm:$0xf]
  %v60 = vld [vmem:[%s58 + $0x4] sm:$0xf]
  %v61 = vld [vmem:[%s58 + $0x8] sm:$0xf]
  %v62 = vld [vmem:[%s58 + $0xc] sm:$0xf]
  %v67 = vunpack.c.l.b16 %v59
  %v68 = vunpack.c.l.b16 %v60
  %v69 = vunpack.c.l.b16 %v61
  %v70 = vunpack.c.l.b16 %v62
  %v71 = vpack.c.b16 %v68, %v67
  %v72 = vpack.c.b16 %v70, %v69
  %74 = vrot.lane.b32.xlu0 %v57, 127
  %v75 = vpop.permute.xlu0 %74
  %vm77 = vcmask 130048
  %v79 = vsel %vm77, %v71, 0
  %v82 = vsel %vm77, %v72, 0
  %84 = vmatpush.bf16.msra.mxu0 0
  %85 = vmatpush.bf16.msra.mxu0 0
  %86 = vmatpush.bf16.msra.mxu0 0
  %87 = vmatpush.bf16.msra.mxu0 0
  %88 = vmatpush.bf16.msra.mxu0 0
  %89 = vmatpush.bf16.msra.mxu0 0
  %90 = vmatpush.bf16.msra.mxu0 0
  %91 = vmatpush.bf16.msra.mxu0 %v75
  %92 = vmatmul.bf16.gmra.mxu0 %v79
  %v93 = vpop.f32.mrf.mxu0
  %v94 = vadd.f32 0.0, %v93
  %v95 = vpop.f32.mrf.mxu0
  %v96 = vadd.f32 0.0, %v95
  %97 = vmatmul.bf16.gmra.mxu0 %v82
  %v98 = vpop.f32.mrf.mxu0
  %v99 = vadd.f32 0.0, %v98
  %v100 = vpop.f32.mrf.mxu0
  %v101 = vadd.f32 0.0, %v100
  %102 = vdwg.mxu0
  %v107 = vunpack.c.l.b16 %v39
  %v108 = vunpack.c.l.b16 %v40
  %v109 = vunpack.c.l.b16 %v41
  %v110 = vunpack.c.l.b16 %v42
  %v111 = vpack.c.b16 %v108, %v107
  %v112 = vpack.c.b16 %v110, %v109
  %v114 = vsel %vm77, %v111, 0
  %v117 = vsel %vm77, %v112, 0
  %119 = vmatpush.bf16.msra.mxu0 0
  %120 = vmatpush.bf16.msra.mxu0 0
  %121 = vmatpush.bf16.msra.mxu0 0
  %122 = vmatpush.bf16.msra.mxu0 0
  %123 = vmatpush.bf16.msra.mxu0 0
  %124 = vmatpush.bf16.msra.mxu0 0
  %125 = vmatpush.bf16.msra.mxu0 0
  %126 = vmatpush.bf16.msra.mxu0 %v38
  %127 = vmatmul.bf16.gmra.mxu0 %v114
  %v128 = vpop.f32.mrf.mxu0
  %v129 = vadd.f32 %v94, %v128
  %v130 = vpop.f32.mrf.mxu0
  %v131 = vadd.f32 %v96, %v130
  %132 = vmatmul.bf16.gmra.mxu0 %v117
  %v133 = vpop.f32.mrf.mxu0
  %v134 = vadd.f32 %v99, %v133
  %v135 = vpop.f32.mrf.mxu0
  %v136 = vadd.f32 %v101, %v135
  %137 = vdwg.mxu0
  %vm138 = vcmp.lt.s32.totalorder %v19, 1
  %vm139 = vmand %vm23, %vm138
  %v140 = vsel %vm139, 1, 0
  %v141 = vcvt.s32.f32 %v140
  %v142 = vpack.c.bf16 %v141, %v141
  %v144 = vpack.i.b16 %v142, %v142
  %v146 = vperm.slane %v144, 0
  %v147 = vunpack.c.l.bf16 %v146
  %149 = vrot.lane.b32.xlu0 %v147, 2
  %v150 = vpop.permute.xlu0 %149
  %v152 = vmul.f32 %v33, %v150
  %v153 = vmul.f32 %v34, %v150
  %v154 = vpack.c.bf16 %v153, %v152
  %s155 = scalar_lea.vmem %s1, 32
  %v156 = vld [vmem:[%s155] sm:$0xf]
  %v157 = vld [vmem:[%s155 + $0x4] sm:$0xf]
  %v158 = vld [vmem:[%s155 + $0x8] sm:$0xf]
  %v159 = vld [vmem:[%s155 + $0xc] sm:$0xf]
  %v164 = vunpack.c.l.b16 %v156
  %v165 = vunpack.c.l.b16 %v157
  %v166 = vunpack.c.l.b16 %v158
  %v167 = vunpack.c.l.b16 %v159
  %v168 = vpack.c.b16 %v165, %v164
  %v169 = vpack.c.b16 %v167, %v166
  %171 = vrot.lane.b32.xlu0 %v154, 126
  %v172 = vpop.permute.xlu0 %171
  %v175 = vsel %vm77, %v168, 0
  %v178 = vsel %vm77, %v169, 0
  %180 = vmatpush.bf16.msra.mxu0 0
  %181 = vmatpush.bf16.msra.mxu0 0
  %182 = vmatpush.bf16.msra.mxu0 0
  %183 = vmatpush.bf16.msra.mxu0 0
  %184 = vmatpush.bf16.msra.mxu0 0
  %185 = vmatpush.bf16.msra.mxu0 0
  %186 = vmatpush.bf16.msra.mxu0 0
  %187 = vmatpush.bf16.msra.mxu0 %v172
  %188 = vmatmul.bf16.gmra.mxu0 %v175
  %v189 = vpop.f32.mrf.mxu0
  %v190 = vadd.f32 0.0, %v189
  %v191 = vpop.f32.mrf.mxu0
  %v192 = vadd.f32 0.0, %v191
  %193 = vmatmul.bf16.gmra.mxu0 %v178
  %v194 = vpop.f32.mrf.mxu0
  %v195 = vadd.f32 0.0, %v194
  %v196 = vpop.f32.mrf.mxu0
  %v197 = vadd.f32 0.0, %v196
  %198 = vdwg.mxu0
  %v199 = vadd.f32 %v129, %v190
  %v200 = vadd.f32 %v131, %v192
  %v201 = vadd.f32 %v134, %v195
  %v202 = vadd.f32 %v136, %v197
  %v203 = vsel %vm24, 1, 0
  %v204 = vcvt.s32.f32 %v203
  %v205 = vpack.c.bf16 %v204, %v204
  %v207 = vpack.i.b16 %v205, %v205
  %v209 = vperm.slane %v207, 0
  %v210 = vunpack.c.l.bf16 %v209
  %212 = vrot.lane.b32.xlu0 %v210, 2
  %v213 = vpop.permute.xlu0 %212
  %v215 = vmul.f32 %v33, %v213
  %v216 = vmul.f32 %v34, %v213
  %v217 = vpack.c.bf16 %v216, %v215
  %s218 = scalar_lea.vmem %s1, 48
  %v219 = vld [vmem:[%s218] sm:$0xf]
  %v220 = vld [vmem:[%s218 + $0x4] sm:$0xf]
  %v221 = vld [vmem:[%s218 + $0x8] sm:$0xf]
  %v222 = vld [vmem:[%s218 + $0xc] sm:$0xf]
  %v227 = vunpack.c.l.b16 %v219
  %v228 = vunpack.c.l.b16 %v220
  %v229 = vunpack.c.l.b16 %v221
  %v230 = vunpack.c.l.b16 %v222
  %v231 = vpack.c.b16 %v228, %v227
  %v232 = vpack.c.b16 %v230, %v229
  %234 = vrot.lane.b32.xlu0 %v217, 126
  %v235 = vpop.permute.xlu0 %234
  %v238 = vsel %vm77, %v231, 0
  %v241 = vsel %vm77, %v232, 0
  %243 = vmatpush.bf16.msra.mxu0 0
  %244 = vmatpush.bf16.msra.mxu0 0
  %245 = vmatpush.bf16.msra.mxu0 0
  %246 = vmatpush.bf16.msra.mxu0 0
  %247 = vmatpush.bf16.msra.mxu0 0
  %248 = vmatpush.bf16.msra.mxu0 0
  %249 = vmatpush.bf16.msra.mxu0 0
  %250 = vmatpush.bf16.msra.mxu0 %v235
  %251 = vmatmul.bf16.gmra.mxu0 %v238
  %v252 = vpop.f32.mrf.mxu0
  %v253 = vadd.f32 0.0, %v252
  %v254 = vpop.f32.mrf.mxu0
  %v255 = vadd.f32 0.0, %v254
  %256 = vmatmul.bf16.gmra.mxu0 %v241
  %v257 = vpop.f32.mrf.mxu0
  %v258 = vadd.f32 0.0, %v257
  %v259 = vpop.f32.mrf.mxu0
  %v260 = vadd.f32 0.0, %v259
  %261 = vdwg.mxu0
  %v262 = vadd.f32 %v199, %v253
  %v263 = vadd.f32 %v200, %v255
  %v264 = vadd.f32 %v201, %v258
  %v265 = vadd.f32 %v202, %v260
  %s266 = scalar_lea.vmem %s1, 64
  %v267 = vld [vmem:[%s266] sm:$0xf]
  %v268 = vld [vmem:[%s266 + $0x4] sm:$0xf]
  %v269 = vld [vmem:[%s266 + $0x8] sm:$0xf]
  %v270 = vld [vmem:[%s266 + $0xc] sm:$0xf]
  %v275 = vunpack.c.l.b16 %v267
  %v276 = vunpack.c.l.b16 %v268
  %v277 = vunpack.c.l.b16 %v269
  %v278 = vunpack.c.l.b16 %v270
  %v279 = vpack.c.b16 %v276, %v275
  %v280 = vpack.c.b16 %v278, %v277
  %v283 = vunpack.c.l.b16 %v21
  %v284 = vunpack.c.l.b16 %v22
  %v285 = vpack.c.b16 %v284, %v283
  %286 = vrot.lane.b32.xlu0 %v285, 125
  %v287 = vpop.permute.xlu0 %286
  %v290 = vsel %vm77, %v279, 0
  %v293 = vsel %vm77, %v280, 0
  %295 = vmatpush.bf16.msra.mxu0 0
  %296 = vmatpush.bf16.msra.mxu0 0
  %297 = vmatpush.bf16.msra.mxu0 0
  %298 = vmatpush.bf16.msra.mxu0 0
  %299 = vmatpush.bf16.msra.mxu0 0
  %300 = vmatpush.bf16.msra.mxu0 0
  %301 = vmatpush.bf16.msra.mxu0 0
  %302 = vmatpush.bf16.msra.mxu0 %v287
  %303 = vmatmul.bf16.gmra.mxu0 %v290
  %v304 = vpop.f32.mrf.mxu0
  %v305 = vadd.f32 0.0, %v304
  %v306 = vpop.f32.mrf.mxu0
  %v307 = vadd.f32 0.0, %v306
  %308 = vmatmul.bf16.gmra.mxu0 %v293
  %v309 = vpop.f32.mrf.mxu0
  %v310 = vadd.f32 0.0, %v309
  %v311 = vpop.f32.mrf.mxu0
  %v312 = vadd.f32 0.0, %v311
  %313 = vdwg.mxu0
  %v314 = vadd.f32 %v262, %v305
  %v315 = vadd.f32 %v263, %v307
  %v316 = vadd.f32 %v264, %v310
  %v317 = vadd.f32 %v265, %v312
  %v318 = vsel %vm138, 1, 0
  %v319 = vcvt.s32.f32 %v318
  %v320 = vpack.c.bf16 %v319, %v319
  %v322 = vpack.i.b16 %v320, %v320
  %v324 = vperm.slane %v322, 0
  %v325 = vunpack.c.l.bf16 %v324
  %327 = vrot.lane.b32.xlu0 %v325, 4
  %v328 = vpop.permute.xlu0 %327
  %v330 = vmul.f32 %v33, %v328
  %v331 = vmul.f32 %v34, %v328
  %v332 = vpack.c.bf16 %v331, %v330
  %s333 = scalar_lea.vmem %s1, 80
  %v334 = vld [vmem:[%s333] sm:$0xf]
  %v335 = vld [vmem:[%s333 + $0x4] sm:$0xf]
  %v336 = vld [vmem:[%s333 + $0x8] sm:$0xf]
  %v337 = vld [vmem:[%s333 + $0xc] sm:$0xf]
  %v342 = vunpack.c.l.b16 %v334
  %v343 = vunpack.c.l.b16 %v335
  %v344 = vunpack.c.l.b16 %v336
  %v345 = vunpack.c.l.b16 %v337
  %v346 = vpack.c.b16 %v343, %v342
  %v347 = vpack.c.b16 %v345, %v344
  %349 = vrot.lane.b32.xlu0 %v332, 124
  %v350 = vpop.permute.xlu0 %349
  %v353 = vsel %vm77, %v346, 0
  %v356 = vsel %vm77, %v347, 0
  %358 = vmatpush.bf16.msra.mxu0 0
  %359 = vmatpush.bf16.msra.mxu0 0
  %360 = vmatpush.bf16.msra.mxu0 0
  %361 = vmatpush.bf16.msra.mxu0 0
  %362 = vmatpush.bf16.msra.mxu0 0
  %363 = vmatpush.bf16.msra.mxu0 0
  %364 = vmatpush.bf16.msra.mxu0 0
  %365 = vmatpush.bf16.msra.mxu0 %v350
  %366 = vmatmul.bf16.gmra.mxu0 %v353
  %v367 = vpop.f32.mrf.mxu0
  %v368 = vadd.f32 0.0, %v367
  %v369 = vpop.f32.mrf.mxu0
  %v370 = vadd.f32 0.0, %v369
  %371 = vmatmul.bf16.gmra.mxu0 %v356
  %v372 = vpop.f32.mrf.mxu0
  %v373 = vadd.f32 0.0, %v372
  %v374 = vpop.f32.mrf.mxu0
  %v375 = vadd.f32 0.0, %v374
  %376 = vdwg.mxu0
  %v377 = vadd.f32 %v314, %v368
  %v378 = vadd.f32 %v315, %v370
  %v379 = vadd.f32 %v316, %v373
  %v380 = vadd.f32 %v317, %v375
  %vm381 = vcmp.lt.s32.totalorder %v20, 1
  %vm382 = vmand %vm381, %vm24
  %v383 = vsel %vm382, 1, 0
  %v384 = vcvt.s32.f32 %v383
  %v385 = vpack.c.bf16 %v384, %v384
  %v387 = vpack.i.b16 %v385, %v385
  %v389 = vperm.slane %v387, 0
  %v390 = vunpack.c.l.bf16 %v389
  %392 = vrot.lane.b32.xlu0 %v390, 4
  %v393 = vpop.permute.xlu0 %392
  %v395 = vmul.f32 %v33, %v393
  %v396 = vmul.f32 %v34, %v393
  %v397 = vpack.c.bf16 %v396, %v395
  %s398 = scalar_lea.vmem %s1, 96
  %v399 = vld [vmem:[%s398] sm:$0xf]
  %v400 = vld [vmem:[%s398 + $0x4] sm:$0xf]
  %v401 = vld [vmem:[%s398 + $0x8] sm:$0xf]
  %v402 = vld [vmem:[%s398 + $0xc] sm:$0xf]
  %v407 = vunpack.c.l.b16 %v399
  %v408 = vunpack.c.l.b16 %v400
  %v409 = vunpack.c.l.b16 %v401
  %v410 = vunpack.c.l.b16 %v402
  %v411 = vpack.c.b16 %v408, %v407
  %v412 = vpack.c.b16 %v410, %v409
  %414 = vrot.lane.b32.xlu0 %v397, 124
  %v415 = vpop.permute.xlu0 %414
  %v418 = vsel %vm77, %v411, 0
  %v421 = vsel %vm77, %v412, 0
  %423 = vmatpush.bf16.msra.mxu0 0
  %424 = vmatpush.bf16.msra.mxu0 0
  %425 = vmatpush.bf16.msra.mxu0 0
  %426 = vmatpush.bf16.msra.mxu0 0
  %427 = vmatpush.bf16.msra.mxu0 0
  %428 = vmatpush.bf16.msra.mxu0 0
  %429 = vmatpush.bf16.msra.mxu0 0
  %430 = vmatpush.bf16.msra.mxu0 %v415
  %431 = vmatmul.bf16.gmra.mxu0 %v418
  %v432 = vpop.f32.mrf.mxu0
  %v433 = vadd.f32 0.0, %v432
  %v434 = vpop.f32.mrf.mxu0
  %v435 = vadd.f32 0.0, %v434
  %436 = vmatmul.bf16.gmra.mxu0 %v421
  %v437 = vpop.f32.mrf.mxu0
  %v438 = vadd.f32 0.0, %v437
  %v439 = vpop.f32.mrf.mxu0
  %v440 = vadd.f32 0.0, %v439
  %441 = vdwg.mxu0
  %v442 = vadd.f32 %v377, %v433
  %v443 = vadd.f32 %v378, %v435
  %v444 = vadd.f32 %v379, %v438
  %v445 = vadd.f32 %v380, %v440
  %v446 = vsel %vm381, 1, 0
  %v447 = vcvt.s32.f32 %v446
  %v448 = vpack.c.bf16 %v447, %v447
  %v450 = vpack.i.b16 %v448, %v448
  %v452 = vperm.slane %v450, 0
  %v453 = vunpack.c.l.bf16 %v452
  %455 = vrot.lane.b32.xlu0 %v453, 5
  %v456 = vpop.permute.xlu0 %455
  %v458 = vmul.f32 %v33, %v456
  %v459 = vmul.f32 %v34, %v456
  %v460 = vpack.c.bf16 %v459, %v458
  %s461 = scalar_lea.vmem %s1, 112
  %v462 = vld [vmem:[%s461] sm:$0xf]
  %v463 = vld [vmem:[%s461 + $0x4] sm:$0xf]
  %v464 = vld [vmem:[%s461 + $0x8] sm:$0xf]
  %v465 = vld [vmem:[%s461 + $0xc] sm:$0xf]
  %v470 = vunpack.c.l.b16 %v462
  %v471 = vunpack.c.l.b16 %v463
  %v472 = vunpack.c.l.b16 %v464
  %v473 = vunpack.c.l.b16 %v465
  %v474 = vpack.c.b16 %v471, %v470
  %v475 = vpack.c.b16 %v473, %v472
  %477 = vrot.lane.b32.xlu0 %v460, 123
  %v478 = vpop.permute.xlu0 %477
  %v481 = vsel %vm77, %v474, 0
  %v484 = vsel %vm77, %v475, 0
  %486 = vmatpush.bf16.msra.mxu0 0
  %487 = vmatpush.bf16.msra.mxu0 0
  %488 = vmatpush.bf16.msra.mxu0 0
  %489 = vmatpush.bf16.msra.mxu0 0
  %490 = vmatpush.bf16.msra.mxu0 0
  %491 = vmatpush.bf16.msra.mxu0 0
  %492 = vmatpush.bf16.msra.mxu0 0
  %493 = vmatpush.bf16.msra.mxu0 %v478
  %494 = vmatmul.bf16.gmra.mxu0 %v481
  %v495 = vpop.f32.mrf.mxu0
  %v496 = vadd.f32 0.0, %v495
  %v497 = vpop.f32.mrf.mxu0
  %v498 = vadd.f32 0.0, %v497
  %499 = vmatmul.bf16.gmra.mxu0 %v484
  %v500 = vpop.f32.mrf.mxu0
  %v501 = vadd.f32 0.0, %v500
  %v502 = vpop.f32.mrf.mxu0
  %v503 = vadd.f32 0.0, %v502
  %504 = vdwg.mxu0
  %v505 = vadd.f32 %v442, %v496
  %v506 = vadd.f32 %v443, %v498
  %v507 = vadd.f32 %v444, %v501
  %v508 = vadd.f32 %v445, %v503
  %vm509 = vmand %vm381, %vm138
  %v510 = vsel %vm509, 1, 0
  %v511 = vcvt.s32.f32 %v510
  %v512 = vpack.c.bf16 %v511, %v511
  %v514 = vpack.i.b16 %v512, %v512
  %v516 = vperm.slane %v514, 0
  %v517 = vunpack.c.l.bf16 %v516
  %519 = vrot.lane.b32.xlu0 %v517, 6
  %v520 = vpop.permute.xlu0 %519
  %v522 = vmul.f32 %v33, %v520
  %v523 = vmul.f32 %v34, %v520
  %v524 = vpack.c.bf16 %v523, %v522
  %s525 = scalar_lea.vmem %s1, 128
  %v526 = vld [vmem:[%s525] sm:$0xf]
  %v527 = vld [vmem:[%s525 + $0x4] sm:$0xf]
  %v528 = vld [vmem:[%s525 + $0x8] sm:$0xf]
  %v529 = vld [vmem:[%s525 + $0xc] sm:$0xf]
  %v534 = vunpack.c.l.b16 %v526
  %v535 = vunpack.c.l.b16 %v527
  %v536 = vunpack.c.l.b16 %v528
  %v537 = vunpack.c.l.b16 %v529
  %v538 = vpack.c.b16 %v535, %v534
  %v539 = vpack.c.b16 %v537, %v536
  %541 = vrot.lane.b32.xlu0 %v524, 122
  %v542 = vpop.permute.xlu0 %541
  %v545 = vsel %vm77, %v538, 0
  %v548 = vsel %vm77, %v539, 0
  %550 = vmatpush.bf16.msra.mxu0 0
  %551 = vmatpush.bf16.msra.mxu0 0
  %552 = vmatpush.bf16.msra.mxu0 0
  %553 = vmatpush.bf16.msra.mxu0 0
  %554 = vmatpush.bf16.msra.mxu0 0
  %555 = vmatpush.bf16.msra.mxu0 0
  %556 = vmatpush.bf16.msra.mxu0 0
  %557 = vmatpush.bf16.msra.mxu0 %v542
  %558 = vmatmul.bf16.gmra.mxu0 %v545
  %v559 = vpop.f32.mrf.mxu0
  %v560 = vadd.f32 0.0, %v559
  %v561 = vpop.f32.mrf.mxu0
  %v562 = vadd.f32 0.0, %v561
  %563 = vmatmul.bf16.gmra.mxu0 %v548
  %v564 = vpop.f32.mrf.mxu0
  %v565 = vadd.f32 0.0, %v564
  %v566 = vpop.f32.mrf.mxu0
  %v567 = vadd.f32 0.0, %v566
  %568 = vdwg.mxu0
  %v569 = vadd.f32 %v505, %v560
  %v570 = vadd.f32 %v506, %v562
  %v571 = vadd.f32 %v507, %v565
  %v572 = vadd.f32 %v508, %v567
  %v573 = vld [vmem:[%s3] sm:$0xff]
  %v574 = vld [vmem:[%s3 + $0x8] sm:$0xff]
  %v575 = vld [vmem:[%s3 + $0x10] sm:$0xff]
  %v576 = vld [vmem:[%s3 + $0x18] sm:$0xff]
  %578 = vset.pattern.permute.xlu0 0
  %579 = vperm.xlu0 %578, %v573
  %v580 = vpop.permute.xlu0 %579
  %583 = vset.pattern.permute.xlu0 0
  %584 = vperm.xlu0 %583, %v574
  %v585 = vpop.permute.xlu0 %584
  %588 = vset.pattern.permute.xlu0 0
  %589 = vperm.xlu0 %588, %v575
  %v590 = vpop.permute.xlu0 %589
  %593 = vset.pattern.permute.xlu0 0
  %594 = vperm.xlu0 %593, %v576
  %v595 = vpop.permute.xlu0 %594
  %v597 = vadd.f32 %v569, %v580
  %v598 = vadd.f32 %v570, %v585
  %v599 = vadd.f32 %v571, %v590
  %v600 = vadd.f32 %v572, %v595
  %vm601 = vcmp.gt.f32.partialorder %v597, 0.0
  %vm602 = vcmp.gt.f32.partialorder %v598, 0.0
  %vm603 = vcmp.gt.f32.partialorder %v599, 0.0
  %vm604 = vcmp.gt.f32.partialorder %v600, 0.0
  %v605 = vmul.f32 %v597, 0.1
  %v606 = vmul.f32 %v598, 0.1
  %v607 = vmul.f32 %v599, 0.1
  %v608 = vmul.f32 %v600, 0.1
  %v609 = vsel %vm601, %v597, %v605
  %v610 = vsel %vm602, %v598, %v606
  %v611 = vsel %vm603, %v599, %v607
  %v612 = vsel %vm604, %v600, %v608
  %v613 = vpack.c.bf16 %v609, %v609
  %v614 = vpack.c.bf16 %v610, %v610
  %v615 = vpack.c.bf16 %v611, %v611
  %v616 = vpack.c.bf16 %v612, %v612
  %vm617 = vcmask 60416
  %618 = vst.msk [vmem:[%s4] sm:$0xf] %vm617, %v613
  %619 = vst.msk [vmem:[%s4 + $0x4] sm:$0xf] %vm617, %v614
  %620 = vst.msk [vmem:[%s4 + $0x8] sm:$0xf] %vm617, %v615
  %621 = vst.msk [vmem:[%s4 + $0xc] sm:$0xf] %vm617, %v616
  // Predicated region
  $region18: #{forward_once.12} parent=0 // pred_check
    _
  $region19: #{forward_once.12} parent=0 // pred_check_branch
    %623 = sbr.rel (0) target = $region21
  $region20: #{forward_once.12} parent=0 // pred_region
    _
  $region21: #{forward_once.12} parent=0 // pred_fallthru
    _
  // Predicated region
  $region22: #{forward_once.12} parent=0 // pred_check
    _
  $region23: #{forward_once.12} parent=0 // pred_check_branch
    %625 = sbr.rel (0) target = $region25
  $region24: #{forward_once.12} parent=0 // pred_region
    _
  $region25: #{forward_once.12} parent=0 // pred_fallthru
    _

// kernel: forward_once.11
$region0: #{forward_once.11}
  #allocation0 [shape = 'u32[]', space=smem, size = 0x4, offset = 0x4, fixed_abs, tag = 'smem constant byte address 0x4 - core index']
  #allocation1 [shape = 'u32[72,128]{1,0:T(1,128)}', space=vmem, size = 0x9000, scoped, tag = 'internal scratch']
  %s0 = inlined_call_operand.vmem [shape: bf16[16,128], index: 0, kind: input, shape index: {}]
  %s1 = inlined_call_operand.vmem [shape: bf16[9,16,16], index: 1, kind: input, shape index: {}]
  %s2 = inlined_call_operand.vmem [shape: bf16[16,128], index: 2, kind: input, shape index: {}]
  %s3 = inlined_call_operand.vmem [shape: bf16[9,16,16], index: 3, kind: input, shape index: {}]
  %s4 = inlined_call_operand.vmem [shape: s32[1,32], index: 4, kind: input, shape index: {}]
  %s5 = inlined_call_operand.vmem [shape: f32[16,1], index: 5, kind: input, shape index: {}]
  %s6 = inlined_call_operand.vmem [shape: bf16[16,32], index: 6, kind: output, shape index: {}]
  %s7 = sld [smem:[#allocation0]]
  $region34: #{forward_once.11} parent=0
    _
  %s9 = ssub.s32 1, %s7
  %s10 = scalar_select 0, %s9, %s7
  // Predicated region
  $region2: #{forward_once.11} parent=0 // pred_check
    _
  $region3: #{forward_once.11} parent=0 // pred_check_branch
    %12 = sbr.rel (0) target = $region5
  $region4: #{forward_once.11} parent=0 // pred_region
    _
  $region5: #{forward_once.11} parent=0 // pred_fallthru
    _
  // Predicated region
  $region6: #{forward_once.11} parent=0 // pred_check
    _
  $region7: #{forward_once.11} parent=0 // pred_check_branch
    %14 = sbr.rel (0) target = $region9
  $region8: #{forward_once.11} parent=0 // pred_region
    _
  $region9: #{forward_once.11} parent=0 // pred_fallthru
    _
  // Predicated region
  $region10: #{forward_once.11} parent=0 // pred_check
    _
  $region11: #{forward_once.11} parent=0 // pred_check_branch
    %16 = sbr.rel (0) target = $region13
  $region12: #{forward_once.11} parent=0 // pred_region
    _
  $region13: #{forward_once.11} parent=0 // pred_fallthru
    _
  // Predicated region
  $region14: #{forward_once.11} parent=0 // pred_check
    _
  $region15: #{forward_once.11} parent=0 // pred_check_branch
    %18 = sbr.rel (0) target = $region17
  $region16: #{forward_once.11} parent=0 // pred_region
    _
  $region17: #{forward_once.11} parent=0 // pred_fallthru
    _
  // Predicated region
  $region18: #{forward_once.11} parent=0 // pred_check
    _
  $region19: #{forward_once.11} parent=0 // pred_check_branch
    %20 = sbr.rel (0) target = $region21
  $region20: #{forward_once.11} parent=0 // pred_region
    _
  $region21: #{forward_once.11} parent=0 // pred_fallthru
    _
  // Predicated region
  $region22: #{forward_once.11} parent=0 // pred_check
    _
  $region23: #{forward_once.11} parent=0 // pred_check_branch
    %22 = sbr.rel (0) target = $region25
  $region24: #{forward_once.11} parent=0 // pred_region
    _
  $region25: #{forward_once.11} parent=0 // pred_fallthru
    _
  %v24 = vld [vmem:[%s4] sm:$0x1]
  %v25 = vand.u32 %v24, 65535
  %v26 = vshra.s32 %v24, 16
  %v27 = vld [vmem:[%s0] sm:$0xf]
  %v28 = vld [vmem:[%s0 + $0x4] sm:$0xf]
  %vm29 = vcmp.ge.s32.totalorder %v26, 1
  %vm30 = vcmp.ge.s32.totalorder %v25, 1
  %vm31 = vmand %vm29, %vm30
  %v32 = vsel %vm31, 1, 0
  %v33 = vcvt.s32.f32 %v32
  %v34 = vpack.c.bf16 %v33, %v33
  %v36 = vpack.i.b16 %v34, %v34
  %v38 = vperm.slane %v36, 0
  %v39 = vunpack.c.l.bf16 %v27
  %v40 = vunpack.c.l.bf16 %v28
  %v41 = vunpack.c.l.bf16 %v38
  %v42 = vmul.f32 %v39, %v41
  %v43 = vmul.f32 %v40, %v41
  %v44 = vpack.c.bf16 %v43, %v42
  %v45 = vld [vmem:[%s1] sm:$0xf]
  %v46 = vld [vmem:[%s1 + $0x4] sm:$0xf]
  %v47 = vsel %vm29, 1, 0
  %v48 = vcvt.s32.f32 %v47
  %v49 = vpack.c.bf16 %v48, %v48
  %v51 = vpack.i.b16 %v49, %v49
  %v53 = vperm.slane %v51, 0
  %v54 = vunpack.c.l.bf16 %v53
  %56 = vrot.lane.b32.xlu0 %v54, 1
  %v57 = vpop.permute.xlu0 %56
  %v59 = vmul.f32 %v39, %v57
  %v60 = vmul.f32 %v40, %v57
  %v61 = vpack.c.bf16 %v60, %v59
  %s62 = scalar_lea.vmem %s1, 8
  %v63 = vld [vmem:[%s62] sm:$0xf]
  %v64 = vld [vmem:[%s62 + $0x4] sm:$0xf]
  %v67 = vunpack.c.l.b16 %v63
  %v68 = vunpack.c.l.b16 %v64
  %v69 = vpack.c.b16 %v68, %v67
  %71 = vrot.lane.b32.xlu0 %v61, 127
  %v72 = vpop.permute.xlu0 %71
  %vm74 = vcmask 130048
  %v76 = vsel %vm74, %v69, 0
  %78 = vmatpush.bf16.msra.mxu0 0
  %79 = vmatpush.bf16.msra.mxu0 0
  %80 = vmatpush.bf16.msra.mxu0 0
  %81 = vmatpush.bf16.msra.mxu0 0
  %82 = vmatpush.bf16.msra.mxu0 0
  %83 = vmatpush.bf16.msra.mxu0 0
  %84 = vmatpush.bf16.msra.mxu0 0
  %85 = vmatpush.bf16.msra.mxu0 %v72
  %86 = vmatmul.bf16.gmra.mxu0 %v76
  %v87 = vpop.f32.mrf.mxu0
  %v88 = vadd.f32 0.0, %v87
  %v89 = vpop.f32.mrf.mxu0
  %v90 = vadd.f32 0.0, %v89
  %91 = vdwg.mxu0
  %v94 = vunpack.c.l.b16 %v45
  %v95 = vunpack.c.l.b16 %v46
  %v96 = vpack.c.b16 %v95, %v94
  %v98 = vsel %vm74, %v96, 0
  %100 = vmatpush.bf16.msra.mxu0 0
  %101 = vmatpush.bf16.msra.mxu0 0
  %102 = vmatpush.bf16.msra.mxu0 0
  %103 = vmatpush.bf16.msra.mxu0 0
  %104 = vmatpush.bf16.msra.mxu0 0
  %105 = vmatpush.bf16.msra.mxu0 0
  %106 = vmatpush.bf16.msra.mxu0 0
  %107 = vmatpush.bf16.msra.mxu0 %v44
  %108 = vmatmul.bf16.gmra.mxu0 %v98
  %v109 = vpop.f32.mrf.mxu0
  %v110 = vadd.f32 %v88, %v109
  %v111 = vpop.f32.mrf.mxu0
  %v112 = vadd.f32 %v90, %v111
  %113 = vdwg.mxu0
  %vm114 = vcmp.lt.s32.totalorder %v25, 3
  %vm115 = vmand %vm29, %vm114
  %v116 = vsel %vm115, 1, 0
  %v117 = vcvt.s32.f32 %v116
  %v118 = vpack.c.bf16 %v117, %v117
  %v120 = vpack.i.b16 %v118, %v118
  %v122 = vperm.slane %v120, 0
  %v123 = vunpack.c.l.bf16 %v122
  %125 = vrot.lane.b32.xlu0 %v123, 2
  %v126 = vpop.permute.xlu0 %125
  %v128 = vmul.f32 %v39, %v126
  %v129 = vmul.f32 %v40, %v126
  %v130 = vpack.c.bf16 %v129, %v128
  %s131 = scalar_lea.vmem %s1, 16
  %v132 = vld [vmem:[%s131] sm:$0xf]
  %v133 = vld [vmem:[%s131 + $0x4] sm:$0xf]
  %v136 = vunpack.c.l.b16 %v132
  %v137 = vunpack.c.l.b16 %v133
  %v138 = vpack.c.b16 %v137, %v136
  %140 = vrot.lane.b32.xlu0 %v130, 126
  %v141 = vpop.permute.xlu0 %140
  %v144 = vsel %vm74, %v138, 0
  %146 = vmatpush.bf16.msra.mxu0 0
  %147 = vmatpush.bf16.msra.mxu0 0
  %148 = vmatpush.bf16.msra.mxu0 0
  %149 = vmatpush.bf16.msra.mxu0 0
  %150 = vmatpush.bf16.msra.mxu0 0
  %151 = vmatpush.bf16.msra.mxu0 0
  %152 = vmatpush.bf16.msra.mxu0 0
  %153 = vmatpush.bf16.msra.mxu0 %v141
  %154 = vmatmul.bf16.gmra.mxu0 %v144
  %v155 = vpop.f32.mrf.mxu0
  %v156 = vadd.f32 0.0, %v155
  %v157 = vpop.f32.mrf.mxu0
  %v158 = vadd.f32 0.0, %v157
  %159 = vdwg.mxu0
  %v160 = vadd.f32 %v110, %v156
  %v161 = vadd.f32 %v112, %v158
  %v162 = vsel %vm30, 1, 0
  %v163 = vcvt.s32.f32 %v162
  %v164 = vpack.c.bf16 %v163, %v163
  %v166 = vpack.i.b16 %v164, %v164
  %v168 = vperm.slane %v166, 0
  %v169 = vunpack.c.l.bf16 %v168
  %171 = vrot.lane.b32.xlu0 %v169, 4
  %v172 = vpop.permute.xlu0 %171
  %v174 = vmul.f32 %v39, %v172
  %v175 = vmul.f32 %v40, %v172
  %v176 = vpack.c.bf16 %v175, %v174
  %s177 = scalar_lea.vmem %s1, 24
  %v178 = vld [vmem:[%s177] sm:$0xf]
  %v179 = vld [vmem:[%s177 + $0x4] sm:$0xf]
  %v182 = vunpack.c.l.b16 %v178
  %v183 = vunpack.c.l.b16 %v179
  %v184 = vpack.c.b16 %v183, %v182
  %186 = vrot.lane.b32.xlu0 %v176, 124
  %v187 = vpop.permute.xlu0 %186
  %v190 = vsel %vm74, %v184, 0
  %192 = vmatpush.bf16.msra.mxu0 0
  %193 = vmatpush.bf16.msra.mxu0 0
  %194 = vmatpush.bf16.msra.mxu0 0
  %195 = vmatpush.bf16.msra.mxu0 0
  %196 = vmatpush.bf16.msra.mxu0 0
  %197 = vmatpush.bf16.msra.mxu0 0
  %198 = vmatpush.bf16.msra.mxu0 0
  %199 = vmatpush.bf16.msra.mxu0 %v187
  %200 = vmatmul.bf16.gmra.mxu0 %v190
  %v201 = vpop.f32.mrf.mxu0
  %v202 = vadd.f32 0.0, %v201
  %v203 = vpop.f32.mrf.mxu0
  %v204 = vadd.f32 0.0, %v203
  %205 = vdwg.mxu0
  %v206 = vadd.f32 %v160, %v202
  %v207 = vadd.f32 %v161, %v204
  %s208 = scalar_lea.vmem %s1, 32
  %v209 = vld [vmem:[%s208] sm:$0xf]
  %v210 = vld [vmem:[%s208 + $0x4] sm:$0xf]
  %v213 = vunpack.c.l.b16 %v209
  %v214 = vunpack.c.l.b16 %v210
  %v215 = vpack.c.b16 %v214, %v213
  %v218 = vunpack.c.l.b16 %v27
  %v219 = vunpack.c.l.b16 %v28
  %v220 = vpack.c.b16 %v219, %v218
  %221 = vrot.lane.b32.xlu0 %v220, 123
  %v222 = vpop.permute.xlu0 %221
  %v225 = vsel %vm74, %v215, 0
  %227 = vmatpush.bf16.msra.mxu0 0
  %228 = vmatpush.bf16.msra.mxu0 0
  %229 = vmatpush.bf16.msra.mxu0 0
  %230 = vmatpush.bf16.msra.mxu0 0
  %231 = vmatpush.bf16.msra.mxu0 0
  %232 = vmatpush.bf16.msra.mxu0 0
  %233 = vmatpush.bf16.msra.mxu0 0
  %234 = vmatpush.bf16.msra.mxu0 %v222
  %235 = vmatmul.bf16.gmra.mxu0 %v225
  %v236 = vpop.f32.mrf.mxu0
  %v237 = vadd.f32 0.0, %v236
  %v238 = vpop.f32.mrf.mxu0
  %v239 = vadd.f32 0.0, %v238
  %240 = vdwg.mxu0
  %v241 = vadd.f32 %v206, %v237
  %v242 = vadd.f32 %v207, %v239
  %v243 = vsel %vm114, 1, 0
  %v244 = vcvt.s32.f32 %v243
  %v245 = vpack.c.bf16 %v244, %v244
  %v247 = vpack.i.b16 %v245, %v245
  %v249 = vperm.slane %v247, 0
  %v250 = vunpack.c.l.bf16 %v249
  %252 = vrot.lane.b32.xlu0 %v250, 6
  %v253 = vpop.permute.xlu0 %252
  %v255 = vmul.f32 %v39, %v253
  %v256 = vmul.f32 %v40, %v253
  %v257 = vpack.c.bf16 %v256, %v255
  %s258 = scalar_lea.vmem %s1, 40
  %v259 = vld [vmem:[%s258] sm:$0xf]
  %v260 = vld [vmem:[%s258 + $0x4] sm:$0xf]
  %v263 = vunpack.c.l.b16 %v259
  %v264 = vunpack.c.l.b16 %v260
  %v265 = vpack.c.b16 %v264, %v263
  %267 = vrot.lane.b32.xlu0 %v257, 122
  %v268 = vpop.permute.xlu0 %267
  %v271 = vsel %vm74, %v265, 0
  %273 = vmatpush.bf16.msra.mxu0 0
  %274 = vmatpush.bf16.msra.mxu0 0
  %275 = vmatpush.bf16.msra.mxu0 0
  %276 = vmatpush.bf16.msra.mxu0 0
  %277 = vmatpush.bf16.msra.mxu0 0
  %278 = vmatpush.bf16.msra.mxu0 0
  %279 = vmatpush.bf16.msra.mxu0 0
  %280 = vmatpush.bf16.msra.mxu0 %v268
  %281 = vmatmul.bf16.gmra.mxu0 %v271
  %v282 = vpop.f32.mrf.mxu0
  %v283 = vadd.f32 0.0, %v282
  %v284 = vpop.f32.mrf.mxu0
  %v285 = vadd.f32 0.0, %v284
  %286 = vdwg.mxu0
  %v287 = vadd.f32 %v241, %v283
  %v288 = vadd.f32 %v242, %v285
  %vm289 = vcmp.lt.s32.totalorder %v26, 3
  %vm290 = vmand %vm289, %vm30
  %v291 = vsel %vm290, 1, 0
  %v292 = vcvt.s32.f32 %v291
  %v293 = vpack.c.bf16 %v292, %v292
  %v295 = vpack.i.b16 %v293, %v293
  %v297 = vperm.slane %v295, 0
  %v298 = vunpack.c.l.bf16 %v297
  %300 = vrot.lane.b32.xlu0 %v298, 8
  %v301 = vpop.permute.xlu0 %300
  %v303 = vmul.f32 %v39, %v301
  %v304 = vmul.f32 %v40, %v301
  %v305 = vpack.c.bf16 %v304, %v303
  %s306 = scalar_lea.vmem %s1, 48
  %v307 = vld [vmem:[%s306] sm:$0xf]
  %v308 = vld [vmem:[%s306 + $0x4] sm:$0xf]
  %v311 = vunpack.c.l.b16 %v307
  %v312 = vunpack.c.l.b16 %v308
  %v313 = vpack.c.b16 %v312, %v311
  %315 = vrot.lane.b32.xlu0 %v305, 120
  %v316 = vpop.permute.xlu0 %315
  %v319 = vsel %vm74, %v313, 0
  %321 = vmatpush.bf16.msra.mxu0 0
  %322 = vmatpush.bf16.msra.mxu0 0
  %323 = vmatpush.bf16.msra.mxu0 0
  %324 = vmatpush.bf16.msra.mxu0 0
  %325 = vmatpush.bf16.msra.mxu0 0
  %326 = vmatpush.bf16.msra.mxu0 0
  %327 = vmatpush.bf16.msra.mxu0 0
  %328 = vmatpush.bf16.msra.mxu0 %v316
  %329 = vmatmul.bf16.gmra.mxu0 %v319
  %v330 = vpop.f32.mrf.mxu0
  %v331 = vadd.f32 0.0, %v330
  %v332 = vpop.f32.mrf.mxu0
  %v333 = vadd.f32 0.0, %v332
  %334 = vdwg.mxu0
  %v335 = vadd.f32 %v287, %v331
  %v336 = vadd.f32 %v288, %v333
  %v337 = vsel %vm289, 1, 0
  %v338 = vcvt.s32.f32 %v337
  %v339 = vpack.c.bf16 %v338, %v338
  %v341 = vpack.i.b16 %v339, %v339
  %v343 = vperm.slane %v341, 0
  %v344 = vunpack.c.l.bf16 %v343
  %346 = vrot.lane.b32.xlu0 %v344, 9
  %v347 = vpop.permute.xlu0 %346
  %v349 = vmul.f32 %v39, %v347
  %v350 = vmul.f32 %v40, %v347
  %v351 = vpack.c.bf16 %v350, %v349
  %s352 = scalar_lea.vmem %s1, 56
  %v353 = vld [vmem:[%s352] sm:$0xf]
  %v354 = vld [vmem:[%s352 + $0x4] sm:$0xf]
  %v357 = vunpack.c.l.b16 %v353
  %v358 = vunpack.c.l.b16 %v354
  %v359 = vpack.c.b16 %v358, %v357
  %361 = vrot.lane.b32.xlu0 %v351, 119
  %v362 = vpop.permute.xlu0 %361
  %v365 = vsel %vm74, %v359, 0
  %367 = vmatpush.bf16.msra.mxu0 0
  %368 = vmatpush.bf16.msra.mxu0 0
  %369 = vmatpush.bf16.msra.mxu0 0
  %370 = vmatpush.bf16.msra.mxu0 0
  %371 = vmatpush.bf16.msra.mxu0 0
  %372 = vmatpush.bf16.msra.mxu0 0
  %373 = vmatpush.bf16.msra.mxu0 0
  %374 = vmatpush.bf16.msra.mxu0 %v362
  %375 = vmatmul.bf16.gmra.mxu0 %v365
  %v376 = vpop.f32.mrf.mxu0
  %v377 = vadd.f32 0.0, %v376
  %v378 = vpop.f32.mrf.mxu0
  %v379 = vadd.f32 0.0, %v378
  %380 = vdwg.mxu0
  %v381 = vadd.f32 %v335, %v377
  %v382 = vadd.f32 %v336, %v379
  %vm383 = vmand %vm289, %vm114
  %v384 = vsel %vm383, 1, 0
  %v385 = vcvt.s32.f32 %v384
  %v386 = vpack.c.bf16 %v385, %v385
  %v388 = vpack.i.b16 %v386, %v386
  %v390 = vperm.slane %v388, 0
  %v391 = vunpack.c.l.bf16 %v390
  %393 = vrot.lane.b32.xlu0 %v391, 10
  %v394 = vpop.permute.xlu0 %393
  %v396 = vmul.f32 %v39, %v394
  %v397 = vmul.f32 %v40, %v394
  %v398 = vpack.c.bf16 %v397, %v396
  %s399 = scalar_lea.vmem %s1, 64
  %v400 = vld [vmem:[%s399] sm:$0xf]
  %v401 = vld [vmem:[%s399 + $0x4] sm:$0xf]
  %v404 = vunpack.c.l.b16 %v400
  %v405 = vunpack.c.l.b16 %v401
  %v406 = vpack.c.b16 %v405, %v404
  %408 = vrot.lane.b32.xlu0 %v398, 118
  %v409 = vpop.permute.xlu0 %408
  %v412 = vsel %vm74, %v406, 0
  %414 = vmatpush.bf16.msra.mxu0 0
  %415 = vmatpush.bf16.msra.mxu0 0
  %416 = vmatpush.bf16.msra.mxu0 0
  %417 = vmatpush.bf16.msra.mxu0 0
  %418 = vmatpush.bf16.msra.mxu0 0
  %419 = vmatpush.bf16.msra.mxu0 0
  %420 = vmatpush.bf16.msra.mxu0 0
  %421 = vmatpush.bf16.msra.mxu0 %v409
  %422 = vmatmul.bf16.gmra.mxu0 %v412
  %v423 = vpop.f32.mrf.mxu0
  %v424 = vadd.f32 0.0, %v423
  %v425 = vpop.f32.mrf.mxu0
  %v426 = vadd.f32 0.0, %v425
  %427 = vdwg.mxu0
  %v428 = vadd.f32 %v381, %v424
  %v429 = vadd.f32 %v382, %v426
  %v430 = vld [vmem:[%s2] sm:$0xf]
  %v431 = vld [vmem:[%s2 + $0x4] sm:$0xf]
  %v432 = vunpack.c.l.bf16 %v430
  %v433 = vunpack.c.l.bf16 %v431
  %v434 = vmul.f32 %v432, %v41
  %v435 = vmul.f32 %v433, %v41
  %v436 = vpack.c.bf16 %v435, %v434
  %v437 = vld [vmem:[%s3] sm:$0xf]
  %v438 = vld [vmem:[%s3 + $0x4] sm:$0xf]
  %v441 = vunpack.c.l.b16 %v437
  %v442 = vunpack.c.l.b16 %v438
  %v443 = vpack.c.b16 %v442, %v441
  %v445 = vsel %vm74, %v443, 0
  %447 = vmatpush.bf16.msra.mxu0 0
  %448 = vmatpush.bf16.msra.mxu0 0
  %449 = vmatpush.bf16.msra.mxu0 0
  %450 = vmatpush.bf16.msra.mxu0 0
  %451 = vmatpush.bf16.msra.mxu0 0
  %452 = vmatpush.bf16.msra.mxu0 0
  %453 = vmatpush.bf16.msra.mxu0 0
  %454 = vmatpush.bf16.msra.mxu0 %v436
  %455 = vmatmul.bf16.gmra.mxu0 %v445
  %v456 = vpop.f32.mrf.mxu0
  %v457 = vadd.f32 0.0, %v456
  %v458 = vpop.f32.mrf.mxu0
  %v459 = vadd.f32 0.0, %v458
  %460 = vdwg.mxu0
  %v461 = vadd.f32 %v428, %v457
  %v462 = vadd.f32 %v429, %v459
  %v463 = vmul.f32 %v432, %v57
  %v464 = vmul.f32 %v433, %v57
  %v465 = vpack.c.bf16 %v464, %v463
  %s466 = scalar_lea.vmem %s3, 8
  %v467 = vld [vmem:[%s466] sm:$0xf]
  %v468 = vld [vmem:[%s466 + $0x4] sm:$0xf]
  %v471 = vunpack.c.l.b16 %v467
  %v472 = vunpack.c.l.b16 %v468
  %v473 = vpack.c.b16 %v472, %v471
  %475 = vrot.lane.b32.xlu0 %v465, 127
  %v476 = vpop.permute.xlu0 %475
  %v479 = vsel %vm74, %v473, 0
  %481 = vmatpush.bf16.msra.mxu0 0
  %482 = vmatpush.bf16.msra.mxu0 0
  %483 = vmatpush.bf16.msra.mxu0 0
  %484 = vmatpush.bf16.msra.mxu0 0
  %485 = vmatpush.bf16.msra.mxu0 0
  %486 = vmatpush.bf16.msra.mxu0 0
  %487 = vmatpush.bf16.msra.mxu0 0
  %488 = vmatpush.bf16.msra.mxu0 %v476
  %489 = vmatmul.bf16.gmra.mxu0 %v479
  %v490 = vpop.f32.mrf.mxu0
  %v491 = vadd.f32 0.0, %v490
  %v492 = vpop.f32.mrf.mxu0
  %v493 = vadd.f32 0.0, %v492
  %494 = vdwg.mxu0
  %v495 = vadd.f32 %v461, %v491
  %v496 = vadd.f32 %v462, %v493
  %v497 = vmul.f32 %v432, %v126
  %v498 = vmul.f32 %v433, %v126
  %v499 = vpack.c.bf16 %v498, %v497
  %s500 = scalar_lea.vmem %s3, 16
  %v501 = vld [vmem:[%s500] sm:$0xf]
  %v502 = vld [vmem:[%s500 + $0x4] sm:$0xf]
  %v505 = vunpack.c.l.b16 %v501
  %v506 = vunpack.c.l.b16 %v502
  %v507 = vpack.c.b16 %v506, %v505
  %509 = vrot.lane.b32.xlu0 %v499, 126
  %v510 = vpop.permute.xlu0 %509
  %v513 = vsel %vm74, %v507, 0
  %515 = vmatpush.bf16.msra.mxu0 0
  %516 = vmatpush.bf16.msra.mxu0 0
  %517 = vmatpush.bf16.msra.mxu0 0
  %518 = vmatpush.bf16.msra.mxu0 0
  %519 = vmatpush.bf16.msra.mxu0 0
  %520 = vmatpush.bf16.msra.mxu0 0
  %521 = vmatpush.bf16.msra.mxu0 0
  %522 = vmatpush.bf16.msra.mxu0 %v510
  %523 = vmatmul.bf16.gmra.mxu0 %v513
  %v524 = vpop.f32.mrf.mxu0
  %v525 = vadd.f32 0.0, %v524
  %v526 = vpop.f32.mrf.mxu0
  %v527 = vadd.f32 0.0, %v526
  %528 = vdwg.mxu0
  %v529 = vadd.f32 %v495, %v525
  %v530 = vadd.f32 %v496, %v527
  %v531 = vmul.f32 %v432, %v172
  %v532 = vmul.f32 %v433, %v172
  %v533 = vpack.c.bf16 %v532, %v531
  %s534 = scalar_lea.vmem %s3, 24
  %v535 = vld [vmem:[%s534] sm:$0xf]
  %v536 = vld [vmem:[%s534 + $0x4] sm:$0xf]
  %v539 = vunpack.c.l.b16 %v535
  %v540 = vunpack.c.l.b16 %v536
  %v541 = vpack.c.b16 %v540, %v539
  %543 = vrot.lane.b32.xlu0 %v533, 124
  %v544 = vpop.permute.xlu0 %543
  %v547 = vsel %vm74, %v541, 0
  %549 = vmatpush.bf16.msra.mxu0 0
  %550 = vmatpush.bf16.msra.mxu0 0
  %551 = vmatpush.bf16.msra.mxu0 0
  %552 = vmatpush.bf16.msra.mxu0 0
  %553 = vmatpush.bf16.msra.mxu0 0
  %554 = vmatpush.bf16.msra.mxu0 0
  %555 = vmatpush.bf16.msra.mxu0 0
  %556 = vmatpush.bf16.msra.mxu0 %v544
  %557 = vmatmul.bf16.gmra.mxu0 %v547
  %v558 = vpop.f32.mrf.mxu0
  %v559 = vadd.f32 0.0, %v558
  %v560 = vpop.f32.mrf.mxu0
  %v561 = vadd.f32 0.0, %v560
  %562 = vdwg.mxu0
  %v563 = vadd.f32 %v529, %v559
  %v564 = vadd.f32 %v530, %v561
  %s565 = scalar_lea.vmem %s3, 32
  %v566 = vld [vmem:[%s565] sm:$0xf]
  %v567 = vld [vmem:[%s565 + $0x4] sm:$0xf]
  %v570 = vunpack.c.l.b16 %v566
  %v571 = vunpack.c.l.b16 %v567
  %v572 = vpack.c.b16 %v571, %v570
  %v575 = vunpack.c.l.b16 %v430
  %v576 = vunpack.c.l.b16 %v431
  %v577 = vpack.c.b16 %v576, %v575
  %578 = vrot.lane.b32.xlu0 %v577, 123
  %v579 = vpop.permute.xlu0 %578
  %v582 = vsel %vm74, %v572, 0
  %584 = vmatpush.bf16.msra.mxu0 0
  %585 = vmatpush.bf16.msra.mxu0 0
  %586 = vmatpush.bf16.msra.mxu0 0
  %587 = vmatpush.bf16.msra.mxu0 0
  %588 = vmatpush.bf16.msra.mxu0 0
  %589 = vmatpush.bf16.msra.mxu0 0
  %590 = vmatpush.bf16.msra.mxu0 0
  %591 = vmatpush.bf16.msra.mxu0 %v579
  %592 = vmatmul.bf16.gmra.mxu0 %v582
  %v593 = vpop.f32.mrf.mxu0
  %v594 = vadd.f32 0.0, %v593
  %v595 = vpop.f32.mrf.mxu0
  %v596 = vadd.f32 0.0, %v595
  %597 = vdwg.mxu0
  %v598 = vadd.f32 %v563, %v594
  %v599 = vadd.f32 %v564, %v596
  %v600 = vmul.f32 %v432, %v253
  %v601 = vmul.f32 %v433, %v253
  %v602 = vpack.c.bf16 %v601, %v600
  %s603 = scalar_lea.vmem %s3, 40
  %v604 = vld [vmem:[%s603] sm:$0xf]
  %v605 = vld [vmem:[%s603 + $0x4] sm:$0xf]
  %v608 = vunpack.c.l.b16 %v604
  %v609 = vunpack.c.l.b16 %v605
  %v610 = vpack.c.b16 %v609, %v608
  %612 = vrot.lane.b32.xlu0 %v602, 122
  %v613 = vpop.permute.xlu0 %612
  %v616 = vsel %vm74, %v610, 0
  %618 = vmatpush.bf16.msra.mxu0 0
  %619 = vmatpush.bf16.msra.mxu0 0
  %620 = vmatpush.bf16.msra.mxu0 0
  %621 = vmatpush.bf16.msra.mxu0 0
  %622 = vmatpush.bf16.msra.mxu0 0
  %623 = vmatpush.bf16.msra.mxu0 0
  %624 = vmatpush.bf16.msra.mxu0 0
  %625 = vmatpush.bf16.msra.mxu0 %v613
  %626 = vmatmul.bf16.gmra.mxu0 %v616
  %v627 = vpop.f32.mrf.mxu0
  %v628 = vadd.f32 0.0, %v627
  %v629 = vpop.f32.mrf.mxu0
  %v630 = vadd.f32 0.0, %v629
  %631 = vdwg.mxu0
  %v632 = vadd.f32 %v598, %v628
  %v633 = vadd.f32 %v599, %v630
  %v634 = vmul.f32 %v432, %v301
  %v635 = vmul.f32 %v433, %v301
  %v636 = vpack.c.bf16 %v635, %v634
  %s637 = scalar_lea.vmem %s3, 48
  %v638 = vld [vmem:[%s637] sm:$0xf]
  %v639 = vld [vmem:[%s637 + $0x4] sm:$0xf]
  %v642 = vunpack.c.l.b16 %v638
  %v643 = vunpack.c.l.b16 %v639
  %v644 = vpack.c.b16 %v643, %v642
  %646 = vrot.lane.b32.xlu0 %v636, 120
  %v647 = vpop.permute.xlu0 %646
  %v650 = vsel %vm74, %v644, 0
  %652 = vmatpush.bf16.msra.mxu0 0
  %653 = vmatpush.bf16.msra.mxu0 0
  %654 = vmatpush.bf16.msra.mxu0 0
  %655 = vmatpush.bf16.msra.mxu0 0
  %656 = vmatpush.bf16.msra.mxu0 0
  %657 = vmatpush.bf16.msra.mxu0 0
  %658 = vmatpush.bf16.msra.mxu0 0
  %659 = vmatpush.bf16.msra.mxu0 %v647
  %660 = vmatmul.bf16.gmra.mxu0 %v650
  %v661 = vpop.f32.mrf.mxu0
  %v662 = vadd.f32 0.0, %v661
  %v663 = vpop.f32.mrf.mxu0
  %v664 = vadd.f32 0.0, %v663
  %665 = vdwg.mxu0
  %v666 = vadd.f32 %v632, %v662
  %v667 = vadd.f32 %v633, %v664
  %v668 = vmul.f32 %v432, %v347
  %v669 = vmul.f32 %v433, %v347
  %v670 = vpack.c.bf16 %v669, %v668
  %s671 = scalar_lea.vmem %s3, 56
  %v672 = vld [vmem:[%s671] sm:$0xf]
  %v673 = vld [vmem:[%s671 + $0x4] sm:$0xf]
  %v676 = vunpack.c.l.b16 %v672
  %v677 = vunpack.c.l.b16 %v673
  %v678 = vpack.c.b16 %v677, %v676
  %680 = vrot.lane.b32.xlu0 %v670, 119
  %v681 = vpop.permute.xlu0 %680
  %v684 = vsel %vm74, %v678, 0
  %686 = vmatpush.bf16.msra.mxu0 0
  %687 = vmatpush.bf16.msra.mxu0 0
  %688 = vmatpush.bf16.msra.mxu0 0
  %689 = vmatpush.bf16.msra.mxu0 0
  %690 = vmatpush.bf16.msra.mxu0 0
  %691 = vmatpush.bf16.msra.mxu0 0
  %692 = vmatpush.bf16.msra.mxu0 0
  %693 = vmatpush.bf16.msra.mxu0 %v681
  %694 = vmatmul.bf16.gmra.mxu0 %v684
  %v695 = vpop.f32.mrf.mxu0
  %v696 = vadd.f32 0.0, %v695
  %v697 = vpop.f32.mrf.mxu0
  %v698 = vadd.f32 0.0, %v697
  %699 = vdwg.mxu0
  %v700 = vadd.f32 %v666, %v696
  %v701 = vadd.f32 %v667, %v698
  %v702 = vmul.f32 %v432, %v394
  %v703 = vmul.f32 %v433, %v394
  %v704 = vpack.c.bf16 %v703, %v702
  %s705 = scalar_lea.vmem %s3, 64
  %v706 = vld [vmem:[%s705] sm:$0xf]
  %v707 = vld [vmem:[%s705 + $0x4] sm:$0xf]
  %v710 = vunpack.c.l.b16 %v706
  %v711 = vunpack.c.l.b16 %v707
  %v712 = vpack.c.b16 %v711, %v710
  %714 = vrot.lane.b32.xlu0 %v704, 118
  %v715 = vpop.permute.xlu0 %714
  %v718 = vsel %vm74, %v712, 0
  %720 = vmatpush.bf16.msra.mxu0 0
  %721 = vmatpush.bf16.msra.mxu0 0
  %722 = vmatpush.bf16.msra.mxu0 0
  %723 = vmatpush.bf16.msra.mxu0 0
  %724 = vmatpush.bf16.msra.mxu0 0
  %725 = vmatpush.bf16.msra.mxu0 0
  %726 = vmatpush.bf16.msra.mxu0 0
  %727 = vmatpush.bf16.msra.mxu0 %v715
  %728 = vmatmul.bf16.gmra.mxu0 %v718
  %v729 = vpop.f32.mrf.mxu0
  %v730 = vadd.f32 0.0, %v729
  %v731 = vpop.f32.mrf.mxu0
  %v732 = vadd.f32 0.0, %v731
  %733 = vdwg.mxu0
  %v734 = vadd.f32 %v700, %v730
  %v735 = vadd.f32 %v701, %v732
  %v736 = vld [vmem:[%s5] sm:$0xff]
  %v737 = vld [vmem:[%s5 + $0x8] sm:$0xff]
  %739 = vset.pattern.permute.xlu0 0
  %740 = vperm.xlu0 %739, %v736
  %v741 = vpop.permute.xlu0 %740
  %744 = vset.pattern.permute.xlu0 0
  %745 = vperm.xlu0 %744, %v737
  %v746 = vpop.permute.xlu0 %745
  %v748 = vadd.f32 %v734, %v741
  %v749 = vadd.f32 %v735, %v746
  %vm750 = vcmp.gt.f32.partialorder %v748, 0.0
  %vm751 = vcmp.gt.f32.partialorder %v749, 0.0
  %v752 = vmul.f32 %v748, 0.1
  %v753 = vmul.f32 %v749, 0.1
  %v754 = vsel %vm750, %v748, %v752
  %v755 = vsel %vm751, %v749, %v753
  %v756 = vpack.c.bf16 %v754, %v754
  %v757 = vpack.c.bf16 %v755, %v755
  %vm758 = vcmask 257024
  %759 = vst.msk [vmem:[%s6] sm:$0xf] %vm758, %v756
  %760 = vst.msk [vmem:[%s6 + $0x4] sm:$0xf] %vm758, %v757
  // Predicated region
  $region26: #{forward_once.11} parent=0 // pred_check
    _
  $region27: #{forward_once.11} parent=0 // pred_check_branch
    %762 = sbr.rel (0) target = $region29
  $region28: #{forward_once.11} parent=0 // pred_region
    _
  $region29: #{forward_once.11} parent=0 // pred_fallthru
    _
  // Predicated region
  $region30: #{forward_once.11} parent=0 // pred_check
    _
  $region31: #{forward_once.11} parent=0 // pred_check_branch
    %764 = sbr.rel (0) target = $region33
  $region32: #{forward_once.11} parent=0 // pred_region
    _
  $region33: #{forward_once.11} parent=0 // pred_fallthru
    _

</llo_original>
